<compile_context>
chip_gen: v7x
topology: tpu7x:2x2x1
jax: 0.10.0
libtpu: 0.0.40
codegen_flags: <defaults>
</compile_context>

<pallas_src>
import numpy as np
import jax
import jax.numpy as jnp
from jax import lax
from jax.experimental import pallas as pl
from jax.experimental.pallas import tpu as pltpu


def attention_gate_kernel(skip_ref, up_ref, wx_ref, dsel_ref, wg_ref,
                          bxg_ref, pw_ref, pb_ref, uh_ref, uwt_ref,
                          out_ref, m0_scr, m1_scr, a_scr):
    cd = skip_ref.shape[1]
    h = skip_ref.shape[2]
    w = skip_ref.shape[3]
    cu = up_ref.shape[1]
    ho = up_ref.shape[2]
    wo = up_ref.shape[3]

    # ---- stride-2 column taps for the whole block (hoisted out of the loop):
    # m_kw[c, hh, j] = skip[c, hh, 2j + kw]   via two big MXU matmuls.
    skip_blk = skip_ref[0]                                  # (Cd, H, W)
    skip2 = skip_blk.reshape(cd * h, w)                     # lane dim unchanged
    d0 = dsel_ref[0]                                        # (W, Wo): w == 2j
    d1 = dsel_ref[1]                                        # (W, Wo): w == 2j+1
    m0_scr[...] = jnp.dot(skip2, d0,
                          preferred_element_type=jnp.float32).reshape(cd, h, wo)
    m1_scr[...] = jnp.dot(skip2, d1,
                          preferred_element_type=jnp.float32).reshape(cd, h, wo)

    # loop-invariant parameter loads
    wx0 = wx_ref[0]            # (Cu, 2*Cd)  columns ordered (c, kh), kw = 0
    wx1 = wx_ref[1]            # (Cu, 2*Cd)  kw = 1
    wg = wg_ref[...]           # (Cu, Cu)
    bxg = bxg_ref[...]         # (Cu, 1)     folded b_x + b_g
    pw = pw_ref[...]           # (Cu, 1)     psi weight as a column
    pb = pb_ref[0]             # scalar psi bias (SMEM)

    def row_body(i, carry):
        # per output row: channel/kh mixing on the pre-selected column taps
        p0 = m0_scr[:, pl.ds(2 * i, 2), :].reshape(2 * cd, wo)   # (2Cd, Wo)
        p1 = m1_scr[:, pl.ds(2 * i, 2), :].reshape(2 * cd, wo)   # (2Cd, Wo)
        x_i = (jnp.dot(wx0, p0, preferred_element_type=jnp.float32) +
               jnp.dot(wx1, p1, preferred_element_type=jnp.float32))   # (Cu, Wo)
        # w_g: 1x1 conv on the matching decoder row
        u_i = up_ref[0, :, pl.ds(i, 1), :].reshape(cu, wo)              # (Cu, Wo)
        g_i = jnp.dot(wg, u_i, preferred_element_type=jnp.float32)      # (Cu, Wo)
        h_i = jnp.maximum(x_i + g_i + bxg, 0.0)                         # ReLU
        # psi: 1x1 conv to one channel == weighted reduction over Cu (VPU)
        s_i = jnp.sum(h_i * pw, axis=0, keepdims=True) + pb             # (1, Wo)
        a_scr[pl.ds(i, 1), :] = jax.nn.sigmoid(s_i)
        return carry

    lax.fori_loop(0, ho, row_body, 0, unroll=ho <= 32)

    # separable bilinear upsample (align_corners=True):  Uh @ a @ Uw^T
    att = jnp.dot(jnp.dot(uh_ref[...], a_scr[...],
                          preferred_element_type=jnp.float32),
                  uwt_ref[...], preferred_element_type=jnp.float32)      # (H, W)

    # gate the skip connection (attention broadcast over the channel axis)
    out_ref[0] = skip_blk * att


def upsample_matrix(n_in, n_out, dtype=jnp.float32):
    """1-D bilinear interpolation matrix, PyTorch align_corners=True."""
    i = np.arange(n_out)
    if n_out == 1:
        src = np.zeros((1,), dtype=np.float64)
    else:
        src = i * (n_in - 1) / (n_out - 1)
    i0 = np.floor(src).astype(np.int32)
    i1 = np.minimum(i0 + 1, n_in - 1)
    w1 = src - i0
    w0 = 1.0 - w1
    M = np.zeros((n_out, n_in), dtype=np.float32)
    M[i, i0] += w0
    M[i, i1] += w1
    return jnp.asarray(M, dtype)


def attention_gate(skip, up, params):
    """skip: (N, Cd, H, W), up: (N, Cu, H/2, W/2)  ->  (N, Cd, H, W)."""
    N, Cd, H, W = skip.shape
    _, Cu, Ho, Wo = up.shape
    assert Ho * 2 == H and Wo * 2 == W

    wx_w, wx_b, wg_w, wg_b, psi_w, psi_b = params

    # pack the 2x2/stride-2 conv weight: wx_cat[kw][u, c*2 + kh] = wx_w[u,c,kh,kw]
    wx_cat = jnp.transpose(wx_w, (3, 0, 1, 2)).reshape(2, Cu, Cd * 2)
    wg_mat = wg_w[:, :, 0, 0]                     # (Cu, Cu), left-multiplies
    bxg = (wx_b + wg_b).reshape(Cu, 1)            # folded conv biases
    pw_col = psi_w[0, :, 0, 0].reshape(Cu, 1)     # psi weight column
    pb = psi_b.reshape(1).astype(jnp.float32)     # psi bias scalar (-> SMEM)

    # stride-2 column-tap selectors: dsel[kw][w, j] = 1  iff  w == 2j + kw
    dsel_np = np.zeros((2, W, Wo), np.float32)
    j = np.arange(Wo)
    dsel_np[0, 2 * j, j] = 1.0
    dsel_np[1, 2 * j + 1, j] = 1.0
    dsel = jnp.asarray(dsel_np)

    # separable bilinear (align_corners=True) upsample factors
    uh = upsample_matrix(Ho, H)                   # (H, Ho)
    uwT = upsample_matrix(Wo, W).T                # (Wo, W)

    def full_spec(shape):
        n = len(shape)
        return pl.BlockSpec(shape, lambda b: (0,) * n)

    def batch_spec(shape):
        n = len(shape) - 1
        return pl.BlockSpec(shape, lambda b: (b,) + (0,) * n)

    flops = N * (
        2 * 2 * (Cd * H) * W * Wo                 # hoisted stride-2 column taps
        + Ho * (2 * 2 * Cu * (2 * Cd) * Wo        # per-row channel/kh mixing
                + 2 * Cu * Cu * Wo                # w_g 1x1 conv
                + 3 * Cu * Wo)                    # relu / psi reduction (VPU)
        + 2 * H * Ho * Wo + 2 * H * Wo * W        # separable bilinear upsample
        + Cd * H * W)                             # gating multiply
    transcendentals = N * Ho * Wo                 # sigmoid
    bytes_accessed = 4 * (N * Cd * H * W * 2      # skip in + gated out
                          + N * Cu * Ho * Wo)     # decoder features

    out = pl.pallas_call(
        attention_gate_kernel,
        out_shape=jax.ShapeDtypeStruct((N, Cd, H, W), jnp.float32),
        grid=(N,),
        in_specs=[
            batch_spec((1, Cd, H, W)),      # skip (read once; conv taps + gate)
            batch_spec((1, Cu, Ho, Wo)),    # up / decoder features
            full_spec((2, Cu, Cd * 2)),     # packed w_x weight
            full_spec((2, W, Wo)),          # stride-2 column selectors
            full_spec((Cu, Cu)),            # w_g weight
            full_spec((Cu, 1)),             # folded biases b_x + b_g
            full_spec((Cu, 1)),             # psi weight
            pl.BlockSpec(memory_space=pltpu.MemorySpace.SMEM),  # psi bias
            full_spec((H, Ho)),             # Uh
            full_spec((Wo, W)),             # Uw^T
        ],
        out_specs=batch_spec((1, Cd, H, W)),
        scratch_shapes=[pltpu.VMEM((Cd, H, Wo), jnp.float32),   # kw=0 taps
                        pltpu.VMEM((Cd, H, Wo), jnp.float32),   # kw=1 taps
                        pltpu.VMEM((Ho, Wo), jnp.float32)],     # attention map
        compiler_params=pltpu.CompilerParams(
            dimension_semantics=("parallel",),
            vmem_limit_bytes=32 * 1024 * 1024),
        cost_estimate=pl.CostEstimate(
            flops=flops, transcendentals=transcendentals,
            bytes_accessed=bytes_accessed),
    )(skip, up, wx_cat, dsel, wg_mat, bxg, pw_col, pb, uh, uwT)
    return out


def reference(skip, up, params):
    """Pure-JAX reference matching the PyTorch forward (NCHW)."""
    wx_w, wx_b, wg_w, wg_b, psi_w, psi_b = params
    dn = ('NCHW', 'OIHW', 'NCHW')
    x = lax.conv_general_dilated(skip, wx_w, (2, 2), 'VALID',
                                 dimension_numbers=dn) + wx_b[None, :, None, None]
    g = lax.conv_general_dilated(up, wg_w, (1, 1), 'VALID',
                                 dimension_numbers=dn) + wg_b[None, :, None, None]
    h = jax.nn.relu(x + g)
    s = lax.conv_general_dilated(h, psi_w, (1, 1), 'VALID',
                                 dimension_numbers=dn) + psi_b[None, :, None, None]
    a = jax.nn.sigmoid(s)                                    # (N,1,Ho,Wo)
    Uh = upsample_matrix(a.shape[2], skip.shape[2])
    Uw = upsample_matrix(a.shape[3], skip.shape[3])
    att = jnp.einsum('Hh,nchw,Ww->ncHW', Uh, a, Uw)          # bilinear, align_corners
    return att * skip


if __name__ == "__main__":
    # small shapes consistent with the module:
    # skip (encoder) : (N, Cd, H, W),  up (decoder) : (N, Cu, H/2, W/2)
    N, Cd, Cu, H, W = 2, 4, 8, 16, 16

    key = jax.random.PRNGKey(0)
    ks = jax.random.split(key, 8)
    skip = jax.random.normal(ks[0], (N, Cd, H, W), jnp.float32)
    up = jax.random.normal(ks[1], (N, Cu, H // 2, W // 2), jnp.float32)

    # deterministic parameter init (PyTorch Conv2d weight layouts: OIHW)
    params = (
        0.1 * jax.random.normal(ks[2], (Cu, Cd, 2, 2), jnp.float32),  # w_x weight
        0.1 * jax.random.normal(ks[3], (Cu,), jnp.float32),           # w_x bias
        0.1 * jax.random.normal(ks[4], (Cu, Cu, 1, 1), jnp.float32),  # w_g weight
        0.1 * jax.random.normal(ks[5], (Cu,), jnp.float32),           # w_g bias
        0.1 * jax.random.normal(ks[6], (1, Cu, 1, 1), jnp.float32),   # psi weight
        0.1 * jax.random.normal(ks[7], (1,), jnp.float32),            # psi bias
    )

    out = jax.block_until_ready(attention_gate(skip, up, params))
    ref = jax.block_until_ready(reference(skip, up, params))

    assert out.shape == skip.shape and out.dtype == jnp.float32
    np.testing.assert_allclose(np.asarray(out), np.asarray(ref),
                               rtol=1e-4, atol=1e-4)
    print("KERNEL_OK")
</pallas_src>

<mosaic_0001>
module attributes {stable_mosaic.version = 11 : i64} {
  func.func @attention_gate_kernel(%arg0: i32, %arg1: memref<1x4x16x16xf32, #tpu.memory_space<vmem>>, %arg2: memref<1x8x8x8xf32, #tpu.memory_space<vmem>>, %arg3: memref<2x8x8xf32, #tpu.memory_space<vmem>>, %arg4: memref<2x16x8xf32, #tpu.memory_space<vmem>>, %arg5: memref<8x8xf32, #tpu.memory_space<vmem>>, %arg6: memref<8x1xf32, #tpu.memory_space<vmem>>, %arg7: memref<8x1xf32, #tpu.memory_space<vmem>>, %arg8: memref<1xf32, #tpu.memory_space<smem>>, %arg9: memref<16x8xf32, #tpu.memory_space<vmem>>, %arg10: memref<8x16xf32, #tpu.memory_space<vmem>>, %arg11: memref<1x4x16x16xf32, #tpu.memory_space<vmem>>, %arg12: memref<4x16x8xf32, #tpu.memory_space<vmem>>, %arg13: memref<4x16x8xf32, #tpu.memory_space<vmem>>, %arg14: memref<8x8xf32, #tpu.memory_space<vmem>>) attributes {dimension_semantics = [#tpu.dimension_semantics<parallel>], iteration_bounds = array<i64: 2>, scalar_prefetch = 0 : i64, scratch_operands = 3 : i64, tpu.core_type = #tpu.core_type<tc>, window_params = [{transform_indices = @transform_0, window_bounds = array<i64: 1, 4, 16, 16>}, {transform_indices = @transform_1, window_bounds = array<i64: 1, 8, 8, 8>}, {pipeline_mode = #tpu.pipeline_mode<synchronous>, transform_indices = @transform_2, window_bounds = array<i64: 2, 8, 8>}, {pipeline_mode = #tpu.pipeline_mode<synchronous>, transform_indices = @transform_3, window_bounds = array<i64: 2, 16, 8>}, {pipeline_mode = #tpu.pipeline_mode<synchronous>, transform_indices = @transform_4, window_bounds = array<i64: 8, 8>}, {pipeline_mode = #tpu.pipeline_mode<synchronous>, transform_indices = @transform_5, window_bounds = array<i64: 8, 1>}, {pipeline_mode = #tpu.pipeline_mode<synchronous>, transform_indices = @transform_6, window_bounds = array<i64: 8, 1>}, {transform_indices = @transform_7, window_bounds = array<i64: 1>}, {pipeline_mode = #tpu.pipeline_mode<synchronous>, transform_indices = @transform_8, window_bounds = array<i64: 16, 8>}, {pipeline_mode = #tpu.pipeline_mode<synchronous>, transform_indices = @transform_9, window_bounds = array<i64: 8, 16>}, {transform_indices = @transform_10, window_bounds = array<i64: 1, 4, 16, 16>}]} {
    %c0 = arith.constant 0 : index
    %c0_0 = arith.constant 0 : index
    %c0_1 = arith.constant 0 : index
    %c0_2 = arith.constant 0 : index
    %0 = vector.load %arg1[%c0, %c0_0, %c0_1, %c0_2] : memref<1x4x16x16xf32, #tpu.memory_space<vmem>>, vector<1x4x16x16xf32>
    %1 = vector.shape_cast %0 : vector<1x4x16x16xf32> to vector<4x16x16xf32>
    %2 = vector.shape_cast %1 : vector<4x16x16xf32> to vector<64x16xf32>
    %c0_3 = arith.constant 0 : index
    %c0_4 = arith.constant 0 : index
    %c0_5 = arith.constant 0 : index
    %3 = vector.load %arg4[%c0_3, %c0_4, %c0_5] : memref<2x16x8xf32, #tpu.memory_space<vmem>>, vector<1x16x8xf32>
    %4 = vector.shape_cast %3 : vector<1x16x8xf32> to vector<16x8xf32>
    %c1 = arith.constant 1 : index
    %c0_6 = arith.constant 0 : index
    %c0_7 = arith.constant 0 : index
    %5 = vector.load %arg4[%c1, %c0_6, %c0_7] : memref<2x16x8xf32, #tpu.memory_space<vmem>>, vector<1x16x8xf32>
    %6 = vector.shape_cast %5 : vector<1x16x8xf32> to vector<16x8xf32>
    %cst = arith.constant dense<0.000000e+00> : vector<64x8xf32>
    %7 = tpu.matmul %2, %4, %cst {dimension_numbers = #tpu.dot_dimension_numbers<[1], [0], [0], [1], [0, 0, 1, 1], [], []>} : vector<64x16xf32>, vector<16x8xf32>, vector<64x8xf32> -> vector<64x8xf32>
    %8 = vector.shape_cast %7 : vector<64x8xf32> to vector<4x16x8xf32>
    %c0_8 = arith.constant 0 : index
    %c0_9 = arith.constant 0 : index
    %c0_10 = arith.constant 0 : index
    %9 = vector.load %arg12[%c0_8, %c0_9, %c0_10] : memref<4x16x8xf32, #tpu.memory_space<vmem>>, vector<4x16x8xf32>
    tpu.vector_store %arg12[%c0_8, %c0_9, %c0_10], %8 {strides = array<i32>} : memref<4x16x8xf32, #tpu.memory_space<vmem>>, vector<4x16x8xf32>,
    %cst_11 = arith.constant dense<0.000000e+00> : vector<64x8xf32>
    %10 = tpu.matmul %2, %6, %cst_11 {dimension_numbers = #tpu.dot_dimension_numbers<[1], [0], [0], [1], [0, 0, 1, 1], [], []>} : vector<64x16xf32>, vector<16x8xf32>, vector<64x8xf32> -> vector<64x8xf32>
    %11 = vector.shape_cast %10 : vector<64x8xf32> to vector<4x16x8xf32>
    %c0_12 = arith.constant 0 : index
    %c0_13 = arith.constant 0 : index
    %c0_14 = arith.constant 0 : index
    %12 = vector.load %arg13[%c0_12, %c0_13, %c0_14] : memref<4x16x8xf32, #tpu.memory_space<vmem>>, vector<4x16x8xf32>
    tpu.vector_store %arg13[%c0_12, %c0_13, %c0_14], %11 {strides = array<i32>} : memref<4x16x8xf32, #tpu.memory_space<vmem>>, vector<4x16x8xf32>,
    %c0_15 = arith.constant 0 : index
    %c0_16 = arith.constant 0 : index
    %c0_17 = arith.constant 0 : index
    %13 = vector.load %arg3[%c0_15, %c0_16, %c0_17] : memref<2x8x8xf32, #tpu.memory_space<vmem>>, vector<1x8x8xf32>
    %14 = vector.shape_cast %13 : vector<1x8x8xf32> to vector<8x8xf32>
    %c1_18 = arith.constant 1 : index
    %c0_19 = arith.constant 0 : index
    %c0_20 = arith.constant 0 : index
    %15 = vector.load %arg3[%c1_18, %c0_19, %c0_20] : memref<2x8x8xf32, #tpu.memory_space<vmem>>, vector<1x8x8xf32>
    %16 = vector.shape_cast %15 : vector<1x8x8xf32> to vector<8x8xf32>
    %c0_21 = arith.constant 0 : index
    %c0_22 = arith.constant 0 : index
    %17 = vector.load %arg5[%c0_21, %c0_22] : memref<8x8xf32, #tpu.memory_space<vmem>>, vector<8x8xf32>
    %c0_23 = arith.constant 0 : index
    %c0_24 = arith.constant 0 : index
    %18 = vector.load %arg6[%c0_23, %c0_24] : memref<8x1xf32, #tpu.memory_space<vmem>>, vector<8x1xf32>
    %c0_25 = arith.constant 0 : index
    %c0_26 = arith.constant 0 : index
    %19 = vector.load %arg7[%c0_25, %c0_26] : memref<8x1xf32, #tpu.memory_space<vmem>>, vector<8x1xf32>
    %c0_27 = arith.constant 0 : index
    %20 = memref.load %arg8[%c0_27] : memref<1xf32, #tpu.memory_space<smem>>
    %c0_i32 = arith.constant 0 : i32
    %c2_i32 = arith.constant 2 : i32
    %21 = arith.muli %c2_i32, %c0_i32 : i32
    %c0_28 = arith.constant 0 : index
    %22 = arith.index_cast %21 : i32 to index
    %c0_29 = arith.constant 0 : index
    %23 = vector.load %arg12[%c0_28, %22, %c0_29] : memref<4x16x8xf32, #tpu.memory_space<vmem>>, vector<4x2x8xf32>
    %24 = vector.shape_cast %23 : vector<4x2x8xf32> to vector<8x8xf32>
    %c2_i32_30 = arith.constant 2 : i32
    %25 = arith.muli %c2_i32_30, %c0_i32 : i32
    %c0_31 = arith.constant 0 : index
    %26 = arith.index_cast %25 : i32 to index
    %c0_32 = arith.constant 0 : index
    %27 = vector.load %arg13[%c0_31, %26, %c0_32] : memref<4x16x8xf32, #tpu.memory_space<vmem>>, vector<4x2x8xf32>
    %28 = vector.shape_cast %27 : vector<4x2x8xf32> to vector<8x8xf32>
    %cst_33 = arith.constant dense<0.000000e+00> : vector<8x8xf32>
    %29 = tpu.matmul %14, %24, %cst_33 {dimension_numbers = #tpu.dot_dimension_numbers<[1], [0], [0], [1], [0, 0, 1, 1], [], []>} : vector<8x8xf32>, vector<8x8xf32>, vector<8x8xf32> -> vector<8x8xf32>
    %cst_34 = arith.constant dense<0.000000e+00> : vector<8x8xf32>
    %30 = tpu.matmul %16, %28, %cst_34 {dimension_numbers = #tpu.dot_dimension_numbers<[1], [0], [0], [1], [0, 0, 1, 1], [], []>} : vector<8x8xf32>, vector<8x8xf32>, vector<8x8xf32> -> vector<8x8xf32>
    %31 = arith.addf %29, %30 : vector<8x8xf32>
    %c0_35 = arith.constant 0 : index
    %c0_36 = arith.constant 0 : index
    %32 = arith.index_cast %c0_i32 : i32 to index
    %c0_37 = arith.constant 0 : index
    %33 = vector.load %arg2[%c0_35, %c0_36, %32, %c0_37] : memref<1x8x8x8xf32, #tpu.memory_space<vmem>>, vector<1x8x1x8xf32>
    %34 = vector.shape_cast %33 : vector<1x8x1x8xf32> to vector<8x1x8xf32>
    %35 = vector.shape_cast %34 : vector<8x1x8xf32> to vector<8x8xf32>
    %cst_38 = arith.constant dense<0.000000e+00> : vector<8x8xf32>
    %36 = tpu.matmul %17, %35, %cst_38 {dimension_numbers = #tpu.dot_dimension_numbers<[1], [0], [0], [1], [0, 0, 1, 1], [], []>} : vector<8x8xf32>, vector<8x8xf32>, vector<8x8xf32> -> vector<8x8xf32>
    %37 = arith.addf %31, %36 : vector<8x8xf32>
    %38 = vector.broadcast %18 : vector<8x1xf32> to vector<8x8xf32>
    %39 = arith.addf %37, %38 : vector<8x8xf32>
    %cst_39 = arith.constant 0.000000e+00 : f32
    %40 = vector.broadcast %cst_39 : f32 to vector<8x8xf32>
    %41 = arith.maximumf %39, %40 : vector<8x8xf32>
    %42 = vector.broadcast %19 : vector<8x1xf32> to vector<8x8xf32>
    %43 = arith.mulf %41, %42 : vector<8x8xf32>
    %cst_40 = arith.constant dense<0.000000e+00> : vector<8xf32>
    %44 = vector.multi_reduction <add>, %43, %cst_40 [0] : vector<8x8xf32> to vector<8xf32>
    %45 = vector.shape_cast %44 : vector<8xf32> to vector<1x8xf32>
    %46 = vector.broadcast %20 : f32 to vector<1x8xf32>
    %47 = arith.addf %45, %46 : vector<1x8xf32>
    %48 = arith.negf %47 : vector<1x8xf32>
    %49 = math.exp %48 : vector<1x8xf32>
    %cst_41 = arith.constant 1.000000e+00 : f32
    %50 = vector.broadcast %cst_41 : f32 to vector<1x8xf32>
    %51 = arith.addf %50, %49 : vector<1x8xf32>
    %52 = arith.divf %50, %51 : vector<1x8xf32>
    %53 = arith.index_cast %c0_i32 : i32 to index
    %c0_42 = arith.constant 0 : index
    %54 = vector.load %arg14[%53, %c0_42] : memref<8x8xf32, #tpu.memory_space<vmem>>, vector<1x8xf32>
    tpu.vector_store %arg14[%53, %c0_42], %52 {strides = array<i32>} : memref<8x8xf32, #tpu.memory_space<vmem>>, vector<1x8xf32>,
    %c1_i32 = arith.constant 1 : i32
    %c2_i32_43 = arith.constant 2 : i32
    %55 = arith.muli %c2_i32_43, %c1_i32 : i32
    %c0_44 = arith.constant 0 : index
    %56 = arith.index_cast %55 : i32 to index
    %c0_45 = arith.constant 0 : index
    %57 = vector.load %arg12[%c0_44, %56, %c0_45] : memref<4x16x8xf32, #tpu.memory_space<vmem>>, vector<4x2x8xf32>
    %58 = vector.shape_cast %57 : vector<4x2x8xf32> to vector<8x8xf32>
    %c2_i32_46 = arith.constant 2 : i32
    %59 = arith.muli %c2_i32_46, %c1_i32 : i32
    %c0_47 = arith.constant 0 : index
    %60 = arith.index_cast %59 : i32 to index
    %c0_48 = arith.constant 0 : index
    %61 = vector.load %arg13[%c0_47, %60, %c0_48] : memref<4x16x8xf32, #tpu.memory_space<vmem>>, vector<4x2x8xf32>
    %62 = vector.shape_cast %61 : vector<4x2x8xf32> to vector<8x8xf32>
    %cst_49 = arith.constant dense<0.000000e+00> : vector<8x8xf32>
    %63 = tpu.matmul %14, %58, %cst_49 {dimension_numbers = #tpu.dot_dimension_numbers<[1], [0], [0], [1], [0, 0, 1, 1], [], []>} : vector<8x8xf32>, vector<8x8xf32>, vector<8x8xf32> -> vector<8x8xf32>
    %cst_50 = arith.constant dense<0.000000e+00> : vector<8x8xf32>
    %64 = tpu.matmul %16, %62, %cst_50 {dimension_numbers = #tpu.dot_dimension_numbers<[1], [0], [0], [1], [0, 0, 1, 1], [], []>} : vector<8x8xf32>, vector<8x8xf32>, vector<8x8xf32> -> vector<8x8xf32>
    %65 = arith.addf %63, %64 : vector<8x8xf32>
    %c0_51 = arith.constant 0 : index
    %c0_52 = arith.constant 0 : index
    %66 = arith.index_cast %c1_i32 : i32 to index
    %c0_53 = arith.constant 0 : index
    %67 = vector.load %arg2[%c0_51, %c0_52, %66, %c0_53] : memref<1x8x8x8xf32, #tpu.memory_space<vmem>>, vector<1x8x1x8xf32>
    %68 = vector.shape_cast %67 : vector<1x8x1x8xf32> to vector<8x1x8xf32>
    %69 = vector.shape_cast %68 : vector<8x1x8xf32> to vector<8x8xf32>
    %cst_54 = arith.constant dense<0.000000e+00> : vector<8x8xf32>
    %70 = tpu.matmul %17, %69, %cst_54 {dimension_numbers = #tpu.dot_dimension_numbers<[1], [0], [0], [1], [0, 0, 1, 1], [], []>} : vector<8x8xf32>, vector<8x8xf32>, vector<8x8xf32> -> vector<8x8xf32>
    %71 = arith.addf %65, %70 : vector<8x8xf32>
    %72 = vector.broadcast %18 : vector<8x1xf32> to vector<8x8xf32>
    %73 = arith.addf %71, %72 : vector<8x8xf32>
    %cst_55 = arith.constant 0.000000e+00 : f32
    %74 = vector.broadcast %cst_55 : f32 to vector<8x8xf32>
    %75 = arith.maximumf %73, %74 : vector<8x8xf32>
    %76 = vector.broadcast %19 : vector<8x1xf32> to vector<8x8xf32>
    %77 = arith.mulf %75, %76 : vector<8x8xf32>
    %cst_56 = arith.constant dense<0.000000e+00> : vector<8xf32>
    %78 = vector.multi_reduction <add>, %77, %cst_56 [0] : vector<8x8xf32> to vector<8xf32>
    %79 = vector.shape_cast %78 : vector<8xf32> to vector<1x8xf32>
    %80 = vector.broadcast %20 : f32 to vector<1x8xf32>
    %81 = arith.addf %79, %80 : vector<1x8xf32>
    %82 = arith.negf %81 : vector<1x8xf32>
    %83 = math.exp %82 : vector<1x8xf32>
    %cst_57 = arith.constant 1.000000e+00 : f32
    %84 = vector.broadcast %cst_57 : f32 to vector<1x8xf32>
    %85 = arith.addf %84, %83 : vector<1x8xf32>
    %86 = arith.divf %84, %85 : vector<1x8xf32>
    %87 = arith.index_cast %c1_i32 : i32 to index
    %c0_58 = arith.constant 0 : index
    %88 = vector.load %arg14[%87, %c0_58] : memref<8x8xf32, #tpu.memory_space<vmem>>, vector<1x8xf32>
    tpu.vector_store %arg14[%87, %c0_58], %86 {strides = array<i32>} : memref<8x8xf32, #tpu.memory_space<vmem>>, vector<1x8xf32>,
    %c2_i32_59 = arith.constant 2 : i32
    %c2_i32_60 = arith.constant 2 : i32
    %89 = arith.muli %c2_i32_60, %c2_i32_59 : i32
    %c0_61 = arith.constant 0 : index
    %90 = arith.index_cast %89 : i32 to index
    %c0_62 = arith.constant 0 : index
    %91 = vector.load %arg12[%c0_61, %90, %c0_62] : memref<4x16x8xf32, #tpu.memory_space<vmem>>, vector<4x2x8xf32>
    %92 = vector.shape_cast %91 : vector<4x2x8xf32> to vector<8x8xf32>
    %c2_i32_63 = arith.constant 2 : i32
    %93 = arith.muli %c2_i32_63, %c2_i32_59 : i32
    %c0_64 = arith.constant 0 : index
    %94 = arith.index_cast %93 : i32 to index
    %c0_65 = arith.constant 0 : index
    %95 = vector.load %arg13[%c0_64, %94, %c0_65] : memref<4x16x8xf32, #tpu.memory_space<vmem>>, vector<4x2x8xf32>
    %96 = vector.shape_cast %95 : vector<4x2x8xf32> to vector<8x8xf32>
    %cst_66 = arith.constant dense<0.000000e+00> : vector<8x8xf32>
    %97 = tpu.matmul %14, %92, %cst_66 {dimension_numbers = #tpu.dot_dimension_numbers<[1], [0], [0], [1], [0, 0, 1, 1], [], []>} : vector<8x8xf32>, vector<8x8xf32>, vector<8x8xf32> -> vector<8x8xf32>
    %cst_67 = arith.constant dense<0.000000e+00> : vector<8x8xf32>
    %98 = tpu.matmul %16, %96, %cst_67 {dimension_numbers = #tpu.dot_dimension_numbers<[1], [0], [0], [1], [0, 0, 1, 1], [], []>} : vector<8x8xf32>, vector<8x8xf32>, vector<8x8xf32> -> vector<8x8xf32>
    %99 = arith.addf %97, %98 : vector<8x8xf32>
    %c0_68 = arith.constant 0 : index
    %c0_69 = arith.constant 0 : index
    %100 = arith.index_cast %c2_i32_59 : i32 to index
    %c0_70 = arith.constant 0 : index
    %101 = vector.load %arg2[%c0_68, %c0_69, %100, %c0_70] : memref<1x8x8x8xf32, #tpu.memory_space<vmem>>, vector<1x8x1x8xf32>
    %102 = vector.shape_cast %101 : vector<1x8x1x8xf32> to vector<8x1x8xf32>
    %103 = vector.shape_cast %102 : vector<8x1x8xf32> to vector<8x8xf32>
    %cst_71 = arith.constant dense<0.000000e+00> : vector<8x8xf32>
    %104 = tpu.matmul %17, %103, %cst_71 {dimension_numbers = #tpu.dot_dimension_numbers<[1], [0], [0], [1], [0, 0, 1, 1], [], []>} : vector<8x8xf32>, vector<8x8xf32>, vector<8x8xf32> -> vector<8x8xf32>
    %105 = arith.addf %99, %104 : vector<8x8xf32>
    %106 = vector.broadcast %18 : vector<8x1xf32> to vector<8x8xf32>
    %107 = arith.addf %105, %106 : vector<8x8xf32>
    %cst_72 = arith.constant 0.000000e+00 : f32
    %108 = vector.broadcast %cst_72 : f32 to vector<8x8xf32>
    %109 = arith.maximumf %107, %108 : vector<8x8xf32>
    %110 = vector.broadcast %19 : vector<8x1xf32> to vector<8x8xf32>
    %111 = arith.mulf %109, %110 : vector<8x8xf32>
    %cst_73 = arith.constant dense<0.000000e+00> : vector<8xf32>
    %112 = vector.multi_reduction <add>, %111, %cst_73 [0] : vector<8x8xf32> to vector<8xf32>
    %113 = vector.shape_cast %112 : vector<8xf32> to vector<1x8xf32>
    %114 = vector.broadcast %20 : f32 to vector<1x8xf32>
    %115 = arith.addf %113, %114 : vector<1x8xf32>
    %116 = arith.negf %115 : vector<1x8xf32>
    %117 = math.exp %116 : vector<1x8xf32>
    %cst_74 = arith.constant 1.000000e+00 : f32
    %118 = vector.broadcast %cst_74 : f32 to vector<1x8xf32>
    %119 = arith.addf %118, %117 : vector<1x8xf32>
    %120 = arith.divf %118, %119 : vector<1x8xf32>
    %121 = arith.index_cast %c2_i32_59 : i32 to index
    %c0_75 = arith.constant 0 : index
    %122 = vector.load %arg14[%121, %c0_75] : memref<8x8xf32, #tpu.memory_space<vmem>>, vector<1x8xf32>
    tpu.vector_store %arg14[%121, %c0_75], %120 {strides = array<i32>} : memref<8x8xf32, #tpu.memory_space<vmem>>, vector<1x8xf32>,
    %c3_i32 = arith.constant 3 : i32
    %c2_i32_76 = arith.constant 2 : i32
    %123 = arith.muli %c2_i32_76, %c3_i32 : i32
    %c0_77 = arith.constant 0 : index
    %124 = arith.index_cast %123 : i32 to index
    %c0_78 = arith.constant 0 : index
    %125 = vector.load %arg12[%c0_77, %124, %c0_78] : memref<4x16x8xf32, #tpu.memory_space<vmem>>, vector<4x2x8xf32>
    %126 = vector.shape_cast %125 : vector<4x2x8xf32> to vector<8x8xf32>
    %c2_i32_79 = arith.constant 2 : i32
    %127 = arith.muli %c2_i32_79, %c3_i32 : i32
    %c0_80 = arith.constant 0 : index
    %128 = arith.index_cast %127 : i32 to index
    %c0_81 = arith.constant 0 : index
    %129 = vector.load %arg13[%c0_80, %128, %c0_81] : memref<4x16x8xf32, #tpu.memory_space<vmem>>, vector<4x2x8xf32>
    %130 = vector.shape_cast %129 : vector<4x2x8xf32> to vector<8x8xf32>
    %cst_82 = arith.constant dense<0.000000e+00> : vector<8x8xf32>
    %131 = tpu.matmul %14, %126, %cst_82 {dimension_numbers = #tpu.dot_dimension_numbers<[1], [0], [0], [1], [0, 0, 1, 1], [], []>} : vector<8x8xf32>, vector<8x8xf32>, vector<8x8xf32> -> vector<8x8xf32>
    %cst_83 = arith.constant dense<0.000000e+00> : vector<8x8xf32>
    %132 = tpu.matmul %16, %130, %cst_83 {dimension_numbers = #tpu.dot_dimension_numbers<[1], [0], [0], [1], [0, 0, 1, 1], [], []>} : vector<8x8xf32>, vector<8x8xf32>, vector<8x8xf32> -> vector<8x8xf32>
    %133 = arith.addf %131, %132 : vector<8x8xf32>
    %c0_84 = arith.constant 0 : index
    %c0_85 = arith.constant 0 : index
    %134 = arith.index_cast %c3_i32 : i32 to index
    %c0_86 = arith.constant 0 : index
    %135 = vector.load %arg2[%c0_84, %c0_85, %134, %c0_86] : memref<1x8x8x8xf32, #tpu.memory_space<vmem>>, vector<1x8x1x8xf32>
    %136 = vector.shape_cast %135 : vector<1x8x1x8xf32> to vector<8x1x8xf32>
    %137 = vector.shape_cast %136 : vector<8x1x8xf32> to vector<8x8xf32>
    %cst_87 = arith.constant dense<0.000000e+00> : vector<8x8xf32>
    %138 = tpu.matmul %17, %137, %cst_87 {dimension_numbers = #tpu.dot_dimension_numbers<[1], [0], [0], [1], [0, 0, 1, 1], [], []>} : vector<8x8xf32>, vector<8x8xf32>, vector<8x8xf32> -> vector<8x8xf32>
    %139 = arith.addf %133, %138 : vector<8x8xf32>
    %140 = vector.broadcast %18 : vector<8x1xf32> to vector<8x8xf32>
    %141 = arith.addf %139, %140 : vector<8x8xf32>
    %cst_88 = arith.constant 0.000000e+00 : f32
    %142 = vector.broadcast %cst_88 : f32 to vector<8x8xf32>
    %143 = arith.maximumf %141, %142 : vector<8x8xf32>
    %144 = vector.broadcast %19 : vector<8x1xf32> to vector<8x8xf32>
    %145 = arith.mulf %143, %144 : vector<8x8xf32>
    %cst_89 = arith.constant dense<0.000000e+00> : vector<8xf32>
    %146 = vector.multi_reduction <add>, %145, %cst_89 [0] : vector<8x8xf32> to vector<8xf32>
    %147 = vector.shape_cast %146 : vector<8xf32> to vector<1x8xf32>
    %148 = vector.broadcast %20 : f32 to vector<1x8xf32>
    %149 = arith.addf %147, %148 : vector<1x8xf32>
    %150 = arith.negf %149 : vector<1x8xf32>
    %151 = math.exp %150 : vector<1x8xf32>
    %cst_90 = arith.constant 1.000000e+00 : f32
    %152 = vector.broadcast %cst_90 : f32 to vector<1x8xf32>
    %153 = arith.addf %152, %151 : vector<1x8xf32>
    %154 = arith.divf %152, %153 : vector<1x8xf32>
    %155 = arith.index_cast %c3_i32 : i32 to index
    %c0_91 = arith.constant 0 : index
    %156 = vector.load %arg14[%155, %c0_91] : memref<8x8xf32, #tpu.memory_space<vmem>>, vector<1x8xf32>
    tpu.vector_store %arg14[%155, %c0_91], %154 {strides = array<i32>} : memref<8x8xf32, #tpu.memory_space<vmem>>, vector<1x8xf32>,
    %c4_i32 = arith.constant 4 : i32
    %c2_i32_92 = arith.constant 2 : i32
    %157 = arith.muli %c2_i32_92, %c4_i32 : i32
    %c0_93 = arith.constant 0 : index
    %158 = arith.index_cast %157 : i32 to index
    %c0_94 = arith.constant 0 : index
    %159 = vector.load %arg12[%c0_93, %158, %c0_94] : memref<4x16x8xf32, #tpu.memory_space<vmem>>, vector<4x2x8xf32>
    %160 = vector.shape_cast %159 : vector<4x2x8xf32> to vector<8x8xf32>
    %c2_i32_95 = arith.constant 2 : i32
    %161 = arith.muli %c2_i32_95, %c4_i32 : i32
    %c0_96 = arith.constant 0 : index
    %162 = arith.index_cast %161 : i32 to index
    %c0_97 = arith.constant 0 : index
    %163 = vector.load %arg13[%c0_96, %162, %c0_97] : memref<4x16x8xf32, #tpu.memory_space<vmem>>, vector<4x2x8xf32>
    %164 = vector.shape_cast %163 : vector<4x2x8xf32> to vector<8x8xf32>
    %cst_98 = arith.constant dense<0.000000e+00> : vector<8x8xf32>
    %165 = tpu.matmul %14, %160, %cst_98 {dimension_numbers = #tpu.dot_dimension_numbers<[1], [0], [0], [1], [0, 0, 1, 1], [], []>} : vector<8x8xf32>, vector<8x8xf32>, vector<8x8xf32> -> vector<8x8xf32>
    %cst_99 = arith.constant dense<0.000000e+00> : vector<8x8xf32>
    %166 = tpu.matmul %16, %164, %cst_99 {dimension_numbers = #tpu.dot_dimension_numbers<[1], [0], [0], [1], [0, 0, 1, 1], [], []>} : vector<8x8xf32>, vector<8x8xf32>, vector<8x8xf32> -> vector<8x8xf32>
    %167 = arith.addf %165, %166 : vector<8x8xf32>
    %c0_100 = arith.constant 0 : index
    %c0_101 = arith.constant 0 : index
    %168 = arith.index_cast %c4_i32 : i32 to index
    %c0_102 = arith.constant 0 : index
    %169 = vector.load %arg2[%c0_100, %c0_101, %168, %c0_102] : memref<1x8x8x8xf32, #tpu.memory_space<vmem>>, vector<1x8x1x8xf32>
    %170 = vector.shape_cast %169 : vector<1x8x1x8xf32> to vector<8x1x8xf32>
    %171 = vector.shape_cast %170 : vector<8x1x8xf32> to vector<8x8xf32>
    %cst_103 = arith.constant dense<0.000000e+00> : vector<8x8xf32>
    %172 = tpu.matmul %17, %171, %cst_103 {dimension_numbers = #tpu.dot_dimension_numbers<[1], [0], [0], [1], [0, 0, 1, 1], [], []>} : vector<8x8xf32>, vector<8x8xf32>, vector<8x8xf32> -> vector<8x8xf32>
    %173 = arith.addf %167, %172 : vector<8x8xf32>
    %174 = vector.broadcast %18 : vector<8x1xf32> to vector<8x8xf32>
    %175 = arith.addf %173, %174 : vector<8x8xf32>
    %cst_104 = arith.constant 0.000000e+00 : f32
    %176 = vector.broadcast %cst_104 : f32 to vector<8x8xf32>
    %177 = arith.maximumf %175, %176 : vector<8x8xf32>
    %178 = vector.broadcast %19 : vector<8x1xf32> to vector<8x8xf32>
    %179 = arith.mulf %177, %178 : vector<8x8xf32>
    %cst_105 = arith.constant dense<0.000000e+00> : vector<8xf32>
    %180 = vector.multi_reduction <add>, %179, %cst_105 [0] : vector<8x8xf32> to vector<8xf32>
    %181 = vector.shape_cast %180 : vector<8xf32> to vector<1x8xf32>
    %182 = vector.broadcast %20 : f32 to vector<1x8xf32>
    %183 = arith.addf %181, %182 : vector<1x8xf32>
    %184 = arith.negf %183 : vector<1x8xf32>
    %185 = math.exp %184 : vector<1x8xf32>
    %cst_106 = arith.constant 1.000000e+00 : f32
    %186 = vector.broadcast %cst_106 : f32 to vector<1x8xf32>
    %187 = arith.addf %186, %185 : vector<1x8xf32>
    %188 = arith.divf %186, %187 : vector<1x8xf32>
    %189 = arith.index_cast %c4_i32 : i32 to index
    %c0_107 = arith.constant 0 : index
    %190 = vector.load %arg14[%189, %c0_107] : memref<8x8xf32, #tpu.memory_space<vmem>>, vector<1x8xf32>
    tpu.vector_store %arg14[%189, %c0_107], %188 {strides = array<i32>} : memref<8x8xf32, #tpu.memory_space<vmem>>, vector<1x8xf32>,
    %c5_i32 = arith.constant 5 : i32
    %c2_i32_108 = arith.constant 2 : i32
    %191 = arith.muli %c2_i32_108, %c5_i32 : i32
    %c0_109 = arith.constant 0 : index
    %192 = arith.index_cast %191 : i32 to index
    %c0_110 = arith.constant 0 : index
    %193 = vector.load %arg12[%c0_109, %192, %c0_110] : memref<4x16x8xf32, #tpu.memory_space<vmem>>, vector<4x2x8xf32>
    %194 = vector.shape_cast %193 : vector<4x2x8xf32> to vector<8x8xf32>
    %c2_i32_111 = arith.constant 2 : i32
    %195 = arith.muli %c2_i32_111, %c5_i32 : i32
    %c0_112 = arith.constant 0 : index
    %196 = arith.index_cast %195 : i32 to index
    %c0_113 = arith.constant 0 : index
    %197 = vector.load %arg13[%c0_112, %196, %c0_113] : memref<4x16x8xf32, #tpu.memory_space<vmem>>, vector<4x2x8xf32>
    %198 = vector.shape_cast %197 : vector<4x2x8xf32> to vector<8x8xf32>
    %cst_114 = arith.constant dense<0.000000e+00> : vector<8x8xf32>
    %199 = tpu.matmul %14, %194, %cst_114 {dimension_numbers = #tpu.dot_dimension_numbers<[1], [0], [0], [1], [0, 0, 1, 1], [], []>} : vector<8x8xf32>, vector<8x8xf32>, vector<8x8xf32> -> vector<8x8xf32>
    %cst_115 = arith.constant dense<0.000000e+00> : vector<8x8xf32>
    %200 = tpu.matmul %16, %198, %cst_115 {dimension_numbers = #tpu.dot_dimension_numbers<[1], [0], [0], [1], [0, 0, 1, 1], [], []>} : vector<8x8xf32>, vector<8x8xf32>, vector<8x8xf32> -> vector<8x8xf32>
    %201 = arith.addf %199, %200 : vector<8x8xf32>
    %c0_116 = arith.constant 0 : index
    %c0_117 = arith.constant 0 : index
    %202 = arith.index_cast %c5_i32 : i32 to index
    %c0_118 = arith.constant 0 : index
    %203 = vector.load %arg2[%c0_116, %c0_117, %202, %c0_118] : memref<1x8x8x8xf32, #tpu.memory_space<vmem>>, vector<1x8x1x8xf32>
    %204 = vector.shape_cast %203 : vector<1x8x1x8xf32> to vector<8x1x8xf32>
    %205 = vector.shape_cast %204 : vector<8x1x8xf32> to vector<8x8xf32>
    %cst_119 = arith.constant dense<0.000000e+00> : vector<8x8xf32>
    %206 = tpu.matmul %17, %205, %cst_119 {dimension_numbers = #tpu.dot_dimension_numbers<[1], [0], [0], [1], [0, 0, 1, 1], [], []>} : vector<8x8xf32>, vector<8x8xf32>, vector<8x8xf32> -> vector<8x8xf32>
    %207 = arith.addf %201, %206 : vector<8x8xf32>
    %208 = vector.broadcast %18 : vector<8x1xf32> to vector<8x8xf32>
    %209 = arith.addf %207, %208 : vector<8x8xf32>
    %cst_120 = arith.constant 0.000000e+00 : f32
    %210 = vector.broadcast %cst_120 : f32 to vector<8x8xf32>
    %211 = arith.maximumf %209, %210 : vector<8x8xf32>
    %212 = vector.broadcast %19 : vector<8x1xf32> to vector<8x8xf32>
    %213 = arith.mulf %211, %212 : vector<8x8xf32>
    %cst_121 = arith.constant dense<0.000000e+00> : vector<8xf32>
    %214 = vector.multi_reduction <add>, %213, %cst_121 [0] : vector<8x8xf32> to vector<8xf32>
    %215 = vector.shape_cast %214 : vector<8xf32> to vector<1x8xf32>
    %216 = vector.broadcast %20 : f32 to vector<1x8xf32>
    %217 = arith.addf %215, %216 : vector<1x8xf32>
    %218 = arith.negf %217 : vector<1x8xf32>
    %219 = math.exp %218 : vector<1x8xf32>
    %cst_122 = arith.constant 1.000000e+00 : f32
    %220 = vector.broadcast %cst_122 : f32 to vector<1x8xf32>
    %221 = arith.addf %220, %219 : vector<1x8xf32>
    %222 = arith.divf %220, %221 : vector<1x8xf32>
    %223 = arith.index_cast %c5_i32 : i32 to index
    %c0_123 = arith.constant 0 : index
    %224 = vector.load %arg14[%223, %c0_123] : memref<8x8xf32, #tpu.memory_space<vmem>>, vector<1x8xf32>
    tpu.vector_store %arg14[%223, %c0_123], %222 {strides = array<i32>} : memref<8x8xf32, #tpu.memory_space<vmem>>, vector<1x8xf32>,
    %c6_i32 = arith.constant 6 : i32
    %c2_i32_124 = arith.constant 2 : i32
    %225 = arith.muli %c2_i32_124, %c6_i32 : i32
    %c0_125 = arith.constant 0 : index
    %226 = arith.index_cast %225 : i32 to index
    %c0_126 = arith.constant 0 : index
    %227 = vector.load %arg12[%c0_125, %226, %c0_126] : memref<4x16x8xf32, #tpu.memory_space<vmem>>, vector<4x2x8xf32>
    %228 = vector.shape_cast %227 : vector<4x2x8xf32> to vector<8x8xf32>
    %c2_i32_127 = arith.constant 2 : i32
    %229 = arith.muli %c2_i32_127, %c6_i32 : i32
    %c0_128 = arith.constant 0 : index
    %230 = arith.index_cast %229 : i32 to index
    %c0_129 = arith.constant 0 : index
    %231 = vector.load %arg13[%c0_128, %230, %c0_129] : memref<4x16x8xf32, #tpu.memory_space<vmem>>, vector<4x2x8xf32>
    %232 = vector.shape_cast %231 : vector<4x2x8xf32> to vector<8x8xf32>
    %cst_130 = arith.constant dense<0.000000e+00> : vector<8x8xf32>
    %233 = tpu.matmul %14, %228, %cst_130 {dimension_numbers = #tpu.dot_dimension_numbers<[1], [0], [0], [1], [0, 0, 1, 1], [], []>} : vector<8x8xf32>, vector<8x8xf32>, vector<8x8xf32> -> vector<8x8xf32>
    %cst_131 = arith.constant dense<0.000000e+00> : vector<8x8xf32>
    %234 = tpu.matmul %16, %232, %cst_131 {dimension_numbers = #tpu.dot_dimension_numbers<[1], [0], [0], [1], [0, 0, 1, 1], [], []>} : vector<8x8xf32>, vector<8x8xf32>, vector<8x8xf32> -> vector<8x8xf32>
    %235 = arith.addf %233, %234 : vector<8x8xf32>
    %c0_132 = arith.constant 0 : index
    %c0_133 = arith.constant 0 : index
    %236 = arith.index_cast %c6_i32 : i32 to index
    %c0_134 = arith.constant 0 : index
    %237 = vector.load %arg2[%c0_132, %c0_133, %236, %c0_134] : memref<1x8x8x8xf32, #tpu.memory_space<vmem>>, vector<1x8x1x8xf32>
    %238 = vector.shape_cast %237 : vector<1x8x1x8xf32> to vector<8x1x8xf32>
    %239 = vector.shape_cast %238 : vector<8x1x8xf32> to vector<8x8xf32>
    %cst_135 = arith.constant dense<0.000000e+00> : vector<8x8xf32>
    %240 = tpu.matmul %17, %239, %cst_135 {dimension_numbers = #tpu.dot_dimension_numbers<[1], [0], [0], [1], [0, 0, 1, 1], [], []>} : vector<8x8xf32>, vector<8x8xf32>, vector<8x8xf32> -> vector<8x8xf32>
    %241 = arith.addf %235, %240 : vector<8x8xf32>
    %242 = vector.broadcast %18 : vector<8x1xf32> to vector<8x8xf32>
    %243 = arith.addf %241, %242 : vector<8x8xf32>
    %cst_136 = arith.constant 0.000000e+00 : f32
    %244 = vector.broadcast %cst_136 : f32 to vector<8x8xf32>
    %245 = arith.maximumf %243, %244 : vector<8x8xf32>
    %246 = vector.broadcast %19 : vector<8x1xf32> to vector<8x8xf32>
    %247 = arith.mulf %245, %246 : vector<8x8xf32>
    %cst_137 = arith.constant dense<0.000000e+00> : vector<8xf32>
    %248 = vector.multi_reduction <add>, %247, %cst_137 [0] : vector<8x8xf32> to vector<8xf32>
    %249 = vector.shape_cast %248 : vector<8xf32> to vector<1x8xf32>
    %250 = vector.broadcast %20 : f32 to vector<1x8xf32>
    %251 = arith.addf %249, %250 : vector<1x8xf32>
    %252 = arith.negf %251 : vector<1x8xf32>
    %253 = math.exp %252 : vector<1x8xf32>
    %cst_138 = arith.constant 1.000000e+00 : f32
    %254 = vector.broadcast %cst_138 : f32 to vector<1x8xf32>
    %255 = arith.addf %254, %253 : vector<1x8xf32>
    %256 = arith.divf %254, %255 : vector<1x8xf32>
    %257 = arith.index_cast %c6_i32 : i32 to index
    %c0_139 = arith.constant 0 : index
    %258 = vector.load %arg14[%257, %c0_139] : memref<8x8xf32, #tpu.memory_space<vmem>>, vector<1x8xf32>
    tpu.vector_store %arg14[%257, %c0_139], %256 {strides = array<i32>} : memref<8x8xf32, #tpu.memory_space<vmem>>, vector<1x8xf32>,
    %c7_i32 = arith.constant 7 : i32
    %c2_i32_140 = arith.constant 2 : i32
    %259 = arith.muli %c2_i32_140, %c7_i32 : i32
    %c0_141 = arith.constant 0 : index
    %260 = arith.index_cast %259 : i32 to index
    %c0_142 = arith.constant 0 : index
    %261 = vector.load %arg12[%c0_141, %260, %c0_142] : memref<4x16x8xf32, #tpu.memory_space<vmem>>, vector<4x2x8xf32>
    %262 = vector.shape_cast %261 : vector<4x2x8xf32> to vector<8x8xf32>
    %c2_i32_143 = arith.constant 2 : i32
    %263 = arith.muli %c2_i32_143, %c7_i32 : i32
    %c0_144 = arith.constant 0 : index
    %264 = arith.index_cast %263 : i32 to index
    %c0_145 = arith.constant 0 : index
    %265 = vector.load %arg13[%c0_144, %264, %c0_145] : memref<4x16x8xf32, #tpu.memory_space<vmem>>, vector<4x2x8xf32>
    %266 = vector.shape_cast %265 : vector<4x2x8xf32> to vector<8x8xf32>
    %cst_146 = arith.constant dense<0.000000e+00> : vector<8x8xf32>
    %267 = tpu.matmul %14, %262, %cst_146 {dimension_numbers = #tpu.dot_dimension_numbers<[1], [0], [0], [1], [0, 0, 1, 1], [], []>} : vector<8x8xf32>, vector<8x8xf32>, vector<8x8xf32> -> vector<8x8xf32>
    %cst_147 = arith.constant dense<0.000000e+00> : vector<8x8xf32>
    %268 = tpu.matmul %16, %266, %cst_147 {dimension_numbers = #tpu.dot_dimension_numbers<[1], [0], [0], [1], [0, 0, 1, 1], [], []>} : vector<8x8xf32>, vector<8x8xf32>, vector<8x8xf32> -> vector<8x8xf32>
    %269 = arith.addf %267, %268 : vector<8x8xf32>
    %c0_148 = arith.constant 0 : index
    %c0_149 = arith.constant 0 : index
    %270 = arith.index_cast %c7_i32 : i32 to index
    %c0_150 = arith.constant 0 : index
    %271 = vector.load %arg2[%c0_148, %c0_149, %270, %c0_150] : memref<1x8x8x8xf32, #tpu.memory_space<vmem>>, vector<1x8x1x8xf32>
    %272 = vector.shape_cast %271 : vector<1x8x1x8xf32> to vector<8x1x8xf32>
    %273 = vector.shape_cast %272 : vector<8x1x8xf32> to vector<8x8xf32>
    %cst_151 = arith.constant dense<0.000000e+00> : vector<8x8xf32>
    %274 = tpu.matmul %17, %273, %cst_151 {dimension_numbers = #tpu.dot_dimension_numbers<[1], [0], [0], [1], [0, 0, 1, 1], [], []>} : vector<8x8xf32>, vector<8x8xf32>, vector<8x8xf32> -> vector<8x8xf32>
    %275 = arith.addf %269, %274 : vector<8x8xf32>
    %276 = vector.broadcast %18 : vector<8x1xf32> to vector<8x8xf32>
    %277 = arith.addf %275, %276 : vector<8x8xf32>
    %cst_152 = arith.constant 0.000000e+00 : f32
    %278 = vector.broadcast %cst_152 : f32 to vector<8x8xf32>
    %279 = arith.maximumf %277, %278 : vector<8x8xf32>
    %280 = vector.broadcast %19 : vector<8x1xf32> to vector<8x8xf32>
    %281 = arith.mulf %279, %280 : vector<8x8xf32>
    %cst_153 = arith.constant dense<0.000000e+00> : vector<8xf32>
    %282 = vector.multi_reduction <add>, %281, %cst_153 [0] : vector<8x8xf32> to vector<8xf32>
    %283 = vector.shape_cast %282 : vector<8xf32> to vector<1x8xf32>
    %284 = vector.broadcast %20 : f32 to vector<1x8xf32>
    %285 = arith.addf %283, %284 : vector<1x8xf32>
    %286 = arith.negf %285 : vector<1x8xf32>
    %287 = math.exp %286 : vector<1x8xf32>
    %cst_154 = arith.constant 1.000000e+00 : f32
    %288 = vector.broadcast %cst_154 : f32 to vector<1x8xf32>
    %289 = arith.addf %288, %287 : vector<1x8xf32>
    %290 = arith.divf %288, %289 : vector<1x8xf32>
    %291 = arith.index_cast %c7_i32 : i32 to index
    %c0_155 = arith.constant 0 : index
    %292 = vector.load %arg14[%291, %c0_155] : memref<8x8xf32, #tpu.memory_space<vmem>>, vector<1x8xf32>
    tpu.vector_store %arg14[%291, %c0_155], %290 {strides = array<i32>} : memref<8x8xf32, #tpu.memory_space<vmem>>, vector<1x8xf32>,
    %c8_i32 = arith.constant 8 : i32
    %c0_156 = arith.constant 0 : index
    %c0_157 = arith.constant 0 : index
    %293 = vector.load %arg9[%c0_156, %c0_157] : memref<16x8xf32, #tpu.memory_space<vmem>>, vector<16x8xf32>
    %c0_158 = arith.constant 0 : index
    %c0_159 = arith.constant 0 : index
    %294 = vector.load %arg14[%c0_158, %c0_159] : memref<8x8xf32, #tpu.memory_space<vmem>>, vector<8x8xf32>
    %cst_160 = arith.constant dense<0.000000e+00> : vector<16x8xf32>
    %295 = tpu.matmul %293, %294, %cst_160 {dimension_numbers = #tpu.dot_dimension_numbers<[1], [0], [0], [1], [0, 0, 1, 1], [], []>} : vector<16x8xf32>, vector<8x8xf32>, vector<16x8xf32> -> vector<16x8xf32>
    %c0_161 = arith.constant 0 : index
    %c0_162 = arith.constant 0 : index
    %296 = vector.load %arg10[%c0_161, %c0_162] : memref<8x16xf32, #tpu.memory_space<vmem>>, vector<8x16xf32>
    %cst_163 = arith.constant dense<0.000000e+00> : vector<16x16xf32>
    %297 = tpu.matmul %295, %296, %cst_163 {dimension_numbers = #tpu.dot_dimension_numbers<[1], [0], [0], [1], [0, 0, 1, 1], [], []>} : vector<16x8xf32>, vector<8x16xf32>, vector<16x16xf32> -> vector<16x16xf32>
    %298 = vector.shape_cast %297 : vector<16x16xf32> to vector<1x16x16xf32>
    %299 = vector.broadcast %298 : vector<1x16x16xf32> to vector<4x16x16xf32>
    %300 = arith.mulf %1, %299 : vector<4x16x16xf32>
    %c0_164 = arith.constant 0 : index
    %c0_165 = arith.constant 0 : index
    %c0_166 = arith.constant 0 : index
    %c0_167 = arith.constant 0 : index
    %301 = vector.load %arg11[%c0_164, %c0_165, %c0_166, %c0_167] : memref<1x4x16x16xf32, #tpu.memory_space<vmem>>, vector<1x4x16x16xf32>
    %302 = vector.shape_cast %301 : vector<1x4x16x16xf32> to vector<4x16x16xf32>
    %303 = vector.shape_cast %300 : vector<4x16x16xf32> to vector<1x4x16x16xf32>
    tpu.vector_store %arg11[%c0_164, %c0_165, %c0_166, %c0_167], %303 {strides = array<i32>} : memref<1x4x16x16xf32, #tpu.memory_space<vmem>>, vector<1x4x16x16xf32>,
    return
  }
  func.func @transform_0(%arg0: i32) -> (i32, i32, i32, i32) {
    %c0_i32 = arith.constant 0 : i32
    %c0_i32_0 = arith.constant 0 : i32
    %c0_i32_1 = arith.constant 0 : i32
    %c0_i32_2 = arith.constant 0 : i32
    return %arg0, %c0_i32, %c0_i32_0, %c0_i32_1 : i32, i32, i32, i32
  }
  func.func @transform_1(%arg0: i32) -> (i32, i32, i32, i32) {
    %c0_i32 = arith.constant 0 : i32
    %c0_i32_0 = arith.constant 0 : i32
    %c0_i32_1 = arith.constant 0 : i32
    %c0_i32_2 = arith.constant 0 : i32
    return %arg0, %c0_i32, %c0_i32_0, %c0_i32_1 : i32, i32, i32, i32
  }
  func.func @transform_2(%arg0: i32) -> (i32, i32, i32) {
    %c0_i32 = arith.constant 0 : i32
    %c0_i32_0 = arith.constant 0 : i32
    %c0_i32_1 = arith.constant 0 : i32
    %c0_i32_2 = arith.constant 0 : i32
    return %c0_i32, %c0_i32_0, %c0_i32_1 : i32, i32, i32
  }
  func.func @transform_3(%arg0: i32) -> (i32, i32, i32) {
    %c0_i32 = arith.constant 0 : i32
    %c0_i32_0 = arith.constant 0 : i32
    %c0_i32_1 = arith.constant 0 : i32
    %c0_i32_2 = arith.constant 0 : i32
    return %c0_i32, %c0_i32_0, %c0_i32_1 : i32, i32, i32
  }
  func.func @transform_4(%arg0: i32) -> (i32, i32) {
    %c0_i32 = arith.constant 0 : i32
    %c0_i32_0 = arith.constant 0 : i32
    %c0_i32_1 = arith.constant 0 : i32
    return %c0_i32, %c0_i32_0 : i32, i32
  }
  func.func @transform_5(%arg0: i32) -> (i32, i32) {
    %c0_i32 = arith.constant 0 : i32
    %c0_i32_0 = arith.constant 0 : i32
    %c0_i32_1 = arith.constant 0 : i32
    return %c0_i32, %c0_i32_0 : i32, i32
  }
  func.func @transform_6(%arg0: i32) -> (i32, i32) {
    %c0_i32 = arith.constant 0 : i32
    %c0_i32_0 = arith.constant 0 : i32
    %c0_i32_1 = arith.constant 0 : i32
    return %c0_i32, %c0_i32_0 : i32, i32
  }
  func.func @transform_7(%arg0: i32) -> i32 {
    %c0_i32 = arith.constant 0 : i32
    %c0_i32_0 = arith.constant 0 : i32
    return %c0_i32 : i32
  }
  func.func @transform_8(%arg0: i32) -> (i32, i32) {
    %c0_i32 = arith.constant 0 : i32
    %c0_i32_0 = arith.constant 0 : i32
    %c0_i32_1 = arith.constant 0 : i32
    return %c0_i32, %c0_i32_0 : i32, i32
  }
  func.func @transform_9(%arg0: i32) -> (i32, i32) {
    %c0_i32 = arith.constant 0 : i32
    %c0_i32_0 = arith.constant 0 : i32
    %c0_i32_1 = arith.constant 0 : i32
    return %c0_i32, %c0_i32_0 : i32, i32
  }
  func.func @transform_10(%arg0: i32) -> (i32, i32, i32, i32) {
    %c0_i32 = arith.constant 0 : i32
    %c0_i32_0 = arith.constant 0 : i32
    %c0_i32_1 = arith.constant 0 : i32
    %c0_i32_2 = arith.constant 0 : i32
    return %arg0, %c0_i32, %c0_i32_0, %c0_i32_1 : i32, i32, i32, i32
  }
}

</mosaic_0001>

<llo_original>
// kernel: tpu_custom_call.1
$region0: #{tpu_custom_call.1}
  #allocation0 [shape = 'u32[]', space=smem, size = 0x4, offset = 0x4, fixed_abs, tag = 'smem constant byte address 0x4 - core index']
  #allocation1 [shape = 'u32[144,128]{1,0:T(1,128)}', space=vmem, size = 0x12000, scoped, tag = 'internal scratch']
  #allocation2 [shape = 'f32[4,16,8]{2,1,0:T(8,128)}', space=vmem, size = 0x8000, scoped, tag = 'scratch operand']
  #allocation3 [shape = 'f32[4,16,8]{2,1,0:T(8,128)}', space=vmem, size = 0x8000, scoped, tag = 'scratch operand']
  #allocation4 [shape = 'f32[8,8]{1,0:T(8,128)}', space=vmem, size = 0x1000, scoped, tag = 'scratch operand']
  #allocation5 [shape = 'f32[1]{0:T(128)S(6)}', space=smem, size = 0x200, scoped, tag = 'scoped memory for tpu_custom_call.1']
  %s0 = inlined_call_operand.hbm [shape: f32[2,4,16,16], index: 0, kind: input, shape index: {}]
  %s1 = inlined_call_operand.hbm [shape: f32[2,8,8,8], index: 1, kind: input, shape index: {}]
  %s2 = inlined_call_operand.vmem [shape: f32[2,8,8], index: 2, kind: input, shape index: {}]
  %s3 = inlined_call_operand.vmem [shape: f32[2,16,8], index: 3, kind: input, shape index: {}]
  %s4 = inlined_call_operand.vmem [shape: f32[8,8], index: 4, kind: input, shape index: {}]
  %s5 = inlined_call_operand.vmem [shape: f32[8,1], index: 5, kind: input, shape index: {}]
  %s6 = inlined_call_operand.vmem [shape: f32[8,1], index: 6, kind: input, shape index: {}]
  %s7 = inlined_call_operand.<no memory space> [shape: f32[1], index: 7, kind: input, shape index: {}]
  %s8 = inlined_call_operand.vmem [shape: f32[16,8], index: 8, kind: input, shape index: {}]
  %s9 = inlined_call_operand.vmem [shape: f32[8,16], index: 9, kind: input, shape index: {}]
  %s10 = inlined_call_operand.hbm [shape: f32[2,4,16,16], index: 10, kind: output, shape index: {}]
  %s11 = sld [smem:[#allocation0]]
  $region81: #{tpu_custom_call.1} parent=0
    _
  %s13 = ssub.s32 1, %s11
  %s14 = scalar_select 0, %s13, %s11
  %15 = sst [smem:[#allocation5]] %s7
  $region1: #{tpu_custom_call.1} parent=0
    #allocation6 [shape = 'u8[65536]{0}', space=vmem, size = 0x10000, scoped, tag = 'input window, operand 0']
    #allocation7 [shape = 's32[2]{0}', space=sflag, size = 0x8, scoped, tag = 'scoped memory for tpu_custom_call.1']
    #allocation8 [shape = 's32[2]{0}', space=sflag, size = 0x8, scoped, tag = 'scoped memory for tpu_custom_call.1']
    #allocation9 [shape = 'u8[65536]{0}', space=vmem, size = 0x10000, scoped, tag = 'input window, operand 1']
    #allocation10 [shape = 's32[2]{0}', space=sflag, size = 0x8, scoped, tag = 'scoped memory for tpu_custom_call.1']
    #allocation11 [shape = 'u8[65536]{0}', space=vmem, size = 0x10000, scoped, tag = 'output window, operand 0']
    %16 = vsyncpa [#allocation7], 0
    %s17 = scalar_lea.sflag [#allocation7], 1
    %18 = vsyncpa %s17, 0
    %19 = vsyncpa [#allocation10], 0
    %s20 = scalar_lea.sflag [#allocation10], 1
    %21 = vsyncpa %s20, 0
    %22 = vsyncpa [#allocation8], 0
    %s23 = scalar_lea.sflag [#allocation8], 1
    %24 = vsyncpa %s23, 0
    loop: start=0, step=1, limit=4
    $region2: #{tpu_custom_call.1} parent=1 // loop_pre_header
      _
    $region3: #{tpu_custom_call.1} parent=1 // loop_header
      %s26 = sphi 0, %s30
      %p27 = scmp.ge.s32.totalorder %s26, 4
      %s36 = sphi 0, %s38
      %s39 = sphi 0, %s36
      %s40 = sphi 0, %s39
      %s56 = sphi 0, %s40
      %s62 = sphi 0, %s64
      %s65 = sphi 0, %s62
      %s66 = sphi 0, %s65
      %s82 = sphi 0, %s66
      %s86 = sphi 0, %s86
      %s88 = sphi 0, %s86
      %s89 = sphi 0, %s88
      %s103 = sphi 0, %s89
      %s107 = sphi 0, %s107
      %s109 = sphi 0, %s107
      %s110 = sphi 0, %s109
      %s124 = sphi 0, %s110
      %s128 = sphi 0, %s128
      %s130 = sphi 0, %s128
      %s131 = sphi 0, %s130
      %s145 = sphi 0, %s131
      %s149 = sphi 0, %s149
      %s151 = sphi 0, %s149
      %s152 = sphi 0, %s151
      %s166 = sphi 0, %s152
      %s170 = sphi 0, %s170
      %s172 = sphi 0, %s170
      %s173 = sphi 0, %s172
      %s187 = sphi 0, %s173
      %s191 = sphi 0, %s191
      %s193 = sphi 0, %s191
      %s194 = sphi 0, %s193
      %s208 = sphi 0, %s194
      %s212 = sphi 0, %s212
      %s214 = sphi 0, %s212
      %s215 = sphi 0, %s214
      %s229 = sphi 0, %s215
      %s233 = sphi 0, %s233
      %s235 = sphi 0, %s233
      %s236 = sphi 0, %s235
      %s250 = sphi 0, %s236
      %s256 = sphi 0, %s258
      %s259 = sphi 0, %s256
      %s260 = sphi 0, %s259
      %s276 = sphi 0, %s260
    $region4: #{tpu_custom_call.1} parent=1 // loop_header_branch
      %29 = sbr.rel (%p27) target = $region8
    $region5: #{tpu_custom_call.1} parent=1 // loop_body
      %s31 = ssub.s32 %s26, 1
      %s32 = ssub.s32 %s26, 2
      %s33 = sadd.s32 %s26, 1
      %s34 = ssub.s32 %s26, %s33
      %p35 = scmp.eq.s32.totalorder %s34, 0
      %s37 = sadd.s32 %s36, 1
      %s38 = scalar_select %p35, %s36, %s37
      %p41 = pneg %p35
      %p42 = scmp.eq.s32.totalorder %s26, 1
      %p43 = por %p41, %p42
      %p44 = scmp.ne.s32.totalorder %s36, %s39
      %p45 = scmp.eq.s32.totalorder %s26, 0
      %p46 = por %p44, %p45
      %p47 = scmp.ne.s32.totalorder %s36, %s39
      %p48 = scmp.eq.s32.totalorder %s31, 1
      %p49 = por %p47, %p48
      %p50 = scmp.ne.s32.totalorder %s39, %s40
      %p51 = scmp.eq.s32.totalorder %s31, 0
      %p52 = por %p50, %p51
      %p53 = scmp.ne.s32.totalorder %s39, %s40
      %p54 = scmp.eq.s32.totalorder %s32, 1
      %p55 = por %p53, %p54
      %p57 = scmp.ne.s32.totalorder %s40, %s56
      %p58 = scmp.eq.s32.totalorder %s32, 0
      %p59 = por %p57, %p58
      %s60 = ssub.s32 %s26, %s33
      %p61 = scmp.eq.s32.totalorder %s60, 0
      %s63 = sadd.s32 %s62, 1
      %s64 = scalar_select %p61, %s62, %s63
      %p67 = pneg %p61
      %p68 = scmp.eq.s32.totalorder %s26, 1
      %p69 = por %p67, %p68
      %p70 = scmp.ne.s32.totalorder %s62, %s65
      %p71 = scmp.eq.s32.totalorder %s26, 0
      %p72 = por %p70, %p71
      %p73 = scmp.ne.s32.totalorder %s62, %s65
      %p74 = scmp.eq.s32.totalorder %s31, 1
      %p75 = por %p73, %p74
      %p76 = scmp.ne.s32.totalorder %s65, %s66
      %p77 = scmp.eq.s32.totalorder %s31, 0
      %p78 = por %p76, %p77
      %p79 = scmp.ne.s32.totalorder %s65, %s66
      %p80 = scmp.eq.s32.totalorder %s32, 1
      %p81 = por %p79, %p80
      %p83 = scmp.ne.s32.totalorder %s66, %s82
      %p84 = scmp.eq.s32.totalorder %s32, 0
      %p85 = por %p83, %p84
      %s87 = sadd.s32 %s86, 1
      %p90 = scmp.eq.s32.totalorder %s26, 1
      %p91 = scmp.ne.s32.totalorder %s86, %s88
      %p92 = scmp.eq.s32.totalorder %s26, 0
      %p93 = por %p91, %p92
      %p94 = scmp.ne.s32.totalorder %s86, %s88
      %p95 = scmp.eq.s32.totalorder %s31, 1
      %p96 = por %p94, %p95
      %p97 = scmp.ne.s32.totalorder %s88, %s89
      %p98 = scmp.eq.s32.totalorder %s31, 0
      %p99 = por %p97, %p98
      %p100 = scmp.ne.s32.totalorder %s88, %s89
      %p101 = scmp.eq.s32.totalorder %s32, 1
      %p102 = por %p100, %p101
      %p104 = scmp.ne.s32.totalorder %s89, %s103
      %p105 = scmp.eq.s32.totalorder %s32, 0
      %p106 = por %p104, %p105
      %s108 = sadd.s32 %s107, 1
      %p111 = scmp.eq.s32.totalorder %s26, 1
      %p112 = scmp.ne.s32.totalorder %s107, %s109
      %p113 = scmp.eq.s32.totalorder %s26, 0
      %p114 = por %p112, %p113
      %p115 = scmp.ne.s32.totalorder %s107, %s109
      %p116 = scmp.eq.s32.totalorder %s31, 1
      %p117 = por %p115, %p116
      %p118 = scmp.ne.s32.totalorder %s109, %s110
      %p119 = scmp.eq.s32.totalorder %s31, 0
      %p120 = por %p118, %p119
      %p121 = scmp.ne.s32.totalorder %s109, %s110
      %p122 = scmp.eq.s32.totalorder %s32, 1
      %p123 = por %p121, %p122
      %p125 = scmp.ne.s32.totalorder %s110, %s124
      %p126 = scmp.eq.s32.totalorder %s32, 0
      %p127 = por %p125, %p126
      %s129 = sadd.s32 %s128, 1
      %p132 = scmp.eq.s32.totalorder %s26, 1
      %p133 = scmp.ne.s32.totalorder %s128, %s130
      %p134 = scmp.eq.s32.totalorder %s26, 0
      %p135 = por %p133, %p134
      %p136 = scmp.ne.s32.totalorder %s128, %s130
      %p137 = scmp.eq.s32.totalorder %s31, 1
      %p138 = por %p136, %p137
      %p139 = scmp.ne.s32.totalorder %s130, %s131
      %p140 = scmp.eq.s32.totalorder %s31, 0
      %p141 = por %p139, %p140
      %p142 = scmp.ne.s32.totalorder %s130, %s131
      %p143 = scmp.eq.s32.totalorder %s32, 1
      %p144 = por %p142, %p143
      %p146 = scmp.ne.s32.totalorder %s131, %s145
      %p147 = scmp.eq.s32.totalorder %s32, 0
      %p148 = por %p146, %p147
      %s150 = sadd.s32 %s149, 1
      %p153 = scmp.eq.s32.totalorder %s26, 1
      %p154 = scmp.ne.s32.totalorder %s149, %s151
      %p155 = scmp.eq.s32.totalorder %s26, 0
      %p156 = por %p154, %p155
      %p157 = scmp.ne.s32.totalorder %s149, %s151
      %p158 = scmp.eq.s32.totalorder %s31, 1
      %p159 = por %p157, %p158
      %p160 = scmp.ne.s32.totalorder %s151, %s152
      %p161 = scmp.eq.s32.totalorder %s31, 0
      %p162 = por %p160, %p161
      %p163 = scmp.ne.s32.totalorder %s151, %s152
      %p164 = scmp.eq.s32.totalorder %s32, 1
      %p165 = por %p163, %p164
      %p167 = scmp.ne.s32.totalorder %s152, %s166
      %p168 = scmp.eq.s32.totalorder %s32, 0
      %p169 = por %p167, %p168
      %s171 = sadd.s32 %s170, 1
      %p174 = scmp.eq.s32.totalorder %s26, 1
      %p175 = scmp.ne.s32.totalorder %s170, %s172
      %p176 = scmp.eq.s32.totalorder %s26, 0
      %p177 = por %p175, %p176
      %p178 = scmp.ne.s32.totalorder %s170, %s172
      %p179 = scmp.eq.s32.totalorder %s31, 1
      %p180 = por %p178, %p179
      %p181 = scmp.ne.s32.totalorder %s172, %s173
      %p182 = scmp.eq.s32.totalorder %s31, 0
      %p183 = por %p181, %p182
      %p184 = scmp.ne.s32.totalorder %s172, %s173
      %p185 = scmp.eq.s32.totalorder %s32, 1
      %p186 = por %p184, %p185
      %p188 = scmp.ne.s32.totalorder %s173, %s187
      %p189 = scmp.eq.s32.totalorder %s32, 0
      %p190 = por %p188, %p189
      %s192 = sadd.s32 %s191, 1
      %p195 = scmp.eq.s32.totalorder %s26, 1
      %p196 = scmp.ne.s32.totalorder %s191, %s193
      %p197 = scmp.eq.s32.totalorder %s26, 0
      %p198 = por %p196, %p197
      %p199 = scmp.ne.s32.totalorder %s191, %s193
      %p200 = scmp.eq.s32.totalorder %s31, 1
      %p201 = por %p199, %p200
      %p202 = scmp.ne.s32.totalorder %s193, %s194
      %p203 = scmp.eq.s32.totalorder %s31, 0
      %p204 = por %p202, %p203
      %p205 = scmp.ne.s32.totalorder %s193, %s194
      %p206 = scmp.eq.s32.totalorder %s32, 1
      %p207 = por %p205, %p206
      %p209 = scmp.ne.s32.totalorder %s194, %s208
      %p210 = scmp.eq.s32.totalorder %s32, 0
      %p211 = por %p209, %p210
      %s213 = sadd.s32 %s212, 1
      %p216 = scmp.eq.s32.totalorder %s26, 1
      %p217 = scmp.ne.s32.totalorder %s212, %s214
      %p218 = scmp.eq.s32.totalorder %s26, 0
      %p219 = por %p217, %p218
      %p220 = scmp.ne.s32.totalorder %s212, %s214
      %p221 = scmp.eq.s32.totalorder %s31, 1
      %p222 = por %p220, %p221
      %p223 = scmp.ne.s32.totalorder %s214, %s215
      %p224 = scmp.eq.s32.totalorder %s31, 0
      %p225 = por %p223, %p224
      %p226 = scmp.ne.s32.totalorder %s214, %s215
      %p227 = scmp.eq.s32.totalorder %s32, 1
      %p228 = por %p226, %p227
      %p230 = scmp.ne.s32.totalorder %s215, %s229
      %p231 = scmp.eq.s32.totalorder %s32, 0
      %p232 = por %p230, %p231
      %s234 = sadd.s32 %s233, 1
      %p237 = scmp.eq.s32.totalorder %s26, 1
      %p238 = scmp.ne.s32.totalorder %s233, %s235
      %p239 = scmp.eq.s32.totalorder %s26, 0
      %p240 = por %p238, %p239
      %p241 = scmp.ne.s32.totalorder %s233, %s235
      %p242 = scmp.eq.s32.totalorder %s31, 1
      %p243 = por %p241, %p242
      %p244 = scmp.ne.s32.totalorder %s235, %s236
      %p245 = scmp.eq.s32.totalorder %s31, 0
      %p246 = por %p244, %p245
      %p247 = scmp.ne.s32.totalorder %s235, %s236
      %p248 = scmp.eq.s32.totalorder %s32, 1
      %p249 = por %p247, %p248
      %p251 = scmp.ne.s32.totalorder %s236, %s250
      %p252 = scmp.eq.s32.totalorder %s32, 0
      %p253 = por %p251, %p252
      %s254 = ssub.s32 %s26, %s33
      %p255 = scmp.eq.s32.totalorder %s254, 0
      %s257 = sadd.s32 %s256, 1
      %s258 = scalar_select %p255, %s256, %s257
      %p261 = pneg %p255
      %p262 = scmp.eq.s32.totalorder %s26, 1
      %p263 = por %p261, %p262
      %p264 = scmp.ne.s32.totalorder %s256, %s259
      %p265 = scmp.eq.s32.totalorder %s26, 0
      %p266 = por %p264, %p265
      %p267 = scmp.ne.s32.totalorder %s256, %s259
      %p268 = scmp.eq.s32.totalorder %s31, 1
      %p269 = por %p267, %p268
      %p270 = scmp.ne.s32.totalorder %s259, %s260
      %p271 = scmp.eq.s32.totalorder %s31, 0
      %p272 = por %p270, %p271
      %p273 = scmp.ne.s32.totalorder %s259, %s260
      %p274 = scmp.eq.s32.totalorder %s32, 1
      %p275 = por %p273, %p274
      %p277 = scmp.ne.s32.totalorder %s260, %s276
      %p278 = scmp.eq.s32.totalorder %s32, 0
      %p279 = por %p277, %p278
      %p280 = scmp.le.s32.totalorder 1, %s26
      %p281 = scmp.lt.s32.totalorder %s26, 3
      %p282 = pnand %p280, %p281
      %p283 = pneg %p282
      // Predicated region
      $region9: #{tpu_custom_call.1} parent=5 // pred_check
        _
      $region10: #{tpu_custom_call.1} parent=5 // pred_check_branch
        %285 = sbr.rel (%p282) target = $region12
      $region11: #{tpu_custom_call.1} parent=5 // pred_region
        %s286 = ssub.s32 %s26, 1
        // Predicated region
        $region13: #{tpu_custom_call.1} parent=11 // pred_check
          %p287 = pneg %p99
        $region14: #{tpu_custom_call.1} parent=11 // pred_check_branch
          %289 = sbr.rel (%p287) target = $region16
        $region15: #{tpu_custom_call.1} parent=11 // pred_region
          _
        $region16: #{tpu_custom_call.1} parent=11 // pred_fallthru
          _
        // Predicated region
        $region17: #{tpu_custom_call.1} parent=11 // pred_check
          %p290 = pneg %p120
        $region18: #{tpu_custom_call.1} parent=11 // pred_check_branch
          %292 = sbr.rel (%p290) target = $region20
        $region19: #{tpu_custom_call.1} parent=11 // pred_region
          _
        $region20: #{tpu_custom_call.1} parent=11 // pred_fallthru
          _
        // Predicated region
        $region21: #{tpu_custom_call.1} parent=11 // pred_check
          %p293 = pneg %p141
        $region22: #{tpu_custom_call.1} parent=11 // pred_check_branch
          %295 = sbr.rel (%p293) target = $region24
        $region23: #{tpu_custom_call.1} parent=11 // pred_region
          _
        $region24: #{tpu_custom_call.1} parent=11 // pred_fallthru
          _
        // Predicated region
        $region25: #{tpu_custom_call.1} parent=11 // pred_check
          %p296 = pneg %p162
        $region26: #{tpu_custom_call.1} parent=11 // pred_check_branch
          %298 = sbr.rel (%p296) target = $region28
        $region27: #{tpu_custom_call.1} parent=11 // pred_region
          _
        $region28: #{tpu_custom_call.1} parent=11 // pred_fallthru
          _
        // Predicated region
        $region29: #{tpu_custom_call.1} parent=11 // pred_check
          %p299 = pneg %p183
        $region30: #{tpu_custom_call.1} parent=11 // pred_check_branch
          %301 = sbr.rel (%p299) target = $region32
        $region31: #{tpu_custom_call.1} parent=11 // pred_region
          _
        $region32: #{tpu_custom_call.1} parent=11 // pred_fallthru
          _
        // Predicated region
        $region33: #{tpu_custom_call.1} parent=11 // pred_check
          %p302 = pneg %p204
        $region34: #{tpu_custom_call.1} parent=11 // pred_check_branch
          %304 = sbr.rel (%p302) target = $region36
        $region35: #{tpu_custom_call.1} parent=11 // pred_region
          _
        $region36: #{tpu_custom_call.1} parent=11 // pred_fallthru
          _
        // Predicated region
        $region37: #{tpu_custom_call.1} parent=11 // pred_check
          %p305 = pneg %p225
        $region38: #{tpu_custom_call.1} parent=11 // pred_check_branch
          %307 = sbr.rel (%p305) target = $region40
        $region39: #{tpu_custom_call.1} parent=11 // pred_region
          _
        $region40: #{tpu_custom_call.1} parent=11 // pred_fallthru
          _
        // Predicated region
        $region41: #{tpu_custom_call.1} parent=11 // pred_check
          %p308 = pneg %p246
        $region42: #{tpu_custom_call.1} parent=11 // pred_check_branch
          %310 = sbr.rel (%p308) target = $region44
        $region43: #{tpu_custom_call.1} parent=11 // pred_region
          _
        $region44: #{tpu_custom_call.1} parent=11 // pred_fallthru
          _
      $region12: #{tpu_custom_call.1} parent=5 // pred_fallthru
        _
      %p311 = scmp.lt.s32.totalorder %s26, 2
      // Predicated region
      $region45: #{tpu_custom_call.1} parent=5 // pred_check
        %p312 = pneg %p311
      $region46: #{tpu_custom_call.1} parent=5 // pred_check_branch
        %314 = sbr.rel (%p312) target = $region48
      $region47: #{tpu_custom_call.1} parent=5 // pred_region
        // Predicated region
        $region49: #{tpu_custom_call.1} parent=47 // pred_check
          %p315 = pneg %p46
        $region50: #{tpu_custom_call.1} parent=47 // pred_check_branch
          %317 = sbr.rel (%p315) target = $region52
        $region51: #{tpu_custom_call.1} parent=47 // pred_region
          %s318 = sand.u32 %s36, 1
          %s319 = scalar_lea.sflag [#allocation7], %s318
          %s320 = sand.u32 %s36, 1
          %s321 = smul.addr %s320, 64
          %s322 = scalar_lea.vmem [#allocation6], %s321
          %s324 = ssub.s32 1024, 1024
          %325 = vsyncadd %s319, %s324
          %s326 = smul.addr %s26, 8
          %s327 = smul.addr %s326, 128
          %s328 = scalar_lea.hbm %s0, %s327
          %s329 = sshll.u32 %s322, 4
          %s330 = int_to_ptr.vmem [resolvable:$true] %s329
          %335 = dma.hbm_to_vmem [thread:$0]  %s328, 1024, %s330, %s319, 128, 128, 8
        $region52: #{tpu_custom_call.1} parent=47 // pred_fallthru
          _
        // Predicated region
        $region53: #{tpu_custom_call.1} parent=47 // pred_check
          %p336 = pneg %p72
        $region54: #{tpu_custom_call.1} parent=47 // pred_check_branch
          %338 = sbr.rel (%p336) target = $region56
        $region55: #{tpu_custom_call.1} parent=47 // pred_region
          %s339 = sand.u32 %s62, 1
          %s340 = scalar_lea.sflag [#allocation10], %s339
          %s341 = sand.u32 %s62, 1
          %s342 = smul.addr %s341, 64
          %s343 = scalar_lea.vmem [#allocation9], %s342
          %s345 = ssub.s32 1024, 1024
          %346 = vsyncadd %s340, %s345
          %s347 = smul.addr %s26, 8
          %s348 = smul.addr %s347, 128
          %s349 = scalar_lea.hbm %s1, %s348
          %s350 = sshll.u32 %s343, 4
          %s351 = int_to_ptr.vmem [resolvable:$true] %s350
          %356 = dma.hbm_to_vmem [thread:$0]  %s349, 1024, %s351, %s340, 128, 128, 8
        $region56: #{tpu_custom_call.1} parent=47 // pred_fallthru
          _
      $region48: #{tpu_custom_call.1} parent=5 // pred_fallthru
        _
      %p357 = scmp.le.s32.totalorder 1, %s26
      %p358 = scmp.lt.s32.totalorder %s26, 3
      %p359 = pnand %p357, %p358
      %p360 = pneg %p359
      // Predicated region
      $region57: #{tpu_custom_call.1} parent=5 // pred_check
        _
      $region58: #{tpu_custom_call.1} parent=5 // pred_check_branch
        %362 = sbr.rel (%p359) target = $region60
      $region59: #{tpu_custom_call.1} parent=5 // pred_region
        %s363 = ssub.s32 %s26, 1
        %s364 = sand.u32 %s39, 1
        %s365 = scalar_lea.sflag [#allocation7], %s364
        %s366 = sand.u32 %s39, 1
        %s367 = smul.addr %s366, 64
        %s368 = scalar_lea.vmem [#allocation6], %s367
        // Predicated region
        $region61: #{tpu_custom_call.1} parent=59 // pred_check
          %p369 = pneg %p52
        $region62: #{tpu_custom_call.1} parent=59 // pred_check_branch
          %371 = sbr.rel (%p369) target = $region64
        $region63: #{tpu_custom_call.1} parent=59 // pred_region
          %372 = dma.done %s365, 1024
        $region64: #{tpu_custom_call.1} parent=59 // pred_fallthru
          _
        %s373 = sand.u32 %s65, 1
        %s374 = scalar_lea.sflag [#allocation10], %s373
        %s375 = sand.u32 %s65, 1
        %s376 = smul.addr %s375, 64
        %s377 = scalar_lea.vmem [#allocation9], %s376
        // Predicated region
        $region65: #{tpu_custom_call.1} parent=59 // pred_check
          %p378 = pneg %p78
        $region66: #{tpu_custom_call.1} parent=59 // pred_check_branch
          %380 = sbr.rel (%p378) target = $region68
        $region67: #{tpu_custom_call.1} parent=59 // pred_region
          %381 = dma.done %s374, 1024
        $region68: #{tpu_custom_call.1} parent=59 // pred_fallthru
          _
        %s382 = sand.u32 %s39, 1
        %s383 = scalar_lea.sflag [#allocation7], %s382
        %s384 = sand.u32 %s39, 1
        %s385 = smul.addr %s384, 64
        %s386 = scalar_lea.vmem [#allocation6], %s385
        %p387 = pneg %p52
        %p388 = pneg %p49
        %s389 = sand.u32 %s65, 1
        %s390 = scalar_lea.sflag [#allocation10], %s389
        %s391 = sand.u32 %s65, 1
        %s392 = smul.addr %s391, 64
        %s393 = scalar_lea.vmem [#allocation9], %s392
        %p394 = pneg %p78
        %p395 = pneg %p75
        %p396 = pneg %p99
        %p397 = pneg %p96
        %p398 = pneg %p120
        %p399 = pneg %p117
        %p400 = pneg %p141
        %p401 = pneg %p138
        %p402 = pneg %p162
        %p403 = pneg %p159
        %p404 = pneg %p183
        %p405 = pneg %p180
        %p406 = pneg %p204
        %p407 = pneg %p201
        %p408 = pneg %p225
        %p409 = pneg %p222
        %p410 = pneg %p246
        %p411 = pneg %p243
        %p412 = pneg %p272
        %p413 = pneg %p269
        %s414 = sand.u32 %s259, 1
        %s415 = scalar_lea.sflag [#allocation8], %s414
        %s416 = sand.u32 %s259, 1
        %s417 = smul.addr %s416, 64
        %s418 = scalar_lea.vmem [#allocation11], %s417
        %v419 = vld [vmem:[%s368] sm:$0xff]
        %v420 = vld [vmem:[%s368 + $0x8] sm:$0xff]
        %v421 = vld [vmem:[%s368 + $0x10] sm:$0xff]
        %v422 = vld [vmem:[%s368 + $0x18] sm:$0xff]
        %v423 = vld [vmem:[%s368 + $0x20] sm:$0xff]
        %v424 = vld [vmem:[%s368 + $0x28] sm:$0xff]
        %v425 = vld [vmem:[%s368 + $0x30] sm:$0xff]
        %v426 = vld [vmem:[%s368 + $0x38] sm:$0xff]
        %v427 = vld [vmem:[%s3] sm:$0xff]
        %v428 = vld [vmem:[%s3 + $0x8] sm:$0xff]
        %s429 = scalar_lea.vmem %s3, 16
        %v430 = vld [vmem:[%s429] sm:$0xff]
        %v431 = vld [vmem:[%s429 + $0x8] sm:$0xff]
        %vm432 = vcmask 130048
        %v434 = vsel %vm432, %v419, 0
        %v437 = vsel %vm432, %v420, 0
        %v440 = vsel %vm432, %v421, 0
        %v443 = vsel %vm432, %v422, 0
        %v446 = vsel %vm432, %v423, 0
        %v449 = vsel %vm432, %v424, 0
        %v452 = vsel %vm432, %v425, 0
        %v455 = vsel %vm432, %v426, 0
        %457 = vmatprep.subr.mxu0 0.0
        %458 = vmatpush1.msra.mxu0 %v427
        %459 = vmatprep.subr.mxu0 0.0
        %460 = vmatpush1.msra.mxu0 %v428
        %461 = vmatprep.subr.mxu0 0.0
        %462 = vmatpush1.msra.mxu0 0.0
        %463 = vmatprep.subr.mxu0 0.0
        %464 = vmatpush1.msra.mxu0 0.0
        %465 = vmatprep.subr.mxu0 0.0
        %466 = vmatpush1.msra.mxu0 0.0
        %467 = vmatprep.subr.mxu0 0.0
        %468 = vmatpush1.msra.mxu0 0.0
        %469 = vmatprep.subr.mxu0 0.0
        %470 = vmatpush1.msra.mxu0 0.0
        %471 = vmatprep.subr.mxu0 0.0
        %472 = vmatpush1.msra.mxu0 0.0
        %473 = vmatprep.subr.mxu0 0.0
        %474 = vmatpush1.msra.mxu0 0.0
        %475 = vmatprep.subr.mxu0 0.0
        %476 = vmatpush1.msra.mxu0 0.0
        %477 = vmatprep.subr.mxu0 0.0
        %478 = vmatpush1.msra.mxu0 0.0
        %479 = vmatprep.subr.mxu0 0.0
        %480 = vmatpush1.msra.mxu0 0.0
        %481 = vmatprep.subr.mxu0 0.0
        %482 = vmatpush1.msra.mxu0 0.0
        %483 = vmatprep.subr.mxu0 0.0
        %484 = vmatpush1.msra.mxu0 0.0
        %485 = vmatprep.subr.mxu0 0.0
        %486 = vmatpush1.msra.mxu0 0.0
        %487 = vmatprep.subr.mxu0 0.0
        %488 = vmatpush1.msra.mxu0 0.0
        %489 = vmatprep.subr.mxu0 0.0
        %490 = vmatpush1.msra.mxu0 0.0
        %491 = vmatprep.subr.mxu0 0.0
        %492 = vmatpush1.msra.mxu0 0.0
        %493 = vmatprep.subr.mxu0 0.0
        %494 = vmatpush1.msra.mxu0 0.0
        %495 = vmatprep.subr.mxu0 0.0
        %496 = vmatpush1.msra.mxu0 0.0
        %497 = vmatprep.subr.mxu0 0.0
        %498 = vmatpush1.msra.mxu0 0.0
        %499 = vmatprep.subr.mxu0 0.0
        %500 = vmatpush1.msra.mxu0 0.0
        %501 = vmatprep.subr.mxu0 0.0
        %502 = vmatpush1.msra.mxu0 0.0
        %503 = vmatprep.subr.mxu0 0.0
        %504 = vmatpush1.msra.mxu0 0.0
        %505 = vmatprep.subr.mxu0 0.0
        %506 = vmatpush1.msra.mxu0 0.0
        %507 = vmatprep.subr.mxu0 0.0
        %508 = vmatpush1.msra.mxu0 0.0
        %509 = vmatprep.subr.mxu0 0.0
        %510 = vmatpush1.msra.mxu0 0.0
        %511 = vmatprep.subr.mxu0 0.0
        %512 = vmatpush1.msra.mxu0 0.0
        %513 = vmatprep.subr.mxu0 0.0
        %514 = vmatpush1.msra.mxu0 0.0
        %515 = vmatprep.subr.mxu0 0.0
        %516 = vmatpush1.msra.mxu0 0.0
        %517 = vmatprep.subr.mxu0 0.0
        %518 = vmatpush1.msra.mxu0 0.0
        %519 = vmatprep.subr.mxu0 0.0
        %520 = vmatpush1.msra.mxu0 0.0
        %521 = vmatprep.mubr.f32.mxu0 0.0
        %522 = vmatmul.mubr.f32.gmra.mrb[0].mxu0 %v434
        %v523 = vpop.f32.mrb[0].mxu0
        %v524 = vadd.f32 0.0, %v523
        %v525 = vpop.f32.mrb[0].mxu0
        %526 = vmatprep.mubr.f32.mxu0 0.0
        %527 = vmatmul.mubr.f32.gmra.mrb[0].mxu0 %v437
        %v528 = vpop.f32.mrb[0].mxu0
        %v529 = vadd.f32 0.0, %v528
        %v530 = vpop.f32.mrb[0].mxu0
        %531 = vmatprep.mubr.f32.mxu0 0.0
        %532 = vmatmul.mubr.f32.gmra.mrb[0].mxu0 %v440
        %v533 = vpop.f32.mrb[0].mxu0
        %v534 = vadd.f32 0.0, %v533
        %v535 = vpop.f32.mrb[0].mxu0
        %536 = vmatprep.mubr.f32.mxu0 0.0
        %537 = vmatmul.mubr.f32.gmra.mrb[0].mxu0 %v443
        %v538 = vpop.f32.mrb[0].mxu0
        %v539 = vadd.f32 0.0, %v538
        %v540 = vpop.f32.mrb[0].mxu0
        %541 = vmatprep.mubr.f32.mxu0 0.0
        %542 = vmatmul.mubr.f32.gmra.mrb[0].mxu0 %v446
        %v543 = vpop.f32.mrb[0].mxu0
        %v544 = vadd.f32 0.0, %v543
        %v545 = vpop.f32.mrb[0].mxu0
        %546 = vmatprep.mubr.f32.mxu0 0.0
        %547 = vmatmul.mubr.f32.gmra.mrb[0].mxu0 %v449
        %v548 = vpop.f32.mrb[0].mxu0
        %v549 = vadd.f32 0.0, %v548
        %v550 = vpop.f32.mrb[0].mxu0
        %551 = vmatprep.mubr.f32.mxu0 0.0
        %552 = vmatmul.mubr.f32.gmra.mrb[0].mxu0 %v452
        %v553 = vpop.f32.mrb[0].mxu0
        %v554 = vadd.f32 0.0, %v553
        %v555 = vpop.f32.mrb[0].mxu0
        %556 = vmatprep.mubr.f32.mxu0 0.0
        %557 = vmatmul.mubr.f32.gmra.mrb[0].mxu0 %v455
        %v558 = vpop.f32.mrb[0].mxu0
        %v559 = vadd.f32 0.0, %v558
        %v560 = vpop.f32.mrb[0].mxu0
        %561 = vdwg.mxu0
        %vm562 = vcmask 64512
        %563 = vst.msk [vmem:[#allocation2] sm:$0xff] %vm562, %v524
        %564 = vst.msk [vmem:[#allocation2 + $0x8] sm:$0xff] %vm562, %v529
        %565 = vst.msk [vmem:[#allocation2 + $0x10] sm:$0xff] %vm562, %v534
        %566 = vst.msk [vmem:[#allocation2 + $0x18] sm:$0xff] %vm562, %v539
        %567 = vst.msk [vmem:[#allocation2 + $0x20] sm:$0xff] %vm562, %v544
        %568 = vst.msk [vmem:[#allocation2 + $0x28] sm:$0xff] %vm562, %v549
        %569 = vst.msk [vmem:[#allocation2 + $0x30] sm:$0xff] %vm562, %v554
        %570 = vst.msk [vmem:[#allocation2 + $0x38] sm:$0xff] %vm562, %v559
        %571 = vmatprep.subr.mxu0 0.0
        %572 = vmatpush1.msra.mxu0 %v430
        %573 = vmatprep.subr.mxu0 0.0
        %574 = vmatpush1.msra.mxu0 %v431
        %575 = vmatprep.subr.mxu0 0.0
        %576 = vmatpush1.msra.mxu0 0.0
        %577 = vmatprep.subr.mxu0 0.0
        %578 = vmatpush1.msra.mxu0 0.0
        %579 = vmatprep.subr.mxu0 0.0
        %580 = vmatpush1.msra.mxu0 0.0
        %581 = vmatprep.subr.mxu0 0.0
        %582 = vmatpush1.msra.mxu0 0.0
        %583 = vmatprep.subr.mxu0 0.0
        %584 = vmatpush1.msra.mxu0 0.0
        %585 = vmatprep.subr.mxu0 0.0
        %586 = vmatpush1.msra.mxu0 0.0
        %587 = vmatprep.subr.mxu0 0.0
        %588 = vmatpush1.msra.mxu0 0.0
        %589 = vmatprep.subr.mxu0 0.0
        %590 = vmatpush1.msra.mxu0 0.0
        %591 = vmatprep.subr.mxu0 0.0
        %592 = vmatpush1.msra.mxu0 0.0
        %593 = vmatprep.subr.mxu0 0.0
        %594 = vmatpush1.msra.mxu0 0.0
        %595 = vmatprep.subr.mxu0 0.0
        %596 = vmatpush1.msra.mxu0 0.0
        %597 = vmatprep.subr.mxu0 0.0
        %598 = vmatpush1.msra.mxu0 0.0
        %599 = vmatprep.subr.mxu0 0.0
        %600 = vmatpush1.msra.mxu0 0.0
        %601 = vmatprep.subr.mxu0 0.0
        %602 = vmatpush1.msra.mxu0 0.0
        %603 = vmatprep.subr.mxu0 0.0
        %604 = vmatpush1.msra.mxu0 0.0
        %605 = vmatprep.subr.mxu0 0.0
        %606 = vmatpush1.msra.mxu0 0.0
        %607 = vmatprep.subr.mxu0 0.0
        %608 = vmatpush1.msra.mxu0 0.0
        %609 = vmatprep.subr.mxu0 0.0
        %610 = vmatpush1.msra.mxu0 0.0
        %611 = vmatprep.subr.mxu0 0.0
        %612 = vmatpush1.msra.mxu0 0.0
        %613 = vmatprep.subr.mxu0 0.0
        %614 = vmatpush1.msra.mxu0 0.0
        %615 = vmatprep.subr.mxu0 0.0
        %616 = vmatpush1.msra.mxu0 0.0
        %617 = vmatprep.subr.mxu0 0.0
        %618 = vmatpush1.msra.mxu0 0.0
        %619 = vmatprep.subr.mxu0 0.0
        %620 = vmatpush1.msra.mxu0 0.0
        %621 = vmatprep.subr.mxu0 0.0
        %622 = vmatpush1.msra.mxu0 0.0
        %623 = vmatprep.subr.mxu0 0.0
        %624 = vmatpush1.msra.mxu0 0.0
        %625 = vmatprep.subr.mxu0 0.0
        %626 = vmatpush1.msra.mxu0 0.0
        %627 = vmatprep.subr.mxu0 0.0
        %628 = vmatpush1.msra.mxu0 0.0
        %629 = vmatprep.subr.mxu0 0.0
        %630 = vmatpush1.msra.mxu0 0.0
        %631 = vmatprep.subr.mxu0 0.0
        %632 = vmatpush1.msra.mxu0 0.0
        %633 = vmatprep.subr.mxu0 0.0
        %634 = vmatpush1.msra.mxu0 0.0
        %635 = vmatprep.mubr.f32.mxu0 0.0
        %636 = vmatmul.mubr.f32.gmra.mrb[0].mxu0 %v434
        %v637 = vpop.f32.mrb[0].mxu0
        %v638 = vadd.f32 0.0, %v637
        %v639 = vpop.f32.mrb[0].mxu0
        %640 = vmatprep.mubr.f32.mxu0 0.0
        %641 = vmatmul.mubr.f32.gmra.mrb[0].mxu0 %v437
        %v642 = vpop.f32.mrb[0].mxu0
        %v643 = vadd.f32 0.0, %v642
        %v644 = vpop.f32.mrb[0].mxu0
        %645 = vmatprep.mubr.f32.mxu0 0.0
        %646 = vmatmul.mubr.f32.gmra.mrb[0].mxu0 %v440
        %v647 = vpop.f32.mrb[0].mxu0
        %v648 = vadd.f32 0.0, %v647
        %v649 = vpop.f32.mrb[0].mxu0
        %650 = vmatprep.mubr.f32.mxu0 0.0
        %651 = vmatmul.mubr.f32.gmra.mrb[0].mxu0 %v443
        %v652 = vpop.f32.mrb[0].mxu0
        %v653 = vadd.f32 0.0, %v652
        %v654 = vpop.f32.mrb[0].mxu0
        %655 = vmatprep.mubr.f32.mxu0 0.0
        %656 = vmatmul.mubr.f32.gmra.mrb[0].mxu0 %v446
        %v657 = vpop.f32.mrb[0].mxu0
        %v658 = vadd.f32 0.0, %v657
        %v659 = vpop.f32.mrb[0].mxu0
        %660 = vmatprep.mubr.f32.mxu0 0.0
        %661 = vmatmul.mubr.f32.gmra.mrb[0].mxu0 %v449
        %v662 = vpop.f32.mrb[0].mxu0
        %v663 = vadd.f32 0.0, %v662
        %v664 = vpop.f32.mrb[0].mxu0
        %665 = vmatprep.mubr.f32.mxu0 0.0
        %666 = vmatmul.mubr.f32.gmra.mrb[0].mxu0 %v452
        %v667 = vpop.f32.mrb[0].mxu0
        %v668 = vadd.f32 0.0, %v667
        %v669 = vpop.f32.mrb[0].mxu0
        %670 = vmatprep.mubr.f32.mxu0 0.0
        %671 = vmatmul.mubr.f32.gmra.mrb[0].mxu0 %v455
        %v672 = vpop.f32.mrb[0].mxu0
        %v673 = vadd.f32 0.0, %v672
        %v674 = vpop.f32.mrb[0].mxu0
        %675 = vdwg.mxu0
        %676 = vst.msk [vmem:[#allocation3] sm:$0xff] %vm562, %v638
        %677 = vst.msk [vmem:[#allocation3 + $0x8] sm:$0xff] %vm562, %v643
        %678 = vst.msk [vmem:[#allocation3 + $0x10] sm:$0xff] %vm562, %v648
        %679 = vst.msk [vmem:[#allocation3 + $0x18] sm:$0xff] %vm562, %v653
        %680 = vst.msk [vmem:[#allocation3 + $0x20] sm:$0xff] %vm562, %v658
        %681 = vst.msk [vmem:[#allocation3 + $0x28] sm:$0xff] %vm562, %v663
        %682 = vst.msk [vmem:[#allocation3 + $0x30] sm:$0xff] %vm562, %v668
        %683 = vst.msk [vmem:[#allocation3 + $0x38] sm:$0xff] %vm562, %v673
        %v684 = vld [vmem:[%s2] sm:$0xff]
        %s685 = scalar_lea.vmem %s2, 8
        %v686 = vld [vmem:[%s685] sm:$0xff]
        %v687 = vld [vmem:[%s4] sm:$0xff]
        %v688 = vld [vmem:[%s5] sm:$0xff]
        %v689 = vld [vmem:[%s6] sm:$0xff]
        %s690 = sld [smem:[#allocation5]]
        %v691 = vld [vmem:[#allocation2] sm:$0x3]
        %v692 = vld [vmem:[#allocation2 + $0x10] sm:$0x3]
        %v693 = vld [vmem:[#allocation2 + $0x20] sm:$0x3]
        %v694 = vld [vmem:[#allocation2 + $0x30] sm:$0x3]
        %v695 = vld [vmem:[#allocation3] sm:$0x3]
        %v696 = vld [vmem:[#allocation3 + $0x10] sm:$0x3]
        %v697 = vld [vmem:[#allocation3 + $0x20] sm:$0x3]
        %v698 = vld [vmem:[#allocation3 + $0x30] sm:$0x3]
        %v703 = vcombine.low %v695, %v696
        %v704 = vcombine.low %v697, %v698
        %v706 = vunpack.c.l.s4 1983009808
        %v707 = vunpack.c.0.s8 %v706
        %v708 = vlaneseq
        %v709 = vshrl.u32 %v708, 7
        %v710 = vsub.s32 %v707, %v709
        %v711 = vrot.slane %v703, %v710
        %v713 = vunpack.c.l.s4 1983009808
        %v714 = vunpack.c.0.s8 %v713
        %v715 = vlaneseq
        %v716 = vshrl.u32 %v715, 7
        %v717 = vsub.s32 %v714, %v716
        %v718 = vrot.slane %v704, %v717
        %v719 = vcombine.low %v711, %v718
        %v722 = vsel %vm562, %v686, 0
        %724 = vmatprep.subr.mxu0 0.0
        %725 = vmatpush1.msra.mxu0 %v719
        %726 = vmatprep.subr.mxu0 0.0
        %727 = vmatpush1.msra.mxu0 0.0
        %728 = vmatprep.subr.mxu0 0.0
        %729 = vmatpush1.msra.mxu0 0.0
        %730 = vmatprep.subr.mxu0 0.0
        %731 = vmatpush1.msra.mxu0 0.0
        %732 = vmatprep.subr.mxu0 0.0
        %733 = vmatpush1.msra.mxu0 0.0
        %734 = vmatprep.subr.mxu0 0.0
        %735 = vmatpush1.msra.mxu0 0.0
        %736 = vmatprep.subr.mxu0 0.0
        %737 = vmatpush1.msra.mxu0 0.0
        %738 = vmatprep.subr.mxu0 0.0
        %739 = vmatpush1.msra.mxu0 0.0
        %740 = vmatprep.subr.mxu0 0.0
        %741 = vmatpush1.msra.mxu0 0.0
        %742 = vmatprep.subr.mxu0 0.0
        %743 = vmatpush1.msra.mxu0 0.0
        %744 = vmatprep.subr.mxu0 0.0
        %745 = vmatpush1.msra.mxu0 0.0
        %746 = vmatprep.subr.mxu0 0.0
        %747 = vmatpush1.msra.mxu0 0.0
        %748 = vmatprep.subr.mxu0 0.0
        %749 = vmatpush1.msra.mxu0 0.0
        %750 = vmatprep.subr.mxu0 0.0
        %751 = vmatpush1.msra.mxu0 0.0
        %752 = vmatprep.subr.mxu0 0.0
        %753 = vmatpush1.msra.mxu0 0.0
        %754 = vmatprep.subr.mxu0 0.0
        %755 = vmatpush1.msra.mxu0 0.0
        %756 = vmatprep.subr.mxu0 0.0
        %757 = vmatpush1.msra.mxu0 0.0
        %758 = vmatprep.subr.mxu0 0.0
        %759 = vmatpush1.msra.mxu0 0.0
        %760 = vmatprep.subr.mxu0 0.0
        %761 = vmatpush1.msra.mxu0 0.0
        %762 = vmatprep.subr.mxu0 0.0
        %763 = vmatpush1.msra.mxu0 0.0
        %764 = vmatprep.subr.mxu0 0.0
        %765 = vmatpush1.msra.mxu0 0.0
        %766 = vmatprep.subr.mxu0 0.0
        %767 = vmatpush1.msra.mxu0 0.0
        %768 = vmatprep.subr.mxu0 0.0
        %769 = vmatpush1.msra.mxu0 0.0
        %770 = vmatprep.subr.mxu0 0.0
        %771 = vmatpush1.msra.mxu0 0.0
        %772 = vmatprep.subr.mxu0 0.0
        %773 = vmatpush1.msra.mxu0 0.0
        %774 = vmatprep.subr.mxu0 0.0
        %775 = vmatpush1.msra.mxu0 0.0
        %776 = vmatprep.subr.mxu0 0.0
        %777 = vmatpush1.msra.mxu0 0.0
        %778 = vmatprep.subr.mxu0 0.0
        %779 = vmatpush1.msra.mxu0 0.0
        %780 = vmatprep.subr.mxu0 0.0
        %781 = vmatpush1.msra.mxu0 0.0
        %782 = vmatprep.subr.mxu0 0.0
        %783 = vmatpush1.msra.mxu0 0.0
        %784 = vmatprep.subr.mxu0 0.0
        %785 = vmatpush1.msra.mxu0 0.0
        %786 = vmatprep.subr.mxu0 0.0
        %787 = vmatpush1.msra.mxu0 0.0
        %788 = vmatprep.mubr.f32.mxu0 0.0
        %789 = vmatmul.mubr.f32.gmra.mrb[0].mxu0 %v722
        %v790 = vpop.f32.mrb[0].mxu0
        %v791 = vadd.f32 0.0, %v790
        %v792 = vpop.f32.mrb[0].mxu0
        %793 = vdwg.mxu0
        %v798 = vcombine.low %v691, %v692
        %v799 = vcombine.low %v693, %v694
        %v801 = vunpack.c.l.s4 1983009808
        %v802 = vunpack.c.0.s8 %v801
        %v803 = vlaneseq
        %v804 = vshrl.u32 %v803, 7
        %v805 = vsub.s32 %v802, %v804
        %v806 = vrot.slane %v798, %v805
        %v808 = vunpack.c.l.s4 1983009808
        %v809 = vunpack.c.0.s8 %v808
        %v810 = vlaneseq
        %v811 = vshrl.u32 %v810, 7
        %v812 = vsub.s32 %v809, %v811
        %v813 = vrot.slane %v799, %v812
        %v814 = vcombine.low %v806, %v813
        %v817 = vsel %vm562, %v684, 0
        %819 = vmatprep.subr.mxu0 0.0
        %820 = vmatpush1.msra.mxu0 %v814
        %821 = vmatprep.subr.mxu0 0.0
        %822 = vmatpush1.msra.mxu0 0.0
        %823 = vmatprep.subr.mxu0 0.0
        %824 = vmatpush1.msra.mxu0 0.0
        %825 = vmatprep.subr.mxu0 0.0
        %826 = vmatpush1.msra.mxu0 0.0
        %827 = vmatprep.subr.mxu0 0.0
        %828 = vmatpush1.msra.mxu0 0.0
        %829 = vmatprep.subr.mxu0 0.0
        %830 = vmatpush1.msra.mxu0 0.0
        %831 = vmatprep.subr.mxu0 0.0
        %832 = vmatpush1.msra.mxu0 0.0
        %833 = vmatprep.subr.mxu0 0.0
        %834 = vmatpush1.msra.mxu0 0.0
        %835 = vmatprep.subr.mxu0 0.0
        %836 = vmatpush1.msra.mxu0 0.0
        %837 = vmatprep.subr.mxu0 0.0
        %838 = vmatpush1.msra.mxu0 0.0
        %839 = vmatprep.subr.mxu0 0.0
        %840 = vmatpush1.msra.mxu0 0.0
        %841 = vmatprep.subr.mxu0 0.0
        %842 = vmatpush1.msra.mxu0 0.0
        %843 = vmatprep.subr.mxu0 0.0
        %844 = vmatpush1.msra.mxu0 0.0
        %845 = vmatprep.subr.mxu0 0.0
        %846 = vmatpush1.msra.mxu0 0.0
        %847 = vmatprep.subr.mxu0 0.0
        %848 = vmatpush1.msra.mxu0 0.0
        %849 = vmatprep.subr.mxu0 0.0
        %850 = vmatpush1.msra.mxu0 0.0
        %851 = vmatprep.subr.mxu0 0.0
        %852 = vmatpush1.msra.mxu0 0.0
        %853 = vmatprep.subr.mxu0 0.0
        %854 = vmatpush1.msra.mxu0 0.0
        %855 = vmatprep.subr.mxu0 0.0
        %856 = vmatpush1.msra.mxu0 0.0
        %857 = vmatprep.subr.mxu0 0.0
        %858 = vmatpush1.msra.mxu0 0.0
        %859 = vmatprep.subr.mxu0 0.0
        %860 = vmatpush1.msra.mxu0 0.0
        %861 = vmatprep.subr.mxu0 0.0
        %862 = vmatpush1.msra.mxu0 0.0
        %863 = vmatprep.subr.mxu0 0.0
        %864 = vmatpush1.msra.mxu0 0.0
        %865 = vmatprep.subr.mxu0 0.0
        %866 = vmatpush1.msra.mxu0 0.0
        %867 = vmatprep.subr.mxu0 0.0
        %868 = vmatpush1.msra.mxu0 0.0
        %869 = vmatprep.subr.mxu0 0.0
        %870 = vmatpush1.msra.mxu0 0.0
        %871 = vmatprep.subr.mxu0 0.0
        %872 = vmatpush1.msra.mxu0 0.0
        %873 = vmatprep.subr.mxu0 0.0
        %874 = vmatpush1.msra.mxu0 0.0
        %875 = vmatprep.subr.mxu0 0.0
        %876 = vmatpush1.msra.mxu0 0.0
        %877 = vmatprep.subr.mxu0 0.0
        %878 = vmatpush1.msra.mxu0 0.0
        %879 = vmatprep.subr.mxu0 0.0
        %880 = vmatpush1.msra.mxu0 0.0
        %881 = vmatprep.subr.mxu0 0.0
        %882 = vmatpush1.msra.mxu0 0.0
        %883 = vmatprep.mubr.f32.mxu0 0.0
        %884 = vmatmul.mubr.f32.gmra.mrb[0].mxu0 %v817
        %v885 = vpop.f32.mrb[0].mxu0
        %v886 = vadd.f32 %v791, %v885
        %v887 = vpop.f32.mrb[0].mxu0
        %888 = vdwg.mxu0
        %v889 = vld [vmem:[%s377] sm:$0x1]
        %v890 = vld [vmem:[%s377 + $0x8] sm:$0x1]
        %v891 = vld [vmem:[%s377 + $0x10] sm:$0x1]
        %v892 = vld [vmem:[%s377 + $0x18] sm:$0x1]
        %v893 = vld [vmem:[%s377 + $0x20] sm:$0x1]
        %v894 = vld [vmem:[%s377 + $0x28] sm:$0x1]
        %v895 = vld [vmem:[%s377 + $0x30] sm:$0x1]
        %v896 = vld [vmem:[%s377 + $0x38] sm:$0x1]
        %v905 = vrot.slane %v890, 7
        %vm906 = vcmask 1041409
        %v907 = vsel %vm906, %v905, %v889
        %v908 = vrot.slane %v891, 6
        %vm909 = vcmask 1042434
        %v910 = vsel %vm909, %v908, %v907
        %v911 = vrot.slane %v892, 5
        %vm912 = vcmask 1043459
        %v913 = vsel %vm912, %v911, %v910
        %v914 = vrot.slane %v893, 4
        %vm915 = vcmask 1044484
        %v916 = vsel %vm915, %v914, %v913
        %v917 = vrot.slane %v894, 3
        %vm918 = vcmask 1045509
        %v919 = vsel %vm918, %v917, %v916
        %v920 = vrot.slane %v895, 2
        %vm921 = vcmask 1046534
        %v922 = vsel %vm921, %v920, %v919
        %v923 = vrot.slane %v896, 1
        %vm924 = vcmask 1047559
        %v925 = vsel %vm924, %v923, %v922
        %v928 = vsel %vm562, %v687, 0
        %930 = vmatprep.subr.mxu0 0.0
        %931 = vmatpush1.msra.mxu0 %v925
        %932 = vmatprep.subr.mxu0 0.0
        %933 = vmatpush1.msra.mxu0 0.0
        %934 = vmatprep.subr.mxu0 0.0
        %935 = vmatpush1.msra.mxu0 0.0
        %936 = vmatprep.subr.mxu0 0.0
        %937 = vmatpush1.msra.mxu0 0.0
        %938 = vmatprep.subr.mxu0 0.0
        %939 = vmatpush1.msra.mxu0 0.0
        %940 = vmatprep.subr.mxu0 0.0
        %941 = vmatpush1.msra.mxu0 0.0
        %942 = vmatprep.subr.mxu0 0.0
        %943 = vmatpush1.msra.mxu0 0.0
        %944 = vmatprep.subr.mxu0 0.0
        %945 = vmatpush1.msra.mxu0 0.0
        %946 = vmatprep.subr.mxu0 0.0
        %947 = vmatpush1.msra.mxu0 0.0
        %948 = vmatprep.subr.mxu0 0.0
        %949 = vmatpush1.msra.mxu0 0.0
        %950 = vmatprep.subr.mxu0 0.0
        %951 = vmatpush1.msra.mxu0 0.0
        %952 = vmatprep.subr.mxu0 0.0
        %953 = vmatpush1.msra.mxu0 0.0
        %954 = vmatprep.subr.mxu0 0.0
        %955 = vmatpush1.msra.mxu0 0.0
        %956 = vmatprep.subr.mxu0 0.0
        %957 = vmatpush1.msra.mxu0 0.0
        %958 = vmatprep.subr.mxu0 0.0
        %959 = vmatpush1.msra.mxu0 0.0
        %960 = vmatprep.subr.mxu0 0.0
        %961 = vmatpush1.msra.mxu0 0.0
        %962 = vmatprep.subr.mxu0 0.0
        %963 = vmatpush1.msra.mxu0 0.0
        %964 = vmatprep.subr.mxu0 0.0
        %965 = vmatpush1.msra.mxu0 0.0
        %966 = vmatprep.subr.mxu0 0.0
        %967 = vmatpush1.msra.mxu0 0.0
        %968 = vmatprep.subr.mxu0 0.0
        %969 = vmatpush1.msra.mxu0 0.0
        %970 = vmatprep.subr.mxu0 0.0
        %971 = vmatpush1.msra.mxu0 0.0
        %972 = vmatprep.subr.mxu0 0.0
        %973 = vmatpush1.msra.mxu0 0.0
        %974 = vmatprep.subr.mxu0 0.0
        %975 = vmatpush1.msra.mxu0 0.0
        %976 = vmatprep.subr.mxu0 0.0
        %977 = vmatpush1.msra.mxu0 0.0
        %978 = vmatprep.subr.mxu0 0.0
        %979 = vmatpush1.msra.mxu0 0.0
        %980 = vmatprep.subr.mxu0 0.0
        %981 = vmatpush1.msra.mxu0 0.0
        %982 = vmatprep.subr.mxu0 0.0
        %983 = vmatpush1.msra.mxu0 0.0
        %984 = vmatprep.subr.mxu0 0.0
        %985 = vmatpush1.msra.mxu0 0.0
        %986 = vmatprep.subr.mxu0 0.0
        %987 = vmatpush1.msra.mxu0 0.0
        %988 = vmatprep.subr.mxu0 0.0
        %989 = vmatpush1.msra.mxu0 0.0
        %990 = vmatprep.subr.mxu0 0.0
        %991 = vmatpush1.msra.mxu0 0.0
        %992 = vmatprep.subr.mxu0 0.0
        %993 = vmatpush1.msra.mxu0 0.0
        %994 = vmatprep.mubr.f32.mxu0 0.0
        %995 = vmatmul.mubr.f32.gmra.mrb[0].mxu0 %v928
        %v996 = vpop.f32.mrb[0].mxu0
        %v997 = vadd.f32 0.0, %v996
        %v998 = vpop.f32.mrb[0].mxu0
        %999 = vdwg.mxu0
        %v1000 = vadd.f32 %v886, %v997
        %1002 = vset.pattern.permute.xlu0 0
        %1003 = vperm.xlu0 %1002, %v688
        %v1004 = vpop.permute.xlu0 %1003
        %v1006 = vadd.f32 %v1000, %v1004
        %v1007 = vmax.f32 %v1006, 0.0
        %1009 = vset.pattern.permute.xlu0 0
        %1010 = vperm.xlu0 %1009, %v689
        %v1011 = vpop.permute.xlu0 %1010
        %v1013 = vmul.f32 %v1007, %v1011
        %v1014 = vsel %vm562, %v1013, 0.0
        %v1015 = vrot.slane %v1014, 4
        %v1016 = vadd.f32 %v1014, %v1015
        %v1017 = vrot.slane %v1016, 2
        %v1018 = vadd.f32 %v1016, %v1017
        %v1019 = vrot.slane %v1018, 1
        %v1020 = vadd.f32 %v1018, %v1019
        %v1021 = vstv %s690
        %v1022 = vadd.f32 %v1020, %v1021
        %v1023 = vxor.u32 %v1022, 2147483648
        %v1024 = vmul.f32 %v1023, 1.442695
        %v1025 = vpow.pop %v1024
        %v1026 = vadd.f32 %v1025, 1.0
        %v1027 = vrcp.pop %v1026
        %v1028 = vmul.f32 1.0, %v1027
        %vm1029 = vcmask 57344
        %1030 = vst.msk [vmem:[#allocation4] sm:$0x1] %vm1029, %v1028
        %v1031 = vld [vmem:[#allocation2 + $0x2] sm:$0x3]
        %v1032 = vld [vmem:[#allocation2 + $0x12] sm:$0x3]
        %v1033 = vld [vmem:[#allocation2 + $0x22] sm:$0x3]
        %v1034 = vld [vmem:[#allocation2 + $0x32] sm:$0x3]
        %v1035 = vld [vmem:[#allocation3 + $0x2] sm:$0x3]
        %v1036 = vld [vmem:[#allocation3 + $0x12] sm:$0x3]
        %v1037 = vld [vmem:[#allocation3 + $0x22] sm:$0x3]
        %v1038 = vld [vmem:[#allocation3 + $0x32] sm:$0x3]
        %v1043 = vcombine.low %v1035, %v1036
        %v1044 = vcombine.low %v1037, %v1038
        %v1046 = vunpack.c.l.s4 1983009808
        %v1047 = vunpack.c.0.s8 %v1046
        %v1048 = vlaneseq
        %v1049 = vshrl.u32 %v1048, 7
        %v1050 = vsub.s32 %v1047, %v1049
        %v1051 = vrot.slane %v1043, %v1050
        %v1053 = vunpack.c.l.s4 1983009808
        %v1054 = vunpack.c.0.s8 %v1053
        %v1055 = vlaneseq
        %v1056 = vshrl.u32 %v1055, 7
        %v1057 = vsub.s32 %v1054, %v1056
        %v1058 = vrot.slane %v1044, %v1057
        %v1059 = vcombine.low %v1051, %v1058
        %1061 = vmatprep.subr.mxu0 0.0
        %1062 = vmatpush1.msra.mxu0 %v1059
        %1063 = vmatprep.subr.mxu0 0.0
        %1064 = vmatpush1.msra.mxu0 0.0
        %1065 = vmatprep.subr.mxu0 0.0
        %1066 = vmatpush1.msra.mxu0 0.0
        %1067 = vmatprep.subr.mxu0 0.0
        %1068 = vmatpush1.msra.mxu0 0.0
        %1069 = vmatprep.subr.mxu0 0.0
        %1070 = vmatpush1.msra.mxu0 0.0
        %1071 = vmatprep.subr.mxu0 0.0
        %1072 = vmatpush1.msra.mxu0 0.0
        %1073 = vmatprep.subr.mxu0 0.0
        %1074 = vmatpush1.msra.mxu0 0.0
        %1075 = vmatprep.subr.mxu0 0.0
        %1076 = vmatpush1.msra.mxu0 0.0
        %1077 = vmatprep.subr.mxu0 0.0
        %1078 = vmatpush1.msra.mxu0 0.0
        %1079 = vmatprep.subr.mxu0 0.0
        %1080 = vmatpush1.msra.mxu0 0.0
        %1081 = vmatprep.subr.mxu0 0.0
        %1082 = vmatpush1.msra.mxu0 0.0
        %1083 = vmatprep.subr.mxu0 0.0
        %1084 = vmatpush1.msra.mxu0 0.0
        %1085 = vmatprep.subr.mxu0 0.0
        %1086 = vmatpush1.msra.mxu0 0.0
        %1087 = vmatprep.subr.mxu0 0.0
        %1088 = vmatpush1.msra.mxu0 0.0
        %1089 = vmatprep.subr.mxu0 0.0
        %1090 = vmatpush1.msra.mxu0 0.0
        %1091 = vmatprep.subr.mxu0 0.0
        %1092 = vmatpush1.msra.mxu0 0.0
        %1093 = vmatprep.subr.mxu0 0.0
        %1094 = vmatpush1.msra.mxu0 0.0
        %1095 = vmatprep.subr.mxu0 0.0
        %1096 = vmatpush1.msra.mxu0 0.0
        %1097 = vmatprep.subr.mxu0 0.0
        %1098 = vmatpush1.msra.mxu0 0.0
        %1099 = vmatprep.subr.mxu0 0.0
        %1100 = vmatpush1.msra.mxu0 0.0
        %1101 = vmatprep.subr.mxu0 0.0
        %1102 = vmatpush1.msra.mxu0 0.0
        %1103 = vmatprep.subr.mxu0 0.0
        %1104 = vmatpush1.msra.mxu0 0.0
        %1105 = vmatprep.subr.mxu0 0.0
        %1106 = vmatpush1.msra.mxu0 0.0
        %1107 = vmatprep.subr.mxu0 0.0
        %1108 = vmatpush1.msra.mxu0 0.0
        %1109 = vmatprep.subr.mxu0 0.0
        %1110 = vmatpush1.msra.mxu0 0.0
        %1111 = vmatprep.subr.mxu0 0.0
        %1112 = vmatpush1.msra.mxu0 0.0
        %1113 = vmatprep.subr.mxu0 0.0
        %1114 = vmatpush1.msra.mxu0 0.0
        %1115 = vmatprep.subr.mxu0 0.0
        %1116 = vmatpush1.msra.mxu0 0.0
        %1117 = vmatprep.subr.mxu0 0.0
        %1118 = vmatpush1.msra.mxu0 0.0
        %1119 = vmatprep.subr.mxu0 0.0
        %1120 = vmatpush1.msra.mxu0 0.0
        %1121 = vmatprep.subr.mxu0 0.0
        %1122 = vmatpush1.msra.mxu0 0.0
        %1123 = vmatprep.subr.mxu0 0.0
        %1124 = vmatpush1.msra.mxu0 0.0
        %1125 = vmatprep.mubr.f32.mxu0 0.0
        %1126 = vmatmul.mubr.f32.gmra.mrb[0].mxu0 %v722
        %v1127 = vpop.f32.mrb[0].mxu0
        %v1128 = vadd.f32 0.0, %v1127
        %v1129 = vpop.f32.mrb[0].mxu0
        %1130 = vdwg.mxu0
        %v1135 = vcombine.low %v1031, %v1032
        %v1136 = vcombine.low %v1033, %v1034
        %v1138 = vunpack.c.l.s4 1983009808
        %v1139 = vunpack.c.0.s8 %v1138
        %v1140 = vlaneseq
        %v1141 = vshrl.u32 %v1140, 7
        %v1142 = vsub.s32 %v1139, %v1141
        %v1143 = vrot.slane %v1135, %v1142
        %v1145 = vunpack.c.l.s4 1983009808
        %v1146 = vunpack.c.0.s8 %v1145
        %v1147 = vlaneseq
        %v1148 = vshrl.u32 %v1147, 7
        %v1149 = vsub.s32 %v1146, %v1148
        %v1150 = vrot.slane %v1136, %v1149
        %v1151 = vcombine.low %v1143, %v1150
        %1153 = vmatprep.subr.mxu0 0.0
        %1154 = vmatpush1.msra.mxu0 %v1151
        %1155 = vmatprep.subr.mxu0 0.0
        %1156 = vmatpush1.msra.mxu0 0.0
        %1157 = vmatprep.subr.mxu0 0.0
        %1158 = vmatpush1.msra.mxu0 0.0
        %1159 = vmatprep.subr.mxu0 0.0
        %1160 = vmatpush1.msra.mxu0 0.0
        %1161 = vmatprep.subr.mxu0 0.0
        %1162 = vmatpush1.msra.mxu0 0.0
        %1163 = vmatprep.subr.mxu0 0.0
        %1164 = vmatpush1.msra.mxu0 0.0
        %1165 = vmatprep.subr.mxu0 0.0
        %1166 = vmatpush1.msra.mxu0 0.0
        %1167 = vmatprep.subr.mxu0 0.0
        %1168 = vmatpush1.msra.mxu0 0.0
        %1169 = vmatprep.subr.mxu0 0.0
        %1170 = vmatpush1.msra.mxu0 0.0
        %1171 = vmatprep.subr.mxu0 0.0
        %1172 = vmatpush1.msra.mxu0 0.0
        %1173 = vmatprep.subr.mxu0 0.0
        %1174 = vmatpush1.msra.mxu0 0.0
        %1175 = vmatprep.subr.mxu0 0.0
        %1176 = vmatpush1.msra.mxu0 0.0
        %1177 = vmatprep.subr.mxu0 0.0
        %1178 = vmatpush1.msra.mxu0 0.0
        %1179 = vmatprep.subr.mxu0 0.0
        %1180 = vmatpush1.msra.mxu0 0.0
        %1181 = vmatprep.subr.mxu0 0.0
        %1182 = vmatpush1.msra.mxu0 0.0
        %1183 = vmatprep.subr.mxu0 0.0
        %1184 = vmatpush1.msra.mxu0 0.0
        %1185 = vmatprep.subr.mxu0 0.0
        %1186 = vmatpush1.msra.mxu0 0.0
        %1187 = vmatprep.subr.mxu0 0.0
        %1188 = vmatpush1.msra.mxu0 0.0
        %1189 = vmatprep.subr.mxu0 0.0
        %1190 = vmatpush1.msra.mxu0 0.0
        %1191 = vmatprep.subr.mxu0 0.0
        %1192 = vmatpush1.msra.mxu0 0.0
        %1193 = vmatprep.subr.mxu0 0.0
        %1194 = vmatpush1.msra.mxu0 0.0
        %1195 = vmatprep.subr.mxu0 0.0
        %1196 = vmatpush1.msra.mxu0 0.0
        %1197 = vmatprep.subr.mxu0 0.0
        %1198 = vmatpush1.msra.mxu0 0.0
        %1199 = vmatprep.subr.mxu0 0.0
        %1200 = vmatpush1.msra.mxu0 0.0
        %1201 = vmatprep.subr.mxu0 0.0
        %1202 = vmatpush1.msra.mxu0 0.0
        %1203 = vmatprep.subr.mxu0 0.0
        %1204 = vmatpush1.msra.mxu0 0.0
        %1205 = vmatprep.subr.mxu0 0.0
        %1206 = vmatpush1.msra.mxu0 0.0
        %1207 = vmatprep.subr.mxu0 0.0
        %1208 = vmatpush1.msra.mxu0 0.0
        %1209 = vmatprep.subr.mxu0 0.0
        %1210 = vmatpush1.msra.mxu0 0.0
        %1211 = vmatprep.subr.mxu0 0.0
        %1212 = vmatpush1.msra.mxu0 0.0
        %1213 = vmatprep.subr.mxu0 0.0
        %1214 = vmatpush1.msra.mxu0 0.0
        %1215 = vmatprep.subr.mxu0 0.0
        %1216 = vmatpush1.msra.mxu0 0.0
        %1217 = vmatprep.mubr.f32.mxu0 0.0
        %1218 = vmatmul.mubr.f32.gmra.mrb[0].mxu0 %v817
        %v1219 = vpop.f32.mrb[0].mxu0
        %v1220 = vadd.f32 %v1128, %v1219
        %v1221 = vpop.f32.mrb[0].mxu0
        %1222 = vdwg.mxu0
        %v1223 = vld [vmem:[%s377 + $0x1] sm:$0x1]
        %v1224 = vld [vmem:[%s377 + $0x9] sm:$0x1]
        %v1225 = vld [vmem:[%s377 + $0x11] sm:$0x1]
        %v1226 = vld [vmem:[%s377 + $0x19] sm:$0x1]
        %v1227 = vld [vmem:[%s377 + $0x21] sm:$0x1]
        %v1228 = vld [vmem:[%s377 + $0x29] sm:$0x1]
        %v1229 = vld [vmem:[%s377 + $0x31] sm:$0x1]
        %v1230 = vld [vmem:[%s377 + $0x39] sm:$0x1]
        %v1239 = vrot.slane %v1224, 7
        %v1240 = vsel %vm906, %v1239, %v1223
        %v1241 = vrot.slane %v1225, 6
        %v1242 = vsel %vm909, %v1241, %v1240
        %v1243 = vrot.slane %v1226, 5
        %v1244 = vsel %vm912, %v1243, %v1242
        %v1245 = vrot.slane %v1227, 4
        %v1246 = vsel %vm915, %v1245, %v1244
        %v1247 = vrot.slane %v1228, 3
        %v1248 = vsel %vm918, %v1247, %v1246
        %v1249 = vrot.slane %v1229, 2
        %v1250 = vsel %vm921, %v1249, %v1248
        %v1251 = vrot.slane %v1230, 1
        %v1252 = vsel %vm924, %v1251, %v1250
        %1254 = vmatprep.subr.mxu0 0.0
        %1255 = vmatpush1.msra.mxu0 %v1252
        %1256 = vmatprep.subr.mxu0 0.0
        %1257 = vmatpush1.msra.mxu0 0.0
        %1258 = vmatprep.subr.mxu0 0.0
        %1259 = vmatpush1.msra.mxu0 0.0
        %1260 = vmatprep.subr.mxu0 0.0
        %1261 = vmatpush1.msra.mxu0 0.0
        %1262 = vmatprep.subr.mxu0 0.0
        %1263 = vmatpush1.msra.mxu0 0.0
        %1264 = vmatprep.subr.mxu0 0.0
        %1265 = vmatpush1.msra.mxu0 0.0
        %1266 = vmatprep.subr.mxu0 0.0
        %1267 = vmatpush1.msra.mxu0 0.0
        %1268 = vmatprep.subr.mxu0 0.0
        %1269 = vmatpush1.msra.mxu0 0.0
        %1270 = vmatprep.subr.mxu0 0.0
        %1271 = vmatpush1.msra.mxu0 0.0
        %1272 = vmatprep.subr.mxu0 0.0
        %1273 = vmatpush1.msra.mxu0 0.0
        %1274 = vmatprep.subr.mxu0 0.0
        %1275 = vmatpush1.msra.mxu0 0.0
        %1276 = vmatprep.subr.mxu0 0.0
        %1277 = vmatpush1.msra.mxu0 0.0
        %1278 = vmatprep.subr.mxu0 0.0
        %1279 = vmatpush1.msra.mxu0 0.0
        %1280 = vmatprep.subr.mxu0 0.0
        %1281 = vmatpush1.msra.mxu0 0.0
        %1282 = vmatprep.subr.mxu0 0.0
        %1283 = vmatpush1.msra.mxu0 0.0
        %1284 = vmatprep.subr.mxu0 0.0
        %1285 = vmatpush1.msra.mxu0 0.0
        %1286 = vmatprep.subr.mxu0 0.0
        %1287 = vmatpush1.msra.mxu0 0.0
        %1288 = vmatprep.subr.mxu0 0.0
        %1289 = vmatpush1.msra.mxu0 0.0
        %1290 = vmatprep.subr.mxu0 0.0
        %1291 = vmatpush1.msra.mxu0 0.0
        %1292 = vmatprep.subr.mxu0 0.0
        %1293 = vmatpush1.msra.mxu0 0.0
        %1294 = vmatprep.subr.mxu0 0.0
        %1295 = vmatpush1.msra.mxu0 0.0
        %1296 = vmatprep.subr.mxu0 0.0
        %1297 = vmatpush1.msra.mxu0 0.0
        %1298 = vmatprep.subr.mxu0 0.0
        %1299 = vmatpush1.msra.mxu0 0.0
        %1300 = vmatprep.subr.mxu0 0.0
        %1301 = vmatpush1.msra.mxu0 0.0
        %1302 = vmatprep.subr.mxu0 0.0
        %1303 = vmatpush1.msra.mxu0 0.0
        %1304 = vmatprep.subr.mxu0 0.0
        %1305 = vmatpush1.msra.mxu0 0.0
        %1306 = vmatprep.subr.mxu0 0.0
        %1307 = vmatpush1.msra.mxu0 0.0
        %1308 = vmatprep.subr.mxu0 0.0
        %1309 = vmatpush1.msra.mxu0 0.0
        %1310 = vmatprep.subr.mxu0 0.0
        %1311 = vmatpush1.msra.mxu0 0.0
        %1312 = vmatprep.subr.mxu0 0.0
        %1313 = vmatpush1.msra.mxu0 0.0
        %1314 = vmatprep.subr.mxu0 0.0
        %1315 = vmatpush1.msra.mxu0 0.0
        %1316 = vmatprep.subr.mxu0 0.0
        %1317 = vmatpush1.msra.mxu0 0.0
        %1318 = vmatprep.mubr.f32.mxu0 0.0
        %1319 = vmatmul.mubr.f32.gmra.mrb[0].mxu0 %v928
        %v1320 = vpop.f32.mrb[0].mxu0
        %v1321 = vadd.f32 0.0, %v1320
        %v1322 = vpop.f32.mrb[0].mxu0
        %1323 = vdwg.mxu0
        %v1324 = vadd.f32 %v1220, %v1321
        %v1325 = vadd.f32 %v1324, %v1004
        %v1326 = vmax.f32 %v1325, 0.0
        %v1327 = vmul.f32 %v1326, %v1011
        %v1328 = vsel %vm562, %v1327, 0.0
        %v1329 = vrot.slane %v1328, 4
        %v1330 = vadd.f32 %v1328, %v1329
        %v1331 = vrot.slane %v1330, 2
        %v1332 = vadd.f32 %v1330, %v1331
        %v1333 = vrot.slane %v1332, 1
        %v1334 = vadd.f32 %v1332, %v1333
        %v1335 = vadd.f32 %v1334, %v1021
        %v1336 = vxor.u32 %v1335, 2147483648
        %v1337 = vmul.f32 %v1336, 1.442695
        %v1338 = vpow.pop %v1337
        %v1339 = vadd.f32 %v1338, 1.0
        %v1340 = vrcp.pop %v1339
        %v1341 = vmul.f32 1.0, %v1340
        %1342 = vst.msk [vmem:[#allocation4 + $0x1] sm:$0x1] %vm1029, %v1341
        %v1343 = vld [vmem:[#allocation2 + $0x4] sm:$0x3]
        %v1344 = vld [vmem:[#allocation2 + $0x14] sm:$0x3]
        %v1345 = vld [vmem:[#allocation2 + $0x24] sm:$0x3]
        %v1346 = vld [vmem:[#allocation2 + $0x34] sm:$0x3]
        %v1347 = vld [vmem:[#allocation3 + $0x4] sm:$0x3]
        %v1348 = vld [vmem:[#allocation3 + $0x14] sm:$0x3]
        %v1349 = vld [vmem:[#allocation3 + $0x24] sm:$0x3]
        %v1350 = vld [vmem:[#allocation3 + $0x34] sm:$0x3]
        %v1355 = vcombine.low %v1347, %v1348
        %v1356 = vcombine.low %v1349, %v1350
        %v1358 = vunpack.c.l.s4 1983009808
        %v1359 = vunpack.c.0.s8 %v1358
        %v1360 = vlaneseq
        %v1361 = vshrl.u32 %v1360, 7
        %v1362 = vsub.s32 %v1359, %v1361
        %v1363 = vrot.slane %v1355, %v1362
        %v1365 = vunpack.c.l.s4 1983009808
        %v1366 = vunpack.c.0.s8 %v1365
        %v1367 = vlaneseq
        %v1368 = vshrl.u32 %v1367, 7
        %v1369 = vsub.s32 %v1366, %v1368
        %v1370 = vrot.slane %v1356, %v1369
        %v1371 = vcombine.low %v1363, %v1370
        %1373 = vmatprep.subr.mxu0 0.0
        %1374 = vmatpush1.msra.mxu0 %v1371
        %1375 = vmatprep.subr.mxu0 0.0
        %1376 = vmatpush1.msra.mxu0 0.0
        %1377 = vmatprep.subr.mxu0 0.0
        %1378 = vmatpush1.msra.mxu0 0.0
        %1379 = vmatprep.subr.mxu0 0.0
        %1380 = vmatpush1.msra.mxu0 0.0
        %1381 = vmatprep.subr.mxu0 0.0
        %1382 = vmatpush1.msra.mxu0 0.0
        %1383 = vmatprep.subr.mxu0 0.0
        %1384 = vmatpush1.msra.mxu0 0.0
        %1385 = vmatprep.subr.mxu0 0.0
        %1386 = vmatpush1.msra.mxu0 0.0
        %1387 = vmatprep.subr.mxu0 0.0
        %1388 = vmatpush1.msra.mxu0 0.0
        %1389 = vmatprep.subr.mxu0 0.0
        %1390 = vmatpush1.msra.mxu0 0.0
        %1391 = vmatprep.subr.mxu0 0.0
        %1392 = vmatpush1.msra.mxu0 0.0
        %1393 = vmatprep.subr.mxu0 0.0
        %1394 = vmatpush1.msra.mxu0 0.0
        %1395 = vmatprep.subr.mxu0 0.0
        %1396 = vmatpush1.msra.mxu0 0.0
        %1397 = vmatprep.subr.mxu0 0.0
        %1398 = vmatpush1.msra.mxu0 0.0
        %1399 = vmatprep.subr.mxu0 0.0
        %1400 = vmatpush1.msra.mxu0 0.0
        %1401 = vmatprep.subr.mxu0 0.0
        %1402 = vmatpush1.msra.mxu0 0.0
        %1403 = vmatprep.subr.mxu0 0.0
        %1404 = vmatpush1.msra.mxu0 0.0
        %1405 = vmatprep.subr.mxu0 0.0
        %1406 = vmatpush1.msra.mxu0 0.0
        %1407 = vmatprep.subr.mxu0 0.0
        %1408 = vmatpush1.msra.mxu0 0.0
        %1409 = vmatprep.subr.mxu0 0.0
        %1410 = vmatpush1.msra.mxu0 0.0
        %1411 = vmatprep.subr.mxu0 0.0
        %1412 = vmatpush1.msra.mxu0 0.0
        %1413 = vmatprep.subr.mxu0 0.0
        %1414 = vmatpush1.msra.mxu0 0.0
        %1415 = vmatprep.subr.mxu0 0.0
        %1416 = vmatpush1.msra.mxu0 0.0
        %1417 = vmatprep.subr.mxu0 0.0
        %1418 = vmatpush1.msra.mxu0 0.0
        %1419 = vmatprep.subr.mxu0 0.0
        %1420 = vmatpush1.msra.mxu0 0.0
        %1421 = vmatprep.subr.mxu0 0.0
        %1422 = vmatpush1.msra.mxu0 0.0
        %1423 = vmatprep.subr.mxu0 0.0
        %1424 = vmatpush1.msra.mxu0 0.0
        %1425 = vmatprep.subr.mxu0 0.0
        %1426 = vmatpush1.msra.mxu0 0.0
        %1427 = vmatprep.subr.mxu0 0.0
        %1428 = vmatpush1.msra.mxu0 0.0
        %1429 = vmatprep.subr.mxu0 0.0
        %1430 = vmatpush1.msra.mxu0 0.0
        %1431 = vmatprep.subr.mxu0 0.0
        %1432 = vmatpush1.msra.mxu0 0.0
        %1433 = vmatprep.subr.mxu0 0.0
        %1434 = vmatpush1.msra.mxu0 0.0
        %1435 = vmatprep.subr.mxu0 0.0
        %1436 = vmatpush1.msra.mxu0 0.0
        %1437 = vmatprep.mubr.f32.mxu0 0.0
        %1438 = vmatmul.mubr.f32.gmra.mrb[0].mxu0 %v722
        %v1439 = vpop.f32.mrb[0].mxu0
        %v1440 = vadd.f32 0.0, %v1439
        %v1441 = vpop.f32.mrb[0].mxu0
        %1442 = vdwg.mxu0
        %v1447 = vcombine.low %v1343, %v1344
        %v1448 = vcombine.low %v1345, %v1346
        %v1450 = vunpack.c.l.s4 1983009808
        %v1451 = vunpack.c.0.s8 %v1450
        %v1452 = vlaneseq
        %v1453 = vshrl.u32 %v1452, 7
        %v1454 = vsub.s32 %v1451, %v1453
        %v1455 = vrot.slane %v1447, %v1454
        %v1457 = vunpack.c.l.s4 1983009808
        %v1458 = vunpack.c.0.s8 %v1457
        %v1459 = vlaneseq
        %v1460 = vshrl.u32 %v1459, 7
        %v1461 = vsub.s32 %v1458, %v1460
        %v1462 = vrot.slane %v1448, %v1461
        %v1463 = vcombine.low %v1455, %v1462
        %1465 = vmatprep.subr.mxu0 0.0
        %1466 = vmatpush1.msra.mxu0 %v1463
        %1467 = vmatprep.subr.mxu0 0.0
        %1468 = vmatpush1.msra.mxu0 0.0
        %1469 = vmatprep.subr.mxu0 0.0
        %1470 = vmatpush1.msra.mxu0 0.0
        %1471 = vmatprep.subr.mxu0 0.0
        %1472 = vmatpush1.msra.mxu0 0.0
        %1473 = vmatprep.subr.mxu0 0.0
        %1474 = vmatpush1.msra.mxu0 0.0
        %1475 = vmatprep.subr.mxu0 0.0
        %1476 = vmatpush1.msra.mxu0 0.0
        %1477 = vmatprep.subr.mxu0 0.0
        %1478 = vmatpush1.msra.mxu0 0.0
        %1479 = vmatprep.subr.mxu0 0.0
        %1480 = vmatpush1.msra.mxu0 0.0
        %1481 = vmatprep.subr.mxu0 0.0
        %1482 = vmatpush1.msra.mxu0 0.0
        %1483 = vmatprep.subr.mxu0 0.0
        %1484 = vmatpush1.msra.mxu0 0.0
        %1485 = vmatprep.subr.mxu0 0.0
        %1486 = vmatpush1.msra.mxu0 0.0
        %1487 = vmatprep.subr.mxu0 0.0
        %1488 = vmatpush1.msra.mxu0 0.0
        %1489 = vmatprep.subr.mxu0 0.0
        %1490 = vmatpush1.msra.mxu0 0.0
        %1491 = vmatprep.subr.mxu0 0.0
        %1492 = vmatpush1.msra.mxu0 0.0
        %1493 = vmatprep.subr.mxu0 0.0
        %1494 = vmatpush1.msra.mxu0 0.0
        %1495 = vmatprep.subr.mxu0 0.0
        %1496 = vmatpush1.msra.mxu0 0.0
        %1497 = vmatprep.subr.mxu0 0.0
        %1498 = vmatpush1.msra.mxu0 0.0
        %1499 = vmatprep.subr.mxu0 0.0
        %1500 = vmatpush1.msra.mxu0 0.0
        %1501 = vmatprep.subr.mxu0 0.0
        %1502 = vmatpush1.msra.mxu0 0.0
        %1503 = vmatprep.subr.mxu0 0.0
        %1504 = vmatpush1.msra.mxu0 0.0
        %1505 = vmatprep.subr.mxu0 0.0
        %1506 = vmatpush1.msra.mxu0 0.0
        %1507 = vmatprep.subr.mxu0 0.0
        %1508 = vmatpush1.msra.mxu0 0.0
        %1509 = vmatprep.subr.mxu0 0.0
        %1510 = vmatpush1.msra.mxu0 0.0
        %1511 = vmatprep.subr.mxu0 0.0
        %1512 = vmatpush1.msra.mxu0 0.0
        %1513 = vmatprep.subr.mxu0 0.0
        %1514 = vmatpush1.msra.mxu0 0.0
        %1515 = vmatprep.subr.mxu0 0.0
        %1516 = vmatpush1.msra.mxu0 0.0
        %1517 = vmatprep.subr.mxu0 0.0
        %1518 = vmatpush1.msra.mxu0 0.0
        %1519 = vmatprep.subr.mxu0 0.0
        %1520 = vmatpush1.msra.mxu0 0.0
        %1521 = vmatprep.subr.mxu0 0.0
        %1522 = vmatpush1.msra.mxu0 0.0
        %1523 = vmatprep.subr.mxu0 0.0
        %1524 = vmatpush1.msra.mxu0 0.0
        %1525 = vmatprep.subr.mxu0 0.0
        %1526 = vmatpush1.msra.mxu0 0.0
        %1527 = vmatprep.subr.mxu0 0.0
        %1528 = vmatpush1.msra.mxu0 0.0
        %1529 = vmatprep.mubr.f32.mxu0 0.0
        %1530 = vmatmul.mubr.f32.gmra.mrb[0].mxu0 %v817
        %v1531 = vpop.f32.mrb[0].mxu0
        %v1532 = vadd.f32 %v1440, %v1531
        %v1533 = vpop.f32.mrb[0].mxu0
        %1534 = vdwg.mxu0
        %v1535 = vld [vmem:[%s377 + $0x2] sm:$0x1]
        %v1536 = vld [vmem:[%s377 + $0xa] sm:$0x1]
        %v1537 = vld [vmem:[%s377 + $0x12] sm:$0x1]
        %v1538 = vld [vmem:[%s377 + $0x1a] sm:$0x1]
        %v1539 = vld [vmem:[%s377 + $0x22] sm:$0x1]
        %v1540 = vld [vmem:[%s377 + $0x2a] sm:$0x1]
        %v1541 = vld [vmem:[%s377 + $0x32] sm:$0x1]
        %v1542 = vld [vmem:[%s377 + $0x3a] sm:$0x1]
        %v1551 = vrot.slane %v1536, 7
        %v1552 = vsel %vm906, %v1551, %v1535
        %v1553 = vrot.slane %v1537, 6
        %v1554 = vsel %vm909, %v1553, %v1552
        %v1555 = vrot.slane %v1538, 5
        %v1556 = vsel %vm912, %v1555, %v1554
        %v1557 = vrot.slane %v1539, 4
        %v1558 = vsel %vm915, %v1557, %v1556
        %v1559 = vrot.slane %v1540, 3
        %v1560 = vsel %vm918, %v1559, %v1558
        %v1561 = vrot.slane %v1541, 2
        %v1562 = vsel %vm921, %v1561, %v1560
        %v1563 = vrot.slane %v1542, 1
        %v1564 = vsel %vm924, %v1563, %v1562
        %1566 = vmatprep.subr.mxu0 0.0
        %1567 = vmatpush1.msra.mxu0 %v1564
        %1568 = vmatprep.subr.mxu0 0.0
        %1569 = vmatpush1.msra.mxu0 0.0
        %1570 = vmatprep.subr.mxu0 0.0
        %1571 = vmatpush1.msra.mxu0 0.0
        %1572 = vmatprep.subr.mxu0 0.0
        %1573 = vmatpush1.msra.mxu0 0.0
        %1574 = vmatprep.subr.mxu0 0.0
        %1575 = vmatpush1.msra.mxu0 0.0
        %1576 = vmatprep.subr.mxu0 0.0
        %1577 = vmatpush1.msra.mxu0 0.0
        %1578 = vmatprep.subr.mxu0 0.0
        %1579 = vmatpush1.msra.mxu0 0.0
        %1580 = vmatprep.subr.mxu0 0.0
        %1581 = vmatpush1.msra.mxu0 0.0
        %1582 = vmatprep.subr.mxu0 0.0
        %1583 = vmatpush1.msra.mxu0 0.0
        %1584 = vmatprep.subr.mxu0 0.0
        %1585 = vmatpush1.msra.mxu0 0.0
        %1586 = vmatprep.subr.mxu0 0.0
        %1587 = vmatpush1.msra.mxu0 0.0
        %1588 = vmatprep.subr.mxu0 0.0
        %1589 = vmatpush1.msra.mxu0 0.0
        %1590 = vmatprep.subr.mxu0 0.0
        %1591 = vmatpush1.msra.mxu0 0.0
        %1592 = vmatprep.subr.mxu0 0.0
        %1593 = vmatpush1.msra.mxu0 0.0
        %1594 = vmatprep.subr.mxu0 0.0
        %1595 = vmatpush1.msra.mxu0 0.0
        %1596 = vmatprep.subr.mxu0 0.0
        %1597 = vmatpush1.msra.mxu0 0.0
        %1598 = vmatprep.subr.mxu0 0.0
        %1599 = vmatpush1.msra.mxu0 0.0
        %1600 = vmatprep.subr.mxu0 0.0
        %1601 = vmatpush1.msra.mxu0 0.0
        %1602 = vmatprep.subr.mxu0 0.0
        %1603 = vmatpush1.msra.mxu0 0.0
        %1604 = vmatprep.subr.mxu0 0.0
        %1605 = vmatpush1.msra.mxu0 0.0
        %1606 = vmatprep.subr.mxu0 0.0
        %1607 = vmatpush1.msra.mxu0 0.0
        %1608 = vmatprep.subr.mxu0 0.0
        %1609 = vmatpush1.msra.mxu0 0.0
        %1610 = vmatprep.subr.mxu0 0.0
        %1611 = vmatpush1.msra.mxu0 0.0
        %1612 = vmatprep.subr.mxu0 0.0
        %1613 = vmatpush1.msra.mxu0 0.0
        %1614 = vmatprep.subr.mxu0 0.0
        %1615 = vmatpush1.msra.mxu0 0.0
        %1616 = vmatprep.subr.mxu0 0.0
        %1617 = vmatpush1.msra.mxu0 0.0
        %1618 = vmatprep.subr.mxu0 0.0
        %1619 = vmatpush1.msra.mxu0 0.0
        %1620 = vmatprep.subr.mxu0 0.0
        %1621 = vmatpush1.msra.mxu0 0.0
        %1622 = vmatprep.subr.mxu0 0.0
        %1623 = vmatpush1.msra.mxu0 0.0
        %1624 = vmatprep.subr.mxu0 0.0
        %1625 = vmatpush1.msra.mxu0 0.0
        %1626 = vmatprep.subr.mxu0 0.0
        %1627 = vmatpush1.msra.mxu0 0.0
        %1628 = vmatprep.subr.mxu0 0.0
        %1629 = vmatpush1.msra.mxu0 0.0
        %1630 = vmatprep.mubr.f32.mxu0 0.0
        %1631 = vmatmul.mubr.f32.gmra.mrb[0].mxu0 %v928
        %v1632 = vpop.f32.mrb[0].mxu0
        %v1633 = vadd.f32 0.0, %v1632
        %v1634 = vpop.f32.mrb[0].mxu0
        %1635 = vdwg.mxu0
        %v1636 = vadd.f32 %v1532, %v1633
        %v1637 = vadd.f32 %v1636, %v1004
        %v1638 = vmax.f32 %v1637, 0.0
        %v1639 = vmul.f32 %v1638, %v1011
        %v1640 = vsel %vm562, %v1639, 0.0
        %v1641 = vrot.slane %v1640, 4
        %v1642 = vadd.f32 %v1640, %v1641
        %v1643 = vrot.slane %v1642, 2
        %v1644 = vadd.f32 %v1642, %v1643
        %v1645 = vrot.slane %v1644, 1
        %v1646 = vadd.f32 %v1644, %v1645
        %v1647 = vadd.f32 %v1646, %v1021
        %v1648 = vxor.u32 %v1647, 2147483648
        %v1649 = vmul.f32 %v1648, 1.442695
        %v1650 = vpow.pop %v1649
        %v1651 = vadd.f32 %v1650, 1.0
        %v1652 = vrcp.pop %v1651
        %v1653 = vmul.f32 1.0, %v1652
        %1654 = vst.msk [vmem:[#allocation4 + $0x2] sm:$0x1] %vm1029, %v1653
        %v1655 = vld [vmem:[#allocation2 + $0x6] sm:$0x3]
        %v1656 = vld [vmem:[#allocation2 + $0x16] sm:$0x3]
        %v1657 = vld [vmem:[#allocation2 + $0x26] sm:$0x3]
        %v1658 = vld [vmem:[#allocation2 + $0x36] sm:$0x3]
        %v1659 = vld [vmem:[#allocation3 + $0x6] sm:$0x3]
        %v1660 = vld [vmem:[#allocation3 + $0x16] sm:$0x3]
        %v1661 = vld [vmem:[#allocation3 + $0x26] sm:$0x3]
        %v1662 = vld [vmem:[#allocation3 + $0x36] sm:$0x3]
        %v1667 = vcombine.low %v1659, %v1660
        %v1668 = vcombine.low %v1661, %v1662
        %v1670 = vunpack.c.l.s4 1983009808
        %v1671 = vunpack.c.0.s8 %v1670
        %v1672 = vlaneseq
        %v1673 = vshrl.u32 %v1672, 7
        %v1674 = vsub.s32 %v1671, %v1673
        %v1675 = vrot.slane %v1667, %v1674
        %v1677 = vunpack.c.l.s4 1983009808
        %v1678 = vunpack.c.0.s8 %v1677
        %v1679 = vlaneseq
        %v1680 = vshrl.u32 %v1679, 7
        %v1681 = vsub.s32 %v1678, %v1680
        %v1682 = vrot.slane %v1668, %v1681
        %v1683 = vcombine.low %v1675, %v1682
        %1685 = vmatprep.subr.mxu0 0.0
        %1686 = vmatpush1.msra.mxu0 %v1683
        %1687 = vmatprep.subr.mxu0 0.0
        %1688 = vmatpush1.msra.mxu0 0.0
        %1689 = vmatprep.subr.mxu0 0.0
        %1690 = vmatpush1.msra.mxu0 0.0
        %1691 = vmatprep.subr.mxu0 0.0
        %1692 = vmatpush1.msra.mxu0 0.0
        %1693 = vmatprep.subr.mxu0 0.0
        %1694 = vmatpush1.msra.mxu0 0.0
        %1695 = vmatprep.subr.mxu0 0.0
        %1696 = vmatpush1.msra.mxu0 0.0
        %1697 = vmatprep.subr.mxu0 0.0
        %1698 = vmatpush1.msra.mxu0 0.0
        %1699 = vmatprep.subr.mxu0 0.0
        %1700 = vmatpush1.msra.mxu0 0.0
        %1701 = vmatprep.subr.mxu0 0.0
        %1702 = vmatpush1.msra.mxu0 0.0
        %1703 = vmatprep.subr.mxu0 0.0
        %1704 = vmatpush1.msra.mxu0 0.0
        %1705 = vmatprep.subr.mxu0 0.0
        %1706 = vmatpush1.msra.mxu0 0.0
        %1707 = vmatprep.subr.mxu0 0.0
        %1708 = vmatpush1.msra.mxu0 0.0
        %1709 = vmatprep.subr.mxu0 0.0
        %1710 = vmatpush1.msra.mxu0 0.0
        %1711 = vmatprep.subr.mxu0 0.0
        %1712 = vmatpush1.msra.mxu0 0.0
        %1713 = vmatprep.subr.mxu0 0.0
        %1714 = vmatpush1.msra.mxu0 0.0
        %1715 = vmatprep.subr.mxu0 0.0
        %1716 = vmatpush1.msra.mxu0 0.0
        %1717 = vmatprep.subr.mxu0 0.0
        %1718 = vmatpush1.msra.mxu0 0.0
        %1719 = vmatprep.subr.mxu0 0.0
        %1720 = vmatpush1.msra.mxu0 0.0
        %1721 = vmatprep.subr.mxu0 0.0
        %1722 = vmatpush1.msra.mxu0 0.0
        %1723 = vmatprep.subr.mxu0 0.0
        %1724 = vmatpush1.msra.mxu0 0.0
        %1725 = vmatprep.subr.mxu0 0.0
        %1726 = vmatpush1.msra.mxu0 0.0
        %1727 = vmatprep.subr.mxu0 0.0
        %1728 = vmatpush1.msra.mxu0 0.0
        %1729 = vmatprep.subr.mxu0 0.0
        %1730 = vmatpush1.msra.mxu0 0.0
        %1731 = vmatprep.subr.mxu0 0.0
        %1732 = vmatpush1.msra.mxu0 0.0
        %1733 = vmatprep.subr.mxu0 0.0
        %1734 = vmatpush1.msra.mxu0 0.0
        %1735 = vmatprep.subr.mxu0 0.0
        %1736 = vmatpush1.msra.mxu0 0.0
        %1737 = vmatprep.subr.mxu0 0.0
        %1738 = vmatpush1.msra.mxu0 0.0
        %1739 = vmatprep.subr.mxu0 0.0
        %1740 = vmatpush1.msra.mxu0 0.0
        %1741 = vmatprep.subr.mxu0 0.0
        %1742 = vmatpush1.msra.mxu0 0.0
        %1743 = vmatprep.subr.mxu0 0.0
        %1744 = vmatpush1.msra.mxu0 0.0
        %1745 = vmatprep.subr.mxu0 0.0
        %1746 = vmatpush1.msra.mxu0 0.0
        %1747 = vmatprep.subr.mxu0 0.0
        %1748 = vmatpush1.msra.mxu0 0.0
        %1749 = vmatprep.mubr.f32.mxu0 0.0
        %1750 = vmatmul.mubr.f32.gmra.mrb[0].mxu0 %v722
        %v1751 = vpop.f32.mrb[0].mxu0
        %v1752 = vadd.f32 0.0, %v1751
        %v1753 = vpop.f32.mrb[0].mxu0
        %1754 = vdwg.mxu0
        %v1759 = vcombine.low %v1655, %v1656
        %v1760 = vcombine.low %v1657, %v1658
        %v1762 = vunpack.c.l.s4 1983009808
        %v1763 = vunpack.c.0.s8 %v1762
        %v1764 = vlaneseq
        %v1765 = vshrl.u32 %v1764, 7
        %v1766 = vsub.s32 %v1763, %v1765
        %v1767 = vrot.slane %v1759, %v1766
        %v1769 = vunpack.c.l.s4 1983009808
        %v1770 = vunpack.c.0.s8 %v1769
        %v1771 = vlaneseq
        %v1772 = vshrl.u32 %v1771, 7
        %v1773 = vsub.s32 %v1770, %v1772
        %v1774 = vrot.slane %v1760, %v1773
        %v1775 = vcombine.low %v1767, %v1774
        %1777 = vmatprep.subr.mxu0 0.0
        %1778 = vmatpush1.msra.mxu0 %v1775
        %1779 = vmatprep.subr.mxu0 0.0
        %1780 = vmatpush1.msra.mxu0 0.0
        %1781 = vmatprep.subr.mxu0 0.0
        %1782 = vmatpush1.msra.mxu0 0.0
        %1783 = vmatprep.subr.mxu0 0.0
        %1784 = vmatpush1.msra.mxu0 0.0
        %1785 = vmatprep.subr.mxu0 0.0
        %1786 = vmatpush1.msra.mxu0 0.0
        %1787 = vmatprep.subr.mxu0 0.0
        %1788 = vmatpush1.msra.mxu0 0.0
        %1789 = vmatprep.subr.mxu0 0.0
        %1790 = vmatpush1.msra.mxu0 0.0
        %1791 = vmatprep.subr.mxu0 0.0
        %1792 = vmatpush1.msra.mxu0 0.0
        %1793 = vmatprep.subr.mxu0 0.0
        %1794 = vmatpush1.msra.mxu0 0.0
        %1795 = vmatprep.subr.mxu0 0.0
        %1796 = vmatpush1.msra.mxu0 0.0
        %1797 = vmatprep.subr.mxu0 0.0
        %1798 = vmatpush1.msra.mxu0 0.0
        %1799 = vmatprep.subr.mxu0 0.0
        %1800 = vmatpush1.msra.mxu0 0.0
        %1801 = vmatprep.subr.mxu0 0.0
        %1802 = vmatpush1.msra.mxu0 0.0
        %1803 = vmatprep.subr.mxu0 0.0
        %1804 = vmatpush1.msra.mxu0 0.0
        %1805 = vmatprep.subr.mxu0 0.0
        %1806 = vmatpush1.msra.mxu0 0.0
        %1807 = vmatprep.subr.mxu0 0.0
        %1808 = vmatpush1.msra.mxu0 0.0
        %1809 = vmatprep.subr.mxu0 0.0
        %1810 = vmatpush1.msra.mxu0 0.0
        %1811 = vmatprep.subr.mxu0 0.0
        %1812 = vmatpush1.msra.mxu0 0.0
        %1813 = vmatprep.subr.mxu0 0.0
        %1814 = vmatpush1.msra.mxu0 0.0
        %1815 = vmatprep.subr.mxu0 0.0
        %1816 = vmatpush1.msra.mxu0 0.0
        %1817 = vmatprep.subr.mxu0 0.0
        %1818 = vmatpush1.msra.mxu0 0.0
        %1819 = vmatprep.subr.mxu0 0.0
        %1820 = vmatpush1.msra.mxu0 0.0
        %1821 = vmatprep.subr.mxu0 0.0
        %1822 = vmatpush1.msra.mxu0 0.0
        %1823 = vmatprep.subr.mxu0 0.0
        %1824 = vmatpush1.msra.mxu0 0.0
        %1825 = vmatprep.subr.mxu0 0.0
        %1826 = vmatpush1.msra.mxu0 0.0
        %1827 = vmatprep.subr.mxu0 0.0
        %1828 = vmatpush1.msra.mxu0 0.0
        %1829 = vmatprep.subr.mxu0 0.0
        %1830 = vmatpush1.msra.mxu0 0.0
        %1831 = vmatprep.subr.mxu0 0.0
        %1832 = vmatpush1.msra.mxu0 0.0
        %1833 = vmatprep.subr.mxu0 0.0
        %1834 = vmatpush1.msra.mxu0 0.0
        %1835 = vmatprep.subr.mxu0 0.0
        %1836 = vmatpush1.msra.mxu0 0.0
        %1837 = vmatprep.subr.mxu0 0.0
        %1838 = vmatpush1.msra.mxu0 0.0
        %1839 = vmatprep.subr.mxu0 0.0
        %1840 = vmatpush1.msra.mxu0 0.0
        %1841 = vmatprep.mubr.f32.mxu0 0.0
        %1842 = vmatmul.mubr.f32.gmra.mrb[0].mxu0 %v817
        %v1843 = vpop.f32.mrb[0].mxu0
        %v1844 = vadd.f32 %v1752, %v1843
        %v1845 = vpop.f32.mrb[0].mxu0
        %1846 = vdwg.mxu0
        %v1847 = vld [vmem:[%s377 + $0x3] sm:$0x1]
        %v1848 = vld [vmem:[%s377 + $0xb] sm:$0x1]
        %v1849 = vld [vmem:[%s377 + $0x13] sm:$0x1]
        %v1850 = vld [vmem:[%s377 + $0x1b] sm:$0x1]
        %v1851 = vld [vmem:[%s377 + $0x23] sm:$0x1]
        %v1852 = vld [vmem:[%s377 + $0x2b] sm:$0x1]
        %v1853 = vld [vmem:[%s377 + $0x33] sm:$0x1]
        %v1854 = vld [vmem:[%s377 + $0x3b] sm:$0x1]
        %v1863 = vrot.slane %v1848, 7
        %v1864 = vsel %vm906, %v1863, %v1847
        %v1865 = vrot.slane %v1849, 6
        %v1866 = vsel %vm909, %v1865, %v1864
        %v1867 = vrot.slane %v1850, 5
        %v1868 = vsel %vm912, %v1867, %v1866
        %v1869 = vrot.slane %v1851, 4
        %v1870 = vsel %vm915, %v1869, %v1868
        %v1871 = vrot.slane %v1852, 3
        %v1872 = vsel %vm918, %v1871, %v1870
        %v1873 = vrot.slane %v1853, 2
        %v1874 = vsel %vm921, %v1873, %v1872
        %v1875 = vrot.slane %v1854, 1
        %v1876 = vsel %vm924, %v1875, %v1874
        %1878 = vmatprep.subr.mxu0 0.0
        %1879 = vmatpush1.msra.mxu0 %v1876
        %1880 = vmatprep.subr.mxu0 0.0
        %1881 = vmatpush1.msra.mxu0 0.0
        %1882 = vmatprep.subr.mxu0 0.0
        %1883 = vmatpush1.msra.mxu0 0.0
        %1884 = vmatprep.subr.mxu0 0.0
        %1885 = vmatpush1.msra.mxu0 0.0
        %1886 = vmatprep.subr.mxu0 0.0
        %1887 = vmatpush1.msra.mxu0 0.0
        %1888 = vmatprep.subr.mxu0 0.0
        %1889 = vmatpush1.msra.mxu0 0.0
        %1890 = vmatprep.subr.mxu0 0.0
        %1891 = vmatpush1.msra.mxu0 0.0
        %1892 = vmatprep.subr.mxu0 0.0
        %1893 = vmatpush1.msra.mxu0 0.0
        %1894 = vmatprep.subr.mxu0 0.0
        %1895 = vmatpush1.msra.mxu0 0.0
        %1896 = vmatprep.subr.mxu0 0.0
        %1897 = vmatpush1.msra.mxu0 0.0
        %1898 = vmatprep.subr.mxu0 0.0
        %1899 = vmatpush1.msra.mxu0 0.0
        %1900 = vmatprep.subr.mxu0 0.0
        %1901 = vmatpush1.msra.mxu0 0.0
        %1902 = vmatprep.subr.mxu0 0.0
        %1903 = vmatpush1.msra.mxu0 0.0
        %1904 = vmatprep.subr.mxu0 0.0
        %1905 = vmatpush1.msra.mxu0 0.0
        %1906 = vmatprep.subr.mxu0 0.0
        %1907 = vmatpush1.msra.mxu0 0.0
        %1908 = vmatprep.subr.mxu0 0.0
        %1909 = vmatpush1.msra.mxu0 0.0
        %1910 = vmatprep.subr.mxu0 0.0
        %1911 = vmatpush1.msra.mxu0 0.0
        %1912 = vmatprep.subr.mxu0 0.0
        %1913 = vmatpush1.msra.mxu0 0.0
        %1914 = vmatprep.subr.mxu0 0.0
        %1915 = vmatpush1.msra.mxu0 0.0
        %1916 = vmatprep.subr.mxu0 0.0
        %1917 = vmatpush1.msra.mxu0 0.0
        %1918 = vmatprep.subr.mxu0 0.0
        %1919 = vmatpush1.msra.mxu0 0.0
        %1920 = vmatprep.subr.mxu0 0.0
        %1921 = vmatpush1.msra.mxu0 0.0
        %1922 = vmatprep.subr.mxu0 0.0
        %1923 = vmatpush1.msra.mxu0 0.0
        %1924 = vmatprep.subr.mxu0 0.0
        %1925 = vmatpush1.msra.mxu0 0.0
        %1926 = vmatprep.subr.mxu0 0.0
        %1927 = vmatpush1.msra.mxu0 0.0
        %1928 = vmatprep.subr.mxu0 0.0
        %1929 = vmatpush1.msra.mxu0 0.0
        %1930 = vmatprep.subr.mxu0 0.0
        %1931 = vmatpush1.msra.mxu0 0.0
        %1932 = vmatprep.subr.mxu0 0.0
        %1933 = vmatpush1.msra.mxu0 0.0
        %1934 = vmatprep.subr.mxu0 0.0
        %1935 = vmatpush1.msra.mxu0 0.0
        %1936 = vmatprep.subr.mxu0 0.0
        %1937 = vmatpush1.msra.mxu0 0.0
        %1938 = vmatprep.subr.mxu0 0.0
        %1939 = vmatpush1.msra.mxu0 0.0
        %1940 = vmatprep.subr.mxu0 0.0
        %1941 = vmatpush1.msra.mxu0 0.0
        %1942 = vmatprep.mubr.f32.mxu0 0.0
        %1943 = vmatmul.mubr.f32.gmra.mrb[0].mxu0 %v928
        %v1944 = vpop.f32.mrb[0].mxu0
        %v1945 = vadd.f32 0.0, %v1944
        %v1946 = vpop.f32.mrb[0].mxu0
        %1947 = vdwg.mxu0
        %v1948 = vadd.f32 %v1844, %v1945
        %v1949 = vadd.f32 %v1948, %v1004
        %v1950 = vmax.f32 %v1949, 0.0
        %v1951 = vmul.f32 %v1950, %v1011
        %v1952 = vsel %vm562, %v1951, 0.0
        %v1953 = vrot.slane %v1952, 4
        %v1954 = vadd.f32 %v1952, %v1953
        %v1955 = vrot.slane %v1954, 2
        %v1956 = vadd.f32 %v1954, %v1955
        %v1957 = vrot.slane %v1956, 1
        %v1958 = vadd.f32 %v1956, %v1957
        %v1959 = vadd.f32 %v1958, %v1021
        %v1960 = vxor.u32 %v1959, 2147483648
        %v1961 = vmul.f32 %v1960, 1.442695
        %v1962 = vpow.pop %v1961
        %v1963 = vadd.f32 %v1962, 1.0
        %v1964 = vrcp.pop %v1963
        %v1965 = vmul.f32 1.0, %v1964
        %1966 = vst.msk [vmem:[#allocation4 + $0x3] sm:$0x1] %vm1029, %v1965
        %v1967 = vld [vmem:[#allocation2 + $0x8] sm:$0x3]
        %v1968 = vld [vmem:[#allocation2 + $0x18] sm:$0x3]
        %v1969 = vld [vmem:[#allocation2 + $0x28] sm:$0x3]
        %v1970 = vld [vmem:[#allocation2 + $0x38] sm:$0x3]
        %v1971 = vld [vmem:[#allocation3 + $0x8] sm:$0x3]
        %v1972 = vld [vmem:[#allocation3 + $0x18] sm:$0x3]
        %v1973 = vld [vmem:[#allocation3 + $0x28] sm:$0x3]
        %v1974 = vld [vmem:[#allocation3 + $0x38] sm:$0x3]
        %v1979 = vcombine.low %v1971, %v1972
        %v1980 = vcombine.low %v1973, %v1974
        %v1982 = vunpack.c.l.s4 1983009808
        %v1983 = vunpack.c.0.s8 %v1982
        %v1984 = vlaneseq
        %v1985 = vshrl.u32 %v1984, 7
        %v1986 = vsub.s32 %v1983, %v1985
        %v1987 = vrot.slane %v1979, %v1986
        %v1989 = vunpack.c.l.s4 1983009808
        %v1990 = vunpack.c.0.s8 %v1989
        %v1991 = vlaneseq
        %v1992 = vshrl.u32 %v1991, 7
        %v1993 = vsub.s32 %v1990, %v1992
        %v1994 = vrot.slane %v1980, %v1993
        %v1995 = vcombine.low %v1987, %v1994
        %1997 = vmatprep.subr.mxu0 0.0
        %1998 = vmatpush1.msra.mxu0 %v1995
        %1999 = vmatprep.subr.mxu0 0.0
        %2000 = vmatpush1.msra.mxu0 0.0
        %2001 = vmatprep.subr.mxu0 0.0
        %2002 = vmatpush1.msra.mxu0 0.0
        %2003 = vmatprep.subr.mxu0 0.0
        %2004 = vmatpush1.msra.mxu0 0.0
        %2005 = vmatprep.subr.mxu0 0.0
        %2006 = vmatpush1.msra.mxu0 0.0
        %2007 = vmatprep.subr.mxu0 0.0
        %2008 = vmatpush1.msra.mxu0 0.0
        %2009 = vmatprep.subr.mxu0 0.0
        %2010 = vmatpush1.msra.mxu0 0.0
        %2011 = vmatprep.subr.mxu0 0.0
        %2012 = vmatpush1.msra.mxu0 0.0
        %2013 = vmatprep.subr.mxu0 0.0
        %2014 = vmatpush1.msra.mxu0 0.0
        %2015 = vmatprep.subr.mxu0 0.0
        %2016 = vmatpush1.msra.mxu0 0.0
        %2017 = vmatprep.subr.mxu0 0.0
        %2018 = vmatpush1.msra.mxu0 0.0
        %2019 = vmatprep.subr.mxu0 0.0
        %2020 = vmatpush1.msra.mxu0 0.0
        %2021 = vmatprep.subr.mxu0 0.0
        %2022 = vmatpush1.msra.mxu0 0.0
        %2023 = vmatprep.subr.mxu0 0.0
        %2024 = vmatpush1.msra.mxu0 0.0
        %2025 = vmatprep.subr.mxu0 0.0
        %2026 = vmatpush1.msra.mxu0 0.0
        %2027 = vmatprep.subr.mxu0 0.0
        %2028 = vmatpush1.msra.mxu0 0.0
        %2029 = vmatprep.subr.mxu0 0.0
        %2030 = vmatpush1.msra.mxu0 0.0
        %2031 = vmatprep.subr.mxu0 0.0
        %2032 = vmatpush1.msra.mxu0 0.0
        %2033 = vmatprep.subr.mxu0 0.0
        %2034 = vmatpush1.msra.mxu0 0.0
        %2035 = vmatprep.subr.mxu0 0.0
        %2036 = vmatpush1.msra.mxu0 0.0
        %2037 = vmatprep.subr.mxu0 0.0
        %2038 = vmatpush1.msra.mxu0 0.0
        %2039 = vmatprep.subr.mxu0 0.0
        %2040 = vmatpush1.msra.mxu0 0.0
        %2041 = vmatprep.subr.mxu0 0.0
        %2042 = vmatpush1.msra.mxu0 0.0
        %2043 = vmatprep.subr.mxu0 0.0
        %2044 = vmatpush1.msra.mxu0 0.0
        %2045 = vmatprep.subr.mxu0 0.0
        %2046 = vmatpush1.msra.mxu0 0.0
        %2047 = vmatprep.subr.mxu0 0.0
        %2048 = vmatpush1.msra.mxu0 0.0
        %2049 = vmatprep.subr.mxu0 0.0
        %2050 = vmatpush1.msra.mxu0 0.0
        %2051 = vmatprep.subr.mxu0 0.0
        %2052 = vmatpush1.msra.mxu0 0.0
        %2053 = vmatprep.subr.mxu0 0.0
        %2054 = vmatpush1.msra.mxu0 0.0
        %2055 = vmatprep.subr.mxu0 0.0
        %2056 = vmatpush1.msra.mxu0 0.0
        %2057 = vmatprep.subr.mxu0 0.0
        %2058 = vmatpush1.msra.mxu0 0.0
        %2059 = vmatprep.subr.mxu0 0.0
        %2060 = vmatpush1.msra.mxu0 0.0
        %2061 = vmatprep.mubr.f32.mxu0 0.0
        %2062 = vmatmul.mubr.f32.gmra.mrb[0].mxu0 %v722
        %v2063 = vpop.f32.mrb[0].mxu0
        %v2064 = vadd.f32 0.0, %v2063
        %v2065 = vpop.f32.mrb[0].mxu0
        %2066 = vdwg.mxu0
        %v2071 = vcombine.low %v1967, %v1968
        %v2072 = vcombine.low %v1969, %v1970
        %v2074 = vunpack.c.l.s4 1983009808
        %v2075 = vunpack.c.0.s8 %v2074
        %v2076 = vlaneseq
        %v2077 = vshrl.u32 %v2076, 7
        %v2078 = vsub.s32 %v2075, %v2077
        %v2079 = vrot.slane %v2071, %v2078
        %v2081 = vunpack.c.l.s4 1983009808
        %v2082 = vunpack.c.0.s8 %v2081
        %v2083 = vlaneseq
        %v2084 = vshrl.u32 %v2083, 7
        %v2085 = vsub.s32 %v2082, %v2084
        %v2086 = vrot.slane %v2072, %v2085
        %v2087 = vcombine.low %v2079, %v2086
        %2089 = vmatprep.subr.mxu0 0.0
        %2090 = vmatpush1.msra.mxu0 %v2087
        %2091 = vmatprep.subr.mxu0 0.0
        %2092 = vmatpush1.msra.mxu0 0.0
        %2093 = vmatprep.subr.mxu0 0.0
        %2094 = vmatpush1.msra.mxu0 0.0
        %2095 = vmatprep.subr.mxu0 0.0
        %2096 = vmatpush1.msra.mxu0 0.0
        %2097 = vmatprep.subr.mxu0 0.0
        %2098 = vmatpush1.msra.mxu0 0.0
        %2099 = vmatprep.subr.mxu0 0.0
        %2100 = vmatpush1.msra.mxu0 0.0
        %2101 = vmatprep.subr.mxu0 0.0
        %2102 = vmatpush1.msra.mxu0 0.0
        %2103 = vmatprep.subr.mxu0 0.0
        %2104 = vmatpush1.msra.mxu0 0.0
        %2105 = vmatprep.subr.mxu0 0.0
        %2106 = vmatpush1.msra.mxu0 0.0
        %2107 = vmatprep.subr.mxu0 0.0
        %2108 = vmatpush1.msra.mxu0 0.0
        %2109 = vmatprep.subr.mxu0 0.0
        %2110 = vmatpush1.msra.mxu0 0.0
        %2111 = vmatprep.subr.mxu0 0.0
        %2112 = vmatpush1.msra.mxu0 0.0
        %2113 = vmatprep.subr.mxu0 0.0
        %2114 = vmatpush1.msra.mxu0 0.0
        %2115 = vmatprep.subr.mxu0 0.0
        %2116 = vmatpush1.msra.mxu0 0.0
        %2117 = vmatprep.subr.mxu0 0.0
        %2118 = vmatpush1.msra.mxu0 0.0
        %2119 = vmatprep.subr.mxu0 0.0
        %2120 = vmatpush1.msra.mxu0 0.0
        %2121 = vmatprep.subr.mxu0 0.0
        %2122 = vmatpush1.msra.mxu0 0.0
        %2123 = vmatprep.subr.mxu0 0.0
        %2124 = vmatpush1.msra.mxu0 0.0
        %2125 = vmatprep.subr.mxu0 0.0
        %2126 = vmatpush1.msra.mxu0 0.0
        %2127 = vmatprep.subr.mxu0 0.0
        %2128 = vmatpush1.msra.mxu0 0.0
        %2129 = vmatprep.subr.mxu0 0.0
        %2130 = vmatpush1.msra.mxu0 0.0
        %2131 = vmatprep.subr.mxu0 0.0
        %2132 = vmatpush1.msra.mxu0 0.0
        %2133 = vmatprep.subr.mxu0 0.0
        %2134 = vmatpush1.msra.mxu0 0.0
        %2135 = vmatprep.subr.mxu0 0.0
        %2136 = vmatpush1.msra.mxu0 0.0
        %2137 = vmatprep.subr.mxu0 0.0
        %2138 = vmatpush1.msra.mxu0 0.0
        %2139 = vmatprep.subr.mxu0 0.0
        %2140 = vmatpush1.msra.mxu0 0.0
        %2141 = vmatprep.subr.mxu0 0.0
        %2142 = vmatpush1.msra.mxu0 0.0
        %2143 = vmatprep.subr.mxu0 0.0
        %2144 = vmatpush1.msra.mxu0 0.0
        %2145 = vmatprep.subr.mxu0 0.0
        %2146 = vmatpush1.msra.mxu0 0.0
        %2147 = vmatprep.subr.mxu0 0.0
        %2148 = vmatpush1.msra.mxu0 0.0
        %2149 = vmatprep.subr.mxu0 0.0
        %2150 = vmatpush1.msra.mxu0 0.0
        %2151 = vmatprep.subr.mxu0 0.0
        %2152 = vmatpush1.msra.mxu0 0.0
        %2153 = vmatprep.mubr.f32.mxu0 0.0
        %2154 = vmatmul.mubr.f32.gmra.mrb[0].mxu0 %v817
        %v2155 = vpop.f32.mrb[0].mxu0
        %v2156 = vadd.f32 %v2064, %v2155
        %v2157 = vpop.f32.mrb[0].mxu0
        %2158 = vdwg.mxu0
        %v2159 = vld [vmem:[%s377 + $0x4] sm:$0x1]
        %v2160 = vld [vmem:[%s377 + $0xc] sm:$0x1]
        %v2161 = vld [vmem:[%s377 + $0x14] sm:$0x1]
        %v2162 = vld [vmem:[%s377 + $0x1c] sm:$0x1]
        %v2163 = vld [vmem:[%s377 + $0x24] sm:$0x1]
        %v2164 = vld [vmem:[%s377 + $0x2c] sm:$0x1]
        %v2165 = vld [vmem:[%s377 + $0x34] sm:$0x1]
        %v2166 = vld [vmem:[%s377 + $0x3c] sm:$0x1]
        %v2175 = vrot.slane %v2160, 7
        %v2176 = vsel %vm906, %v2175, %v2159
        %v2177 = vrot.slane %v2161, 6
        %v2178 = vsel %vm909, %v2177, %v2176
        %v2179 = vrot.slane %v2162, 5
        %v2180 = vsel %vm912, %v2179, %v2178
        %v2181 = vrot.slane %v2163, 4
        %v2182 = vsel %vm915, %v2181, %v2180
        %v2183 = vrot.slane %v2164, 3
        %v2184 = vsel %vm918, %v2183, %v2182
        %v2185 = vrot.slane %v2165, 2
        %v2186 = vsel %vm921, %v2185, %v2184
        %v2187 = vrot.slane %v2166, 1
        %v2188 = vsel %vm924, %v2187, %v2186
        %2190 = vmatprep.subr.mxu0 0.0
        %2191 = vmatpush1.msra.mxu0 %v2188
        %2192 = vmatprep.subr.mxu0 0.0
        %2193 = vmatpush1.msra.mxu0 0.0
        %2194 = vmatprep.subr.mxu0 0.0
        %2195 = vmatpush1.msra.mxu0 0.0
        %2196 = vmatprep.subr.mxu0 0.0
        %2197 = vmatpush1.msra.mxu0 0.0
        %2198 = vmatprep.subr.mxu0 0.0
        %2199 = vmatpush1.msra.mxu0 0.0
        %2200 = vmatprep.subr.mxu0 0.0
        %2201 = vmatpush1.msra.mxu0 0.0
        %2202 = vmatprep.subr.mxu0 0.0
        %2203 = vmatpush1.msra.mxu0 0.0
        %2204 = vmatprep.subr.mxu0 0.0
        %2205 = vmatpush1.msra.mxu0 0.0
        %2206 = vmatprep.subr.mxu0 0.0
        %2207 = vmatpush1.msra.mxu0 0.0
        %2208 = vmatprep.subr.mxu0 0.0
        %2209 = vmatpush1.msra.mxu0 0.0
        %2210 = vmatprep.subr.mxu0 0.0
        %2211 = vmatpush1.msra.mxu0 0.0
        %2212 = vmatprep.subr.mxu0 0.0
        %2213 = vmatpush1.msra.mxu0 0.0
        %2214 = vmatprep.subr.mxu0 0.0
        %2215 = vmatpush1.msra.mxu0 0.0
        %2216 = vmatprep.subr.mxu0 0.0
        %2217 = vmatpush1.msra.mxu0 0.0
        %2218 = vmatprep.subr.mxu0 0.0
        %2219 = vmatpush1.msra.mxu0 0.0
        %2220 = vmatprep.subr.mxu0 0.0
        %2221 = vmatpush1.msra.mxu0 0.0
        %2222 = vmatprep.subr.mxu0 0.0
        %2223 = vmatpush1.msra.mxu0 0.0
        %2224 = vmatprep.subr.mxu0 0.0
        %2225 = vmatpush1.msra.mxu0 0.0
        %2226 = vmatprep.subr.mxu0 0.0
        %2227 = vmatpush1.msra.mxu0 0.0
        %2228 = vmatprep.subr.mxu0 0.0
        %2229 = vmatpush1.msra.mxu0 0.0
        %2230 = vmatprep.subr.mxu0 0.0
        %2231 = vmatpush1.msra.mxu0 0.0
        %2232 = vmatprep.subr.mxu0 0.0
        %2233 = vmatpush1.msra.mxu0 0.0
        %2234 = vmatprep.subr.mxu0 0.0
        %2235 = vmatpush1.msra.mxu0 0.0
        %2236 = vmatprep.subr.mxu0 0.0
        %2237 = vmatpush1.msra.mxu0 0.0
        %2238 = vmatprep.subr.mxu0 0.0
        %2239 = vmatpush1.msra.mxu0 0.0
        %2240 = vmatprep.subr.mxu0 0.0
        %2241 = vmatpush1.msra.mxu0 0.0
        %2242 = vmatprep.subr.mxu0 0.0
        %2243 = vmatpush1.msra.mxu0 0.0
        %2244 = vmatprep.subr.mxu0 0.0
        %2245 = vmatpush1.msra.mxu0 0.0
        %2246 = vmatprep.subr.mxu0 0.0
        %2247 = vmatpush1.msra.mxu0 0.0
        %2248 = vmatprep.subr.mxu0 0.0
        %2249 = vmatpush1.msra.mxu0 0.0
        %2250 = vmatprep.subr.mxu0 0.0
        %2251 = vmatpush1.msra.mxu0 0.0
        %2252 = vmatprep.subr.mxu0 0.0
        %2253 = vmatpush1.msra.mxu0 0.0
        %2254 = vmatprep.mubr.f32.mxu0 0.0
        %2255 = vmatmul.mubr.f32.gmra.mrb[0].mxu0 %v928
        %v2256 = vpop.f32.mrb[0].mxu0
        %v2257 = vadd.f32 0.0, %v2256
        %v2258 = vpop.f32.mrb[0].mxu0
        %2259 = vdwg.mxu0
        %v2260 = vadd.f32 %v2156, %v2257
        %v2261 = vadd.f32 %v2260, %v1004
        %v2262 = vmax.f32 %v2261, 0.0
        %v2263 = vmul.f32 %v2262, %v1011
        %v2264 = vsel %vm562, %v2263, 0.0
        %v2265 = vrot.slane %v2264, 4
        %v2266 = vadd.f32 %v2264, %v2265
        %v2267 = vrot.slane %v2266, 2
        %v2268 = vadd.f32 %v2266, %v2267
        %v2269 = vrot.slane %v2268, 1
        %v2270 = vadd.f32 %v2268, %v2269
        %v2271 = vadd.f32 %v2270, %v1021
        %v2272 = vxor.u32 %v2271, 2147483648
        %v2273 = vmul.f32 %v2272, 1.442695
        %v2274 = vpow.pop %v2273
        %v2275 = vadd.f32 %v2274, 1.0
        %v2276 = vrcp.pop %v2275
        %v2277 = vmul.f32 1.0, %v2276
        %2278 = vst.msk [vmem:[#allocation4 + $0x4] sm:$0x1] %vm1029, %v2277
        %v2279 = vld [vmem:[#allocation2 + $0xa] sm:$0x3]
        %v2280 = vld [vmem:[#allocation2 + $0x1a] sm:$0x3]
        %v2281 = vld [vmem:[#allocation2 + $0x2a] sm:$0x3]
        %v2282 = vld [vmem:[#allocation2 + $0x3a] sm:$0x3]
        %v2283 = vld [vmem:[#allocation3 + $0xa] sm:$0x3]
        %v2284 = vld [vmem:[#allocation3 + $0x1a] sm:$0x3]
        %v2285 = vld [vmem:[#allocation3 + $0x2a] sm:$0x3]
        %v2286 = vld [vmem:[#allocation3 + $0x3a] sm:$0x3]
        %v2291 = vcombine.low %v2283, %v2284
        %v2292 = vcombine.low %v2285, %v2286
        %v2294 = vunpack.c.l.s4 1983009808
        %v2295 = vunpack.c.0.s8 %v2294
        %v2296 = vlaneseq
        %v2297 = vshrl.u32 %v2296, 7
        %v2298 = vsub.s32 %v2295, %v2297
        %v2299 = vrot.slane %v2291, %v2298
        %v2301 = vunpack.c.l.s4 1983009808
        %v2302 = vunpack.c.0.s8 %v2301
        %v2303 = vlaneseq
        %v2304 = vshrl.u32 %v2303, 7
        %v2305 = vsub.s32 %v2302, %v2304
        %v2306 = vrot.slane %v2292, %v2305
        %v2307 = vcombine.low %v2299, %v2306
        %2309 = vmatprep.subr.mxu0 0.0
        %2310 = vmatpush1.msra.mxu0 %v2307
        %2311 = vmatprep.subr.mxu0 0.0
        %2312 = vmatpush1.msra.mxu0 0.0
        %2313 = vmatprep.subr.mxu0 0.0
        %2314 = vmatpush1.msra.mxu0 0.0
        %2315 = vmatprep.subr.mxu0 0.0
        %2316 = vmatpush1.msra.mxu0 0.0
        %2317 = vmatprep.subr.mxu0 0.0
        %2318 = vmatpush1.msra.mxu0 0.0
        %2319 = vmatprep.subr.mxu0 0.0
        %2320 = vmatpush1.msra.mxu0 0.0
        %2321 = vmatprep.subr.mxu0 0.0
        %2322 = vmatpush1.msra.mxu0 0.0
        %2323 = vmatprep.subr.mxu0 0.0
        %2324 = vmatpush1.msra.mxu0 0.0
        %2325 = vmatprep.subr.mxu0 0.0
        %2326 = vmatpush1.msra.mxu0 0.0
        %2327 = vmatprep.subr.mxu0 0.0
        %2328 = vmatpush1.msra.mxu0 0.0
        %2329 = vmatprep.subr.mxu0 0.0
        %2330 = vmatpush1.msra.mxu0 0.0
        %2331 = vmatprep.subr.mxu0 0.0
        %2332 = vmatpush1.msra.mxu0 0.0
        %2333 = vmatprep.subr.mxu0 0.0
        %2334 = vmatpush1.msra.mxu0 0.0
        %2335 = vmatprep.subr.mxu0 0.0
        %2336 = vmatpush1.msra.mxu0 0.0
        %2337 = vmatprep.subr.mxu0 0.0
        %2338 = vmatpush1.msra.mxu0 0.0
        %2339 = vmatprep.subr.mxu0 0.0
        %2340 = vmatpush1.msra.mxu0 0.0
        %2341 = vmatprep.subr.mxu0 0.0
        %2342 = vmatpush1.msra.mxu0 0.0
        %2343 = vmatprep.subr.mxu0 0.0
        %2344 = vmatpush1.msra.mxu0 0.0
        %2345 = vmatprep.subr.mxu0 0.0
        %2346 = vmatpush1.msra.mxu0 0.0
        %2347 = vmatprep.subr.mxu0 0.0
        %2348 = vmatpush1.msra.mxu0 0.0
        %2349 = vmatprep.subr.mxu0 0.0
        %2350 = vmatpush1.msra.mxu0 0.0
        %2351 = vmatprep.subr.mxu0 0.0
        %2352 = vmatpush1.msra.mxu0 0.0
        %2353 = vmatprep.subr.mxu0 0.0
        %2354 = vmatpush1.msra.mxu0 0.0
        %2355 = vmatprep.subr.mxu0 0.0
        %2356 = vmatpush1.msra.mxu0 0.0
        %2357 = vmatprep.subr.mxu0 0.0
        %2358 = vmatpush1.msra.mxu0 0.0
        %2359 = vmatprep.subr.mxu0 0.0
        %2360 = vmatpush1.msra.mxu0 0.0
        %2361 = vmatprep.subr.mxu0 0.0
        %2362 = vmatpush1.msra.mxu0 0.0
        %2363 = vmatprep.subr.mxu0 0.0
        %2364 = vmatpush1.msra.mxu0 0.0
        %2365 = vmatprep.subr.mxu0 0.0
        %2366 = vmatpush1.msra.mxu0 0.0
        %2367 = vmatprep.subr.mxu0 0.0
        %2368 = vmatpush1.msra.mxu0 0.0
        %2369 = vmatprep.subr.mxu0 0.0
        %2370 = vmatpush1.msra.mxu0 0.0
        %2371 = vmatprep.subr.mxu0 0.0
        %2372 = vmatpush1.msra.mxu0 0.0
        %2373 = vmatprep.mubr.f32.mxu0 0.0
        %2374 = vmatmul.mubr.f32.gmra.mrb[0].mxu0 %v722
        %v2375 = vpop.f32.mrb[0].mxu0
        %v2376 = vadd.f32 0.0, %v2375
        %v2377 = vpop.f32.mrb[0].mxu0
        %2378 = vdwg.mxu0
        %v2383 = vcombine.low %v2279, %v2280
        %v2384 = vcombine.low %v2281, %v2282
        %v2386 = vunpack.c.l.s4 1983009808
        %v2387 = vunpack.c.0.s8 %v2386
        %v2388 = vlaneseq
        %v2389 = vshrl.u32 %v2388, 7
        %v2390 = vsub.s32 %v2387, %v2389
        %v2391 = vrot.slane %v2383, %v2390
        %v2393 = vunpack.c.l.s4 1983009808
        %v2394 = vunpack.c.0.s8 %v2393
        %v2395 = vlaneseq
        %v2396 = vshrl.u32 %v2395, 7
        %v2397 = vsub.s32 %v2394, %v2396
        %v2398 = vrot.slane %v2384, %v2397
        %v2399 = vcombine.low %v2391, %v2398
        %2401 = vmatprep.subr.mxu0 0.0
        %2402 = vmatpush1.msra.mxu0 %v2399
        %2403 = vmatprep.subr.mxu0 0.0
        %2404 = vmatpush1.msra.mxu0 0.0
        %2405 = vmatprep.subr.mxu0 0.0
        %2406 = vmatpush1.msra.mxu0 0.0
        %2407 = vmatprep.subr.mxu0 0.0
        %2408 = vmatpush1.msra.mxu0 0.0
        %2409 = vmatprep.subr.mxu0 0.0
        %2410 = vmatpush1.msra.mxu0 0.0
        %2411 = vmatprep.subr.mxu0 0.0
        %2412 = vmatpush1.msra.mxu0 0.0
        %2413 = vmatprep.subr.mxu0 0.0
        %2414 = vmatpush1.msra.mxu0 0.0
        %2415 = vmatprep.subr.mxu0 0.0
        %2416 = vmatpush1.msra.mxu0 0.0
        %2417 = vmatprep.subr.mxu0 0.0
        %2418 = vmatpush1.msra.mxu0 0.0
        %2419 = vmatprep.subr.mxu0 0.0
        %2420 = vmatpush1.msra.mxu0 0.0
        %2421 = vmatprep.subr.mxu0 0.0
        %2422 = vmatpush1.msra.mxu0 0.0
        %2423 = vmatprep.subr.mxu0 0.0
        %2424 = vmatpush1.msra.mxu0 0.0
        %2425 = vmatprep.subr.mxu0 0.0
        %2426 = vmatpush1.msra.mxu0 0.0
        %2427 = vmatprep.subr.mxu0 0.0
        %2428 = vmatpush1.msra.mxu0 0.0
        %2429 = vmatprep.subr.mxu0 0.0
        %2430 = vmatpush1.msra.mxu0 0.0
        %2431 = vmatprep.subr.mxu0 0.0
        %2432 = vmatpush1.msra.mxu0 0.0
        %2433 = vmatprep.subr.mxu0 0.0
        %2434 = vmatpush1.msra.mxu0 0.0
        %2435 = vmatprep.subr.mxu0 0.0
        %2436 = vmatpush1.msra.mxu0 0.0
        %2437 = vmatprep.subr.mxu0 0.0
        %2438 = vmatpush1.msra.mxu0 0.0
        %2439 = vmatprep.subr.mxu0 0.0
        %2440 = vmatpush1.msra.mxu0 0.0
        %2441 = vmatprep.subr.mxu0 0.0
        %2442 = vmatpush1.msra.mxu0 0.0
        %2443 = vmatprep.subr.mxu0 0.0
        %2444 = vmatpush1.msra.mxu0 0.0
        %2445 = vmatprep.subr.mxu0 0.0
        %2446 = vmatpush1.msra.mxu0 0.0
        %2447 = vmatprep.subr.mxu0 0.0
        %2448 = vmatpush1.msra.mxu0 0.0
        %2449 = vmatprep.subr.mxu0 0.0
        %2450 = vmatpush1.msra.mxu0 0.0
        %2451 = vmatprep.subr.mxu0 0.0
        %2452 = vmatpush1.msra.mxu0 0.0
        %2453 = vmatprep.subr.mxu0 0.0
        %2454 = vmatpush1.msra.mxu0 0.0
        %2455 = vmatprep.subr.mxu0 0.0
        %2456 = vmatpush1.msra.mxu0 0.0
        %2457 = vmatprep.subr.mxu0 0.0
        %2458 = vmatpush1.msra.mxu0 0.0
        %2459 = vmatprep.subr.mxu0 0.0
        %2460 = vmatpush1.msra.mxu0 0.0
        %2461 = vmatprep.subr.mxu0 0.0
        %2462 = vmatpush1.msra.mxu0 0.0
        %2463 = vmatprep.subr.mxu0 0.0
        %2464 = vmatpush1.msra.mxu0 0.0
        %2465 = vmatprep.mubr.f32.mxu0 0.0
        %2466 = vmatmul.mubr.f32.gmra.mrb[0].mxu0 %v817
        %v2467 = vpop.f32.mrb[0].mxu0
        %v2468 = vadd.f32 %v2376, %v2467
        %v2469 = vpop.f32.mrb[0].mxu0
        %2470 = vdwg.mxu0
        %v2471 = vld [vmem:[%s377 + $0x5] sm:$0x1]
        %v2472 = vld [vmem:[%s377 + $0xd] sm:$0x1]
        %v2473 = vld [vmem:[%s377 + $0x15] sm:$0x1]
        %v2474 = vld [vmem:[%s377 + $0x1d] sm:$0x1]
        %v2475 = vld [vmem:[%s377 + $0x25] sm:$0x1]
        %v2476 = vld [vmem:[%s377 + $0x2d] sm:$0x1]
        %v2477 = vld [vmem:[%s377 + $0x35] sm:$0x1]
        %v2478 = vld [vmem:[%s377 + $0x3d] sm:$0x1]
        %v2487 = vrot.slane %v2472, 7
        %v2488 = vsel %vm906, %v2487, %v2471
        %v2489 = vrot.slane %v2473, 6
        %v2490 = vsel %vm909, %v2489, %v2488
        %v2491 = vrot.slane %v2474, 5
        %v2492 = vsel %vm912, %v2491, %v2490
        %v2493 = vrot.slane %v2475, 4
        %v2494 = vsel %vm915, %v2493, %v2492
        %v2495 = vrot.slane %v2476, 3
        %v2496 = vsel %vm918, %v2495, %v2494
        %v2497 = vrot.slane %v2477, 2
        %v2498 = vsel %vm921, %v2497, %v2496
        %v2499 = vrot.slane %v2478, 1
        %v2500 = vsel %vm924, %v2499, %v2498
        %2502 = vmatprep.subr.mxu0 0.0
        %2503 = vmatpush1.msra.mxu0 %v2500
        %2504 = vmatprep.subr.mxu0 0.0
        %2505 = vmatpush1.msra.mxu0 0.0
        %2506 = vmatprep.subr.mxu0 0.0
        %2507 = vmatpush1.msra.mxu0 0.0
        %2508 = vmatprep.subr.mxu0 0.0
        %2509 = vmatpush1.msra.mxu0 0.0
        %2510 = vmatprep.subr.mxu0 0.0
        %2511 = vmatpush1.msra.mxu0 0.0
        %2512 = vmatprep.subr.mxu0 0.0
        %2513 = vmatpush1.msra.mxu0 0.0
        %2514 = vmatprep.subr.mxu0 0.0
        %2515 = vmatpush1.msra.mxu0 0.0
        %2516 = vmatprep.subr.mxu0 0.0
        %2517 = vmatpush1.msra.mxu0 0.0
        %2518 = vmatprep.subr.mxu0 0.0
        %2519 = vmatpush1.msra.mxu0 0.0
        %2520 = vmatprep.subr.mxu0 0.0
        %2521 = vmatpush1.msra.mxu0 0.0
        %2522 = vmatprep.subr.mxu0 0.0
        %2523 = vmatpush1.msra.mxu0 0.0
        %2524 = vmatprep.subr.mxu0 0.0
        %2525 = vmatpush1.msra.mxu0 0.0
        %2526 = vmatprep.subr.mxu0 0.0
        %2527 = vmatpush1.msra.mxu0 0.0
        %2528 = vmatprep.subr.mxu0 0.0
        %2529 = vmatpush1.msra.mxu0 0.0
        %2530 = vmatprep.subr.mxu0 0.0
        %2531 = vmatpush1.msra.mxu0 0.0
        %2532 = vmatprep.subr.mxu0 0.0
        %2533 = vmatpush1.msra.mxu0 0.0
        %2534 = vmatprep.subr.mxu0 0.0
        %2535 = vmatpush1.msra.mxu0 0.0
        %2536 = vmatprep.subr.mxu0 0.0
        %2537 = vmatpush1.msra.mxu0 0.0
        %2538 = vmatprep.subr.mxu0 0.0
        %2539 = vmatpush1.msra.mxu0 0.0
        %2540 = vmatprep.subr.mxu0 0.0
        %2541 = vmatpush1.msra.mxu0 0.0
        %2542 = vmatprep.subr.mxu0 0.0
        %2543 = vmatpush1.msra.mxu0 0.0
        %2544 = vmatprep.subr.mxu0 0.0
        %2545 = vmatpush1.msra.mxu0 0.0
        %2546 = vmatprep.subr.mxu0 0.0
        %2547 = vmatpush1.msra.mxu0 0.0
        %2548 = vmatprep.subr.mxu0 0.0
        %2549 = vmatpush1.msra.mxu0 0.0
        %2550 = vmatprep.subr.mxu0 0.0
        %2551 = vmatpush1.msra.mxu0 0.0
        %2552 = vmatprep.subr.mxu0 0.0
        %2553 = vmatpush1.msra.mxu0 0.0
        %2554 = vmatprep.subr.mxu0 0.0
        %2555 = vmatpush1.msra.mxu0 0.0
        %2556 = vmatprep.subr.mxu0 0.0
        %2557 = vmatpush1.msra.mxu0 0.0
        %2558 = vmatprep.subr.mxu0 0.0
        %2559 = vmatpush1.msra.mxu0 0.0
        %2560 = vmatprep.subr.mxu0 0.0
        %2561 = vmatpush1.msra.mxu0 0.0
        %2562 = vmatprep.subr.mxu0 0.0
        %2563 = vmatpush1.msra.mxu0 0.0
        %2564 = vmatprep.subr.mxu0 0.0
        %2565 = vmatpush1.msra.mxu0 0.0
        %2566 = vmatprep.mubr.f32.mxu0 0.0
        %2567 = vmatmul.mubr.f32.gmra.mrb[0].mxu0 %v928
        %v2568 = vpop.f32.mrb[0].mxu0
        %v2569 = vadd.f32 0.0, %v2568
        %v2570 = vpop.f32.mrb[0].mxu0
        %2571 = vdwg.mxu0
        %v2572 = vadd.f32 %v2468, %v2569
        %v2573 = vadd.f32 %v2572, %v1004
        %v2574 = vmax.f32 %v2573, 0.0
        %v2575 = vmul.f32 %v2574, %v1011
        %v2576 = vsel %vm562, %v2575, 0.0
        %v2577 = vrot.slane %v2576, 4
        %v2578 = vadd.f32 %v2576, %v2577
        %v2579 = vrot.slane %v2578, 2
        %v2580 = vadd.f32 %v2578, %v2579
        %v2581 = vrot.slane %v2580, 1
        %v2582 = vadd.f32 %v2580, %v2581
        %v2583 = vadd.f32 %v2582, %v1021
        %v2584 = vxor.u32 %v2583, 2147483648
        %v2585 = vmul.f32 %v2584, 1.442695
        %v2586 = vpow.pop %v2585
        %v2587 = vadd.f32 %v2586, 1.0
        %v2588 = vrcp.pop %v2587
        %v2589 = vmul.f32 1.0, %v2588
        %2590 = vst.msk [vmem:[#allocation4 + $0x5] sm:$0x1] %vm1029, %v2589
        %v2591 = vld [vmem:[#allocation2 + $0xc] sm:$0x3]
        %v2592 = vld [vmem:[#allocation2 + $0x1c] sm:$0x3]
        %v2593 = vld [vmem:[#allocation2 + $0x2c] sm:$0x3]
        %v2594 = vld [vmem:[#allocation2 + $0x3c] sm:$0x3]
        %v2595 = vld [vmem:[#allocation3 + $0xc] sm:$0x3]
        %v2596 = vld [vmem:[#allocation3 + $0x1c] sm:$0x3]
        %v2597 = vld [vmem:[#allocation3 + $0x2c] sm:$0x3]
        %v2598 = vld [vmem:[#allocation3 + $0x3c] sm:$0x3]
        %v2603 = vcombine.low %v2595, %v2596
        %v2604 = vcombine.low %v2597, %v2598
        %v2606 = vunpack.c.l.s4 1983009808
        %v2607 = vunpack.c.0.s8 %v2606
        %v2608 = vlaneseq
        %v2609 = vshrl.u32 %v2608, 7
        %v2610 = vsub.s32 %v2607, %v2609
        %v2611 = vrot.slane %v2603, %v2610
        %v2613 = vunpack.c.l.s4 1983009808
        %v2614 = vunpack.c.0.s8 %v2613
        %v2615 = vlaneseq
        %v2616 = vshrl.u32 %v2615, 7
        %v2617 = vsub.s32 %v2614, %v2616
        %v2618 = vrot.slane %v2604, %v2617
        %v2619 = vcombine.low %v2611, %v2618
        %2621 = vmatprep.subr.mxu0 0.0
        %2622 = vmatpush1.msra.mxu0 %v2619
        %2623 = vmatprep.subr.mxu0 0.0
        %2624 = vmatpush1.msra.mxu0 0.0
        %2625 = vmatprep.subr.mxu0 0.0
        %2626 = vmatpush1.msra.mxu0 0.0
        %2627 = vmatprep.subr.mxu0 0.0
        %2628 = vmatpush1.msra.mxu0 0.0
        %2629 = vmatprep.subr.mxu0 0.0
        %2630 = vmatpush1.msra.mxu0 0.0
        %2631 = vmatprep.subr.mxu0 0.0
        %2632 = vmatpush1.msra.mxu0 0.0
        %2633 = vmatprep.subr.mxu0 0.0
        %2634 = vmatpush1.msra.mxu0 0.0
        %2635 = vmatprep.subr.mxu0 0.0
        %2636 = vmatpush1.msra.mxu0 0.0
        %2637 = vmatprep.subr.mxu0 0.0
        %2638 = vmatpush1.msra.mxu0 0.0
        %2639 = vmatprep.subr.mxu0 0.0
        %2640 = vmatpush1.msra.mxu0 0.0
        %2641 = vmatprep.subr.mxu0 0.0
        %2642 = vmatpush1.msra.mxu0 0.0
        %2643 = vmatprep.subr.mxu0 0.0
        %2644 = vmatpush1.msra.mxu0 0.0
        %2645 = vmatprep.subr.mxu0 0.0
        %2646 = vmatpush1.msra.mxu0 0.0
        %2647 = vmatprep.subr.mxu0 0.0
        %2648 = vmatpush1.msra.mxu0 0.0
        %2649 = vmatprep.subr.mxu0 0.0
        %2650 = vmatpush1.msra.mxu0 0.0
        %2651 = vmatprep.subr.mxu0 0.0
        %2652 = vmatpush1.msra.mxu0 0.0
        %2653 = vmatprep.subr.mxu0 0.0
        %2654 = vmatpush1.msra.mxu0 0.0
        %2655 = vmatprep.subr.mxu0 0.0
        %2656 = vmatpush1.msra.mxu0 0.0
        %2657 = vmatprep.subr.mxu0 0.0
        %2658 = vmatpush1.msra.mxu0 0.0
        %2659 = vmatprep.subr.mxu0 0.0
        %2660 = vmatpush1.msra.mxu0 0.0
        %2661 = vmatprep.subr.mxu0 0.0
        %2662 = vmatpush1.msra.mxu0 0.0
        %2663 = vmatprep.subr.mxu0 0.0
        %2664 = vmatpush1.msra.mxu0 0.0
        %2665 = vmatprep.subr.mxu0 0.0
        %2666 = vmatpush1.msra.mxu0 0.0
        %2667 = vmatprep.subr.mxu0 0.0
        %2668 = vmatpush1.msra.mxu0 0.0
        %2669 = vmatprep.subr.mxu0 0.0
        %2670 = vmatpush1.msra.mxu0 0.0
        %2671 = vmatprep.subr.mxu0 0.0
        %2672 = vmatpush1.msra.mxu0 0.0
        %2673 = vmatprep.subr.mxu0 0.0
        %2674 = vmatpush1.msra.mxu0 0.0
        %2675 = vmatprep.subr.mxu0 0.0
        %2676 = vmatpush1.msra.mxu0 0.0
        %2677 = vmatprep.subr.mxu0 0.0
        %2678 = vmatpush1.msra.mxu0 0.0
        %2679 = vmatprep.subr.mxu0 0.0
        %2680 = vmatpush1.msra.mxu0 0.0
        %2681 = vmatprep.subr.mxu0 0.0
        %2682 = vmatpush1.msra.mxu0 0.0
        %2683 = vmatprep.subr.mxu0 0.0
        %2684 = vmatpush1.msra.mxu0 0.0
        %2685 = vmatprep.mubr.f32.mxu0 0.0
        %2686 = vmatmul.mubr.f32.gmra.mrb[0].mxu0 %v722
        %v2687 = vpop.f32.mrb[0].mxu0
        %v2688 = vadd.f32 0.0, %v2687
        %v2689 = vpop.f32.mrb[0].mxu0
        %2690 = vdwg.mxu0
        %v2695 = vcombine.low %v2591, %v2592
        %v2696 = vcombine.low %v2593, %v2594
        %v2698 = vunpack.c.l.s4 1983009808
        %v2699 = vunpack.c.0.s8 %v2698
        %v2700 = vlaneseq
        %v2701 = vshrl.u32 %v2700, 7
        %v2702 = vsub.s32 %v2699, %v2701
        %v2703 = vrot.slane %v2695, %v2702
        %v2705 = vunpack.c.l.s4 1983009808
        %v2706 = vunpack.c.0.s8 %v2705
        %v2707 = vlaneseq
        %v2708 = vshrl.u32 %v2707, 7
        %v2709 = vsub.s32 %v2706, %v2708
        %v2710 = vrot.slane %v2696, %v2709
        %v2711 = vcombine.low %v2703, %v2710
        %2713 = vmatprep.subr.mxu0 0.0
        %2714 = vmatpush1.msra.mxu0 %v2711
        %2715 = vmatprep.subr.mxu0 0.0
        %2716 = vmatpush1.msra.mxu0 0.0
        %2717 = vmatprep.subr.mxu0 0.0
        %2718 = vmatpush1.msra.mxu0 0.0
        %2719 = vmatprep.subr.mxu0 0.0
        %2720 = vmatpush1.msra.mxu0 0.0
        %2721 = vmatprep.subr.mxu0 0.0
        %2722 = vmatpush1.msra.mxu0 0.0
        %2723 = vmatprep.subr.mxu0 0.0
        %2724 = vmatpush1.msra.mxu0 0.0
        %2725 = vmatprep.subr.mxu0 0.0
        %2726 = vmatpush1.msra.mxu0 0.0
        %2727 = vmatprep.subr.mxu0 0.0
        %2728 = vmatpush1.msra.mxu0 0.0
        %2729 = vmatprep.subr.mxu0 0.0
        %2730 = vmatpush1.msra.mxu0 0.0
        %2731 = vmatprep.subr.mxu0 0.0
        %2732 = vmatpush1.msra.mxu0 0.0
        %2733 = vmatprep.subr.mxu0 0.0
        %2734 = vmatpush1.msra.mxu0 0.0
        %2735 = vmatprep.subr.mxu0 0.0
        %2736 = vmatpush1.msra.mxu0 0.0
        %2737 = vmatprep.subr.mxu0 0.0
        %2738 = vmatpush1.msra.mxu0 0.0
        %2739 = vmatprep.subr.mxu0 0.0
        %2740 = vmatpush1.msra.mxu0 0.0
        %2741 = vmatprep.subr.mxu0 0.0
        %2742 = vmatpush1.msra.mxu0 0.0
        %2743 = vmatprep.subr.mxu0 0.0
        %2744 = vmatpush1.msra.mxu0 0.0
        %2745 = vmatprep.subr.mxu0 0.0
        %2746 = vmatpush1.msra.mxu0 0.0
        %2747 = vmatprep.subr.mxu0 0.0
        %2748 = vmatpush1.msra.mxu0 0.0
        %2749 = vmatprep.subr.mxu0 0.0
        %2750 = vmatpush1.msra.mxu0 0.0
        %2751 = vmatprep.subr.mxu0 0.0
        %2752 = vmatpush1.msra.mxu0 0.0
        %2753 = vmatprep.subr.mxu0 0.0
        %2754 = vmatpush1.msra.mxu0 0.0
        %2755 = vmatprep.subr.mxu0 0.0
        %2756 = vmatpush1.msra.mxu0 0.0
        %2757 = vmatprep.subr.mxu0 0.0
        %2758 = vmatpush1.msra.mxu0 0.0
        %2759 = vmatprep.subr.mxu0 0.0
        %2760 = vmatpush1.msra.mxu0 0.0
        %2761 = vmatprep.subr.mxu0 0.0
        %2762 = vmatpush1.msra.mxu0 0.0
        %2763 = vmatprep.subr.mxu0 0.0
        %2764 = vmatpush1.msra.mxu0 0.0
        %2765 = vmatprep.subr.mxu0 0.0
        %2766 = vmatpush1.msra.mxu0 0.0
        %2767 = vmatprep.subr.mxu0 0.0
        %2768 = vmatpush1.msra.mxu0 0.0
        %2769 = vmatprep.subr.mxu0 0.0
        %2770 = vmatpush1.msra.mxu0 0.0
        %2771 = vmatprep.subr.mxu0 0.0
        %2772 = vmatpush1.msra.mxu0 0.0
        %2773 = vmatprep.subr.mxu0 0.0
        %2774 = vmatpush1.msra.mxu0 0.0
        %2775 = vmatprep.subr.mxu0 0.0
        %2776 = vmatpush1.msra.mxu0 0.0
        %2777 = vmatprep.mubr.f32.mxu0 0.0
        %2778 = vmatmul.mubr.f32.gmra.mrb[0].mxu0 %v817
        %v2779 = vpop.f32.mrb[0].mxu0
        %v2780 = vadd.f32 %v2688, %v2779
        %v2781 = vpop.f32.mrb[0].mxu0
        %2782 = vdwg.mxu0
        %v2783 = vld [vmem:[%s377 + $0x6] sm:$0x1]
        %v2784 = vld [vmem:[%s377 + $0xe] sm:$0x1]
        %v2785 = vld [vmem:[%s377 + $0x16] sm:$0x1]
        %v2786 = vld [vmem:[%s377 + $0x1e] sm:$0x1]
        %v2787 = vld [vmem:[%s377 + $0x26] sm:$0x1]
        %v2788 = vld [vmem:[%s377 + $0x2e] sm:$0x1]
        %v2789 = vld [vmem:[%s377 + $0x36] sm:$0x1]
        %v2790 = vld [vmem:[%s377 + $0x3e] sm:$0x1]
        %v2799 = vrot.slane %v2784, 7
        %v2800 = vsel %vm906, %v2799, %v2783
        %v2801 = vrot.slane %v2785, 6
        %v2802 = vsel %vm909, %v2801, %v2800
        %v2803 = vrot.slane %v2786, 5
        %v2804 = vsel %vm912, %v2803, %v2802
        %v2805 = vrot.slane %v2787, 4
        %v2806 = vsel %vm915, %v2805, %v2804
        %v2807 = vrot.slane %v2788, 3
        %v2808 = vsel %vm918, %v2807, %v2806
        %v2809 = vrot.slane %v2789, 2
        %v2810 = vsel %vm921, %v2809, %v2808
        %v2811 = vrot.slane %v2790, 1
        %v2812 = vsel %vm924, %v2811, %v2810
        %2814 = vmatprep.subr.mxu0 0.0
        %2815 = vmatpush1.msra.mxu0 %v2812
        %2816 = vmatprep.subr.mxu0 0.0
        %2817 = vmatpush1.msra.mxu0 0.0
        %2818 = vmatprep.subr.mxu0 0.0
        %2819 = vmatpush1.msra.mxu0 0.0
        %2820 = vmatprep.subr.mxu0 0.0
        %2821 = vmatpush1.msra.mxu0 0.0
        %2822 = vmatprep.subr.mxu0 0.0
        %2823 = vmatpush1.msra.mxu0 0.0
        %2824 = vmatprep.subr.mxu0 0.0
        %2825 = vmatpush1.msra.mxu0 0.0
        %2826 = vmatprep.subr.mxu0 0.0
        %2827 = vmatpush1.msra.mxu0 0.0
        %2828 = vmatprep.subr.mxu0 0.0
        %2829 = vmatpush1.msra.mxu0 0.0
        %2830 = vmatprep.subr.mxu0 0.0
        %2831 = vmatpush1.msra.mxu0 0.0
        %2832 = vmatprep.subr.mxu0 0.0
        %2833 = vmatpush1.msra.mxu0 0.0
        %2834 = vmatprep.subr.mxu0 0.0
        %2835 = vmatpush1.msra.mxu0 0.0
        %2836 = vmatprep.subr.mxu0 0.0
        %2837 = vmatpush1.msra.mxu0 0.0
        %2838 = vmatprep.subr.mxu0 0.0
        %2839 = vmatpush1.msra.mxu0 0.0
        %2840 = vmatprep.subr.mxu0 0.0
        %2841 = vmatpush1.msra.mxu0 0.0
        %2842 = vmatprep.subr.mxu0 0.0
        %2843 = vmatpush1.msra.mxu0 0.0
        %2844 = vmatprep.subr.mxu0 0.0
        %2845 = vmatpush1.msra.mxu0 0.0
        %2846 = vmatprep.subr.mxu0 0.0
        %2847 = vmatpush1.msra.mxu0 0.0
        %2848 = vmatprep.subr.mxu0 0.0
        %2849 = vmatpush1.msra.mxu0 0.0
        %2850 = vmatprep.subr.mxu0 0.0
        %2851 = vmatpush1.msra.mxu0 0.0
        %2852 = vmatprep.subr.mxu0 0.0
        %2853 = vmatpush1.msra.mxu0 0.0
        %2854 = vmatprep.subr.mxu0 0.0
        %2855 = vmatpush1.msra.mxu0 0.0
        %2856 = vmatprep.subr.mxu0 0.0
        %2857 = vmatpush1.msra.mxu0 0.0
        %2858 = vmatprep.subr.mxu0 0.0
        %2859 = vmatpush1.msra.mxu0 0.0
        %2860 = vmatprep.subr.mxu0 0.0
        %2861 = vmatpush1.msra.mxu0 0.0
        %2862 = vmatprep.subr.mxu0 0.0
        %2863 = vmatpush1.msra.mxu0 0.0
        %2864 = vmatprep.subr.mxu0 0.0
        %2865 = vmatpush1.msra.mxu0 0.0
        %2866 = vmatprep.subr.mxu0 0.0
        %2867 = vmatpush1.msra.mxu0 0.0
        %2868 = vmatprep.subr.mxu0 0.0
        %2869 = vmatpush1.msra.mxu0 0.0
        %2870 = vmatprep.subr.mxu0 0.0
        %2871 = vmatpush1.msra.mxu0 0.0
        %2872 = vmatprep.subr.mxu0 0.0
        %2873 = vmatpush1.msra.mxu0 0.0
        %2874 = vmatprep.subr.mxu0 0.0
        %2875 = vmatpush1.msra.mxu0 0.0
        %2876 = vmatprep.subr.mxu0 0.0
        %2877 = vmatpush1.msra.mxu0 0.0
        %2878 = vmatprep.mubr.f32.mxu0 0.0
        %2879 = vmatmul.mubr.f32.gmra.mrb[0].mxu0 %v928
        %v2880 = vpop.f32.mrb[0].mxu0
        %v2881 = vadd.f32 0.0, %v2880
        %v2882 = vpop.f32.mrb[0].mxu0
        %2883 = vdwg.mxu0
        %v2884 = vadd.f32 %v2780, %v2881
        %v2885 = vadd.f32 %v2884, %v1004
        %v2886 = vmax.f32 %v2885, 0.0
        %v2887 = vmul.f32 %v2886, %v1011
        %v2888 = vsel %vm562, %v2887, 0.0
        %v2889 = vrot.slane %v2888, 4
        %v2890 = vadd.f32 %v2888, %v2889
        %v2891 = vrot.slane %v2890, 2
        %v2892 = vadd.f32 %v2890, %v2891
        %v2893 = vrot.slane %v2892, 1
        %v2894 = vadd.f32 %v2892, %v2893
        %v2895 = vadd.f32 %v2894, %v1021
        %v2896 = vxor.u32 %v2895, 2147483648
        %v2897 = vmul.f32 %v2896, 1.442695
        %v2898 = vpow.pop %v2897
        %v2899 = vadd.f32 %v2898, 1.0
        %v2900 = vrcp.pop %v2899
        %v2901 = vmul.f32 1.0, %v2900
        %2902 = vst.msk [vmem:[#allocation4 + $0x6] sm:$0x1] %vm1029, %v2901
        %v2903 = vld [vmem:[#allocation2 + $0xe] sm:$0x3]
        %v2904 = vld [vmem:[#allocation2 + $0x1e] sm:$0x3]
        %v2905 = vld [vmem:[#allocation2 + $0x2e] sm:$0x3]
        %v2906 = vld [vmem:[#allocation2 + $0x3e] sm:$0x3]
        %v2907 = vld [vmem:[#allocation3 + $0xe] sm:$0x3]
        %v2908 = vld [vmem:[#allocation3 + $0x1e] sm:$0x3]
        %v2909 = vld [vmem:[#allocation3 + $0x2e] sm:$0x3]
        %v2910 = vld [vmem:[#allocation3 + $0x3e] sm:$0x3]
        %v2915 = vcombine.low %v2907, %v2908
        %v2916 = vcombine.low %v2909, %v2910
        %v2918 = vunpack.c.l.s4 1983009808
        %v2919 = vunpack.c.0.s8 %v2918
        %v2920 = vlaneseq
        %v2921 = vshrl.u32 %v2920, 7
        %v2922 = vsub.s32 %v2919, %v2921
        %v2923 = vrot.slane %v2915, %v2922
        %v2925 = vunpack.c.l.s4 1983009808
        %v2926 = vunpack.c.0.s8 %v2925
        %v2927 = vlaneseq
        %v2928 = vshrl.u32 %v2927, 7
        %v2929 = vsub.s32 %v2926, %v2928
        %v2930 = vrot.slane %v2916, %v2929
        %v2931 = vcombine.low %v2923, %v2930
        %2933 = vmatprep.subr.mxu0 0.0
        %2934 = vmatpush1.msra.mxu0 %v2931
        %2935 = vmatprep.subr.mxu0 0.0
        %2936 = vmatpush1.msra.mxu0 0.0
        %2937 = vmatprep.subr.mxu0 0.0
        %2938 = vmatpush1.msra.mxu0 0.0
        %2939 = vmatprep.subr.mxu0 0.0
        %2940 = vmatpush1.msra.mxu0 0.0
        %2941 = vmatprep.subr.mxu0 0.0
        %2942 = vmatpush1.msra.mxu0 0.0
        %2943 = vmatprep.subr.mxu0 0.0
        %2944 = vmatpush1.msra.mxu0 0.0
        %2945 = vmatprep.subr.mxu0 0.0
        %2946 = vmatpush1.msra.mxu0 0.0
        %2947 = vmatprep.subr.mxu0 0.0
        %2948 = vmatpush1.msra.mxu0 0.0
        %2949 = vmatprep.subr.mxu0 0.0
        %2950 = vmatpush1.msra.mxu0 0.0
        %2951 = vmatprep.subr.mxu0 0.0
        %2952 = vmatpush1.msra.mxu0 0.0
        %2953 = vmatprep.subr.mxu0 0.0
        %2954 = vmatpush1.msra.mxu0 0.0
        %2955 = vmatprep.subr.mxu0 0.0
        %2956 = vmatpush1.msra.mxu0 0.0
        %2957 = vmatprep.subr.mxu0 0.0
        %2958 = vmatpush1.msra.mxu0 0.0
        %2959 = vmatprep.subr.mxu0 0.0
        %2960 = vmatpush1.msra.mxu0 0.0
        %2961 = vmatprep.subr.mxu0 0.0
        %2962 = vmatpush1.msra.mxu0 0.0
        %2963 = vmatprep.subr.mxu0 0.0
        %2964 = vmatpush1.msra.mxu0 0.0
        %2965 = vmatprep.subr.mxu0 0.0
        %2966 = vmatpush1.msra.mxu0 0.0
        %2967 = vmatprep.subr.mxu0 0.0
        %2968 = vmatpush1.msra.mxu0 0.0
        %2969 = vmatprep.subr.mxu0 0.0
        %2970 = vmatpush1.msra.mxu0 0.0
        %2971 = vmatprep.subr.mxu0 0.0
        %2972 = vmatpush1.msra.mxu0 0.0
        %2973 = vmatprep.subr.mxu0 0.0
        %2974 = vmatpush1.msra.mxu0 0.0
        %2975 = vmatprep.subr.mxu0 0.0
        %2976 = vmatpush1.msra.mxu0 0.0
        %2977 = vmatprep.subr.mxu0 0.0
        %2978 = vmatpush1.msra.mxu0 0.0
        %2979 = vmatprep.subr.mxu0 0.0
        %2980 = vmatpush1.msra.mxu0 0.0
        %2981 = vmatprep.subr.mxu0 0.0
        %2982 = vmatpush1.msra.mxu0 0.0
        %2983 = vmatprep.subr.mxu0 0.0
        %2984 = vmatpush1.msra.mxu0 0.0
        %2985 = vmatprep.subr.mxu0 0.0
        %2986 = vmatpush1.msra.mxu0 0.0
        %2987 = vmatprep.subr.mxu0 0.0
        %2988 = vmatpush1.msra.mxu0 0.0
        %2989 = vmatprep.subr.mxu0 0.0
        %2990 = vmatpush1.msra.mxu0 0.0
        %2991 = vmatprep.subr.mxu0 0.0
        %2992 = vmatpush1.msra.mxu0 0.0
        %2993 = vmatprep.subr.mxu0 0.0
        %2994 = vmatpush1.msra.mxu0 0.0
        %2995 = vmatprep.subr.mxu0 0.0
        %2996 = vmatpush1.msra.mxu0 0.0
        %2997 = vmatprep.mubr.f32.mxu0 0.0
        %2998 = vmatmul.mubr.f32.gmra.mrb[0].mxu0 %v722
        %v2999 = vpop.f32.mrb[0].mxu0
        %v3000 = vadd.f32 0.0, %v2999
        %v3001 = vpop.f32.mrb[0].mxu0
        %3002 = vdwg.mxu0
        %v3007 = vcombine.low %v2903, %v2904
        %v3008 = vcombine.low %v2905, %v2906
        %v3010 = vunpack.c.l.s4 1983009808
        %v3011 = vunpack.c.0.s8 %v3010
        %v3012 = vlaneseq
        %v3013 = vshrl.u32 %v3012, 7
        %v3014 = vsub.s32 %v3011, %v3013
        %v3015 = vrot.slane %v3007, %v3014
        %v3017 = vunpack.c.l.s4 1983009808
        %v3018 = vunpack.c.0.s8 %v3017
        %v3019 = vlaneseq
        %v3020 = vshrl.u32 %v3019, 7
        %v3021 = vsub.s32 %v3018, %v3020
        %v3022 = vrot.slane %v3008, %v3021
        %v3023 = vcombine.low %v3015, %v3022
        %3025 = vmatprep.subr.mxu0 0.0
        %3026 = vmatpush1.msra.mxu0 %v3023
        %3027 = vmatprep.subr.mxu0 0.0
        %3028 = vmatpush1.msra.mxu0 0.0
        %3029 = vmatprep.subr.mxu0 0.0
        %3030 = vmatpush1.msra.mxu0 0.0
        %3031 = vmatprep.subr.mxu0 0.0
        %3032 = vmatpush1.msra.mxu0 0.0
        %3033 = vmatprep.subr.mxu0 0.0
        %3034 = vmatpush1.msra.mxu0 0.0
        %3035 = vmatprep.subr.mxu0 0.0
        %3036 = vmatpush1.msra.mxu0 0.0
        %3037 = vmatprep.subr.mxu0 0.0
        %3038 = vmatpush1.msra.mxu0 0.0
        %3039 = vmatprep.subr.mxu0 0.0
        %3040 = vmatpush1.msra.mxu0 0.0
        %3041 = vmatprep.subr.mxu0 0.0
        %3042 = vmatpush1.msra.mxu0 0.0
        %3043 = vmatprep.subr.mxu0 0.0
        %3044 = vmatpush1.msra.mxu0 0.0
        %3045 = vmatprep.subr.mxu0 0.0
        %3046 = vmatpush1.msra.mxu0 0.0
        %3047 = vmatprep.subr.mxu0 0.0
        %3048 = vmatpush1.msra.mxu0 0.0
        %3049 = vmatprep.subr.mxu0 0.0
        %3050 = vmatpush1.msra.mxu0 0.0
        %3051 = vmatprep.subr.mxu0 0.0
        %3052 = vmatpush1.msra.mxu0 0.0
        %3053 = vmatprep.subr.mxu0 0.0
        %3054 = vmatpush1.msra.mxu0 0.0
        %3055 = vmatprep.subr.mxu0 0.0
        %3056 = vmatpush1.msra.mxu0 0.0
        %3057 = vmatprep.subr.mxu0 0.0
        %3058 = vmatpush1.msra.mxu0 0.0
        %3059 = vmatprep.subr.mxu0 0.0
        %3060 = vmatpush1.msra.mxu0 0.0
        %3061 = vmatprep.subr.mxu0 0.0
        %3062 = vmatpush1.msra.mxu0 0.0
        %3063 = vmatprep.subr.mxu0 0.0
        %3064 = vmatpush1.msra.mxu0 0.0
        %3065 = vmatprep.subr.mxu0 0.0
        %3066 = vmatpush1.msra.mxu0 0.0
        %3067 = vmatprep.subr.mxu0 0.0
        %3068 = vmatpush1.msra.mxu0 0.0
        %3069 = vmatprep.subr.mxu0 0.0
        %3070 = vmatpush1.msra.mxu0 0.0
        %3071 = vmatprep.subr.mxu0 0.0
        %3072 = vmatpush1.msra.mxu0 0.0
        %3073 = vmatprep.subr.mxu0 0.0
        %3074 = vmatpush1.msra.mxu0 0.0
        %3075 = vmatprep.subr.mxu0 0.0
        %3076 = vmatpush1.msra.mxu0 0.0
        %3077 = vmatprep.subr.mxu0 0.0
        %3078 = vmatpush1.msra.mxu0 0.0
        %3079 = vmatprep.subr.mxu0 0.0
        %3080 = vmatpush1.msra.mxu0 0.0
        %3081 = vmatprep.subr.mxu0 0.0
        %3082 = vmatpush1.msra.mxu0 0.0
        %3083 = vmatprep.subr.mxu0 0.0
        %3084 = vmatpush1.msra.mxu0 0.0
        %3085 = vmatprep.subr.mxu0 0.0
        %3086 = vmatpush1.msra.mxu0 0.0
        %3087 = vmatprep.subr.mxu0 0.0
        %3088 = vmatpush1.msra.mxu0 0.0
        %3089 = vmatprep.mubr.f32.mxu0 0.0
        %3090 = vmatmul.mubr.f32.gmra.mrb[0].mxu0 %v817
        %v3091 = vpop.f32.mrb[0].mxu0
        %v3092 = vadd.f32 %v3000, %v3091
        %v3093 = vpop.f32.mrb[0].mxu0
        %3094 = vdwg.mxu0
        %v3095 = vld [vmem:[%s377 + $0x7] sm:$0x1]
        %v3096 = vld [vmem:[%s377 + $0xf] sm:$0x1]
        %v3097 = vld [vmem:[%s377 + $0x17] sm:$0x1]
        %v3098 = vld [vmem:[%s377 + $0x1f] sm:$0x1]
        %v3099 = vld [vmem:[%s377 + $0x27] sm:$0x1]
        %v3100 = vld [vmem:[%s377 + $0x2f] sm:$0x1]
        %v3101 = vld [vmem:[%s377 + $0x37] sm:$0x1]
        %v3102 = vld [vmem:[%s377 + $0x3f] sm:$0x1]
        %v3111 = vrot.slane %v3096, 7
        %v3112 = vsel %vm906, %v3111, %v3095
        %v3113 = vrot.slane %v3097, 6
        %v3114 = vsel %vm909, %v3113, %v3112
        %v3115 = vrot.slane %v3098, 5
        %v3116 = vsel %vm912, %v3115, %v3114
        %v3117 = vrot.slane %v3099, 4
        %v3118 = vsel %vm915, %v3117, %v3116
        %v3119 = vrot.slane %v3100, 3
        %v3120 = vsel %vm918, %v3119, %v3118
        %v3121 = vrot.slane %v3101, 2
        %v3122 = vsel %vm921, %v3121, %v3120
        %v3123 = vrot.slane %v3102, 1
        %v3124 = vsel %vm924, %v3123, %v3122
        %3126 = vmatprep.subr.mxu0 0.0
        %3127 = vmatpush1.msra.mxu0 %v3124
        %3128 = vmatprep.subr.mxu0 0.0
        %3129 = vmatpush1.msra.mxu0 0.0
        %3130 = vmatprep.subr.mxu0 0.0
        %3131 = vmatpush1.msra.mxu0 0.0
        %3132 = vmatprep.subr.mxu0 0.0
        %3133 = vmatpush1.msra.mxu0 0.0
        %3134 = vmatprep.subr.mxu0 0.0
        %3135 = vmatpush1.msra.mxu0 0.0
        %3136 = vmatprep.subr.mxu0 0.0
        %3137 = vmatpush1.msra.mxu0 0.0
        %3138 = vmatprep.subr.mxu0 0.0
        %3139 = vmatpush1.msra.mxu0 0.0
        %3140 = vmatprep.subr.mxu0 0.0
        %3141 = vmatpush1.msra.mxu0 0.0
        %3142 = vmatprep.subr.mxu0 0.0
        %3143 = vmatpush1.msra.mxu0 0.0
        %3144 = vmatprep.subr.mxu0 0.0
        %3145 = vmatpush1.msra.mxu0 0.0
        %3146 = vmatprep.subr.mxu0 0.0
        %3147 = vmatpush1.msra.mxu0 0.0
        %3148 = vmatprep.subr.mxu0 0.0
        %3149 = vmatpush1.msra.mxu0 0.0
        %3150 = vmatprep.subr.mxu0 0.0
        %3151 = vmatpush1.msra.mxu0 0.0
        %3152 = vmatprep.subr.mxu0 0.0
        %3153 = vmatpush1.msra.mxu0 0.0
        %3154 = vmatprep.subr.mxu0 0.0
        %3155 = vmatpush1.msra.mxu0 0.0
        %3156 = vmatprep.subr.mxu0 0.0
        %3157 = vmatpush1.msra.mxu0 0.0
        %3158 = vmatprep.subr.mxu0 0.0
        %3159 = vmatpush1.msra.mxu0 0.0
        %3160 = vmatprep.subr.mxu0 0.0
        %3161 = vmatpush1.msra.mxu0 0.0
        %3162 = vmatprep.subr.mxu0 0.0
        %3163 = vmatpush1.msra.mxu0 0.0
        %3164 = vmatprep.subr.mxu0 0.0
        %3165 = vmatpush1.msra.mxu0 0.0
        %3166 = vmatprep.subr.mxu0 0.0
        %3167 = vmatpush1.msra.mxu0 0.0
        %3168 = vmatprep.subr.mxu0 0.0
        %3169 = vmatpush1.msra.mxu0 0.0
        %3170 = vmatprep.subr.mxu0 0.0
        %3171 = vmatpush1.msra.mxu0 0.0
        %3172 = vmatprep.subr.mxu0 0.0
        %3173 = vmatpush1.msra.mxu0 0.0
        %3174 = vmatprep.subr.mxu0 0.0
        %3175 = vmatpush1.msra.mxu0 0.0
        %3176 = vmatprep.subr.mxu0 0.0
        %3177 = vmatpush1.msra.mxu0 0.0
        %3178 = vmatprep.subr.mxu0 0.0
        %3179 = vmatpush1.msra.mxu0 0.0
        %3180 = vmatprep.subr.mxu0 0.0
        %3181 = vmatpush1.msra.mxu0 0.0
        %3182 = vmatprep.subr.mxu0 0.0
        %3183 = vmatpush1.msra.mxu0 0.0
        %3184 = vmatprep.subr.mxu0 0.0
        %3185 = vmatpush1.msra.mxu0 0.0
        %3186 = vmatprep.subr.mxu0 0.0
        %3187 = vmatpush1.msra.mxu0 0.0
        %3188 = vmatprep.subr.mxu0 0.0
        %3189 = vmatpush1.msra.mxu0 0.0
        %3190 = vmatprep.mubr.f32.mxu0 0.0
        %3191 = vmatmul.mubr.f32.gmra.mrb[0].mxu0 %v928
        %v3192 = vpop.f32.mrb[0].mxu0
        %v3193 = vadd.f32 0.0, %v3192
        %v3194 = vpop.f32.mrb[0].mxu0
        %3195 = vdwg.mxu0
        %v3196 = vadd.f32 %v3092, %v3193
        %v3197 = vadd.f32 %v3196, %v1004
        %v3198 = vmax.f32 %v3197, 0.0
        %v3199 = vmul.f32 %v3198, %v1011
        %v3200 = vsel %vm562, %v3199, 0.0
        %v3201 = vrot.slane %v3200, 4
        %v3202 = vadd.f32 %v3200, %v3201
        %v3203 = vrot.slane %v3202, 2
        %v3204 = vadd.f32 %v3202, %v3203
        %v3205 = vrot.slane %v3204, 1
        %v3206 = vadd.f32 %v3204, %v3205
        %v3207 = vadd.f32 %v3206, %v1021
        %v3208 = vxor.u32 %v3207, 2147483648
        %v3209 = vmul.f32 %v3208, 1.442695
        %v3210 = vpow.pop %v3209
        %v3211 = vadd.f32 %v3210, 1.0
        %v3212 = vrcp.pop %v3211
        %v3213 = vmul.f32 1.0, %v3212
        %3214 = vst.msk [vmem:[#allocation4 + $0x7] sm:$0x1] %vm1029, %v3213
        %v3215 = vld [vmem:[%s8] sm:$0xff]
        %v3216 = vld [vmem:[%s8 + $0x8] sm:$0xff]
        %v3217 = vld [vmem:[#allocation4] sm:$0xff]
        %v3219 = vsel %vm562, %v3215, 0
        %v3222 = vsel %vm562, %v3216, 0
        %3224 = vmatprep.subr.mxu0 0.0
        %3225 = vmatpush1.msra.mxu0 %v3217
        %3226 = vmatprep.subr.mxu0 0.0
        %3227 = vmatpush1.msra.mxu0 0.0
        %3228 = vmatprep.subr.mxu0 0.0
        %3229 = vmatpush1.msra.mxu0 0.0
        %3230 = vmatprep.subr.mxu0 0.0
        %3231 = vmatpush1.msra.mxu0 0.0
        %3232 = vmatprep.subr.mxu0 0.0
        %3233 = vmatpush1.msra.mxu0 0.0
        %3234 = vmatprep.subr.mxu0 0.0
        %3235 = vmatpush1.msra.mxu0 0.0
        %3236 = vmatprep.subr.mxu0 0.0
        %3237 = vmatpush1.msra.mxu0 0.0
        %3238 = vmatprep.subr.mxu0 0.0
        %3239 = vmatpush1.msra.mxu0 0.0
        %3240 = vmatprep.subr.mxu0 0.0
        %3241 = vmatpush1.msra.mxu0 0.0
        %3242 = vmatprep.subr.mxu0 0.0
        %3243 = vmatpush1.msra.mxu0 0.0
        %3244 = vmatprep.subr.mxu0 0.0
        %3245 = vmatpush1.msra.mxu0 0.0
        %3246 = vmatprep.subr.mxu0 0.0
        %3247 = vmatpush1.msra.mxu0 0.0
        %3248 = vmatprep.subr.mxu0 0.0
        %3249 = vmatpush1.msra.mxu0 0.0
        %3250 = vmatprep.subr.mxu0 0.0
        %3251 = vmatpush1.msra.mxu0 0.0
        %3252 = vmatprep.subr.mxu0 0.0
        %3253 = vmatpush1.msra.mxu0 0.0
        %3254 = vmatprep.subr.mxu0 0.0
        %3255 = vmatpush1.msra.mxu0 0.0
        %3256 = vmatprep.subr.mxu0 0.0
        %3257 = vmatpush1.msra.mxu0 0.0
        %3258 = vmatprep.subr.mxu0 0.0
        %3259 = vmatpush1.msra.mxu0 0.0
        %3260 = vmatprep.subr.mxu0 0.0
        %3261 = vmatpush1.msra.mxu0 0.0
        %3262 = vmatprep.subr.mxu0 0.0
        %3263 = vmatpush1.msra.mxu0 0.0
        %3264 = vmatprep.subr.mxu0 0.0
        %3265 = vmatpush1.msra.mxu0 0.0
        %3266 = vmatprep.subr.mxu0 0.0
        %3267 = vmatpush1.msra.mxu0 0.0
        %3268 = vmatprep.subr.mxu0 0.0
        %3269 = vmatpush1.msra.mxu0 0.0
        %3270 = vmatprep.subr.mxu0 0.0
        %3271 = vmatpush1.msra.mxu0 0.0
        %3272 = vmatprep.subr.mxu0 0.0
        %3273 = vmatpush1.msra.mxu0 0.0
        %3274 = vmatprep.subr.mxu0 0.0
        %3275 = vmatpush1.msra.mxu0 0.0
        %3276 = vmatprep.subr.mxu0 0.0
        %3277 = vmatpush1.msra.mxu0 0.0
        %3278 = vmatprep.subr.mxu0 0.0
        %3279 = vmatpush1.msra.mxu0 0.0
        %3280 = vmatprep.subr.mxu0 0.0
        %3281 = vmatpush1.msra.mxu0 0.0
        %3282 = vmatprep.subr.mxu0 0.0
        %3283 = vmatpush1.msra.mxu0 0.0
        %3284 = vmatprep.subr.mxu0 0.0
        %3285 = vmatpush1.msra.mxu0 0.0
        %3286 = vmatprep.subr.mxu0 0.0
        %3287 = vmatpush1.msra.mxu0 0.0
        %3288 = vmatprep.mubr.f32.mxu0 0.0
        %3289 = vmatmul.mubr.f32.gmra.mrb[0].mxu0 %v3219
        %v3290 = vpop.f32.mrb[0].mxu0
        %v3291 = vadd.f32 0.0, %v3290
        %v3292 = vpop.f32.mrb[0].mxu0
        %3293 = vmatprep.mubr.f32.mxu0 0.0
        %3294 = vmatmul.mubr.f32.gmra.mrb[0].mxu0 %v3222
        %v3295 = vpop.f32.mrb[0].mxu0
        %v3296 = vadd.f32 0.0, %v3295
        %v3297 = vpop.f32.mrb[0].mxu0
        %3298 = vdwg.mxu0
        %v3299 = vld [vmem:[%s9] sm:$0xff]
        %v3301 = vsel %vm562, %v3291, 0
        %v3304 = vsel %vm562, %v3296, 0
        %3306 = vmatprep.subr.mxu0 0.0
        %3307 = vmatpush1.msra.mxu0 %v3299
        %3308 = vmatprep.subr.mxu0 0.0
        %3309 = vmatpush1.msra.mxu0 0.0
        %3310 = vmatprep.subr.mxu0 0.0
        %3311 = vmatpush1.msra.mxu0 0.0
        %3312 = vmatprep.subr.mxu0 0.0
        %3313 = vmatpush1.msra.mxu0 0.0
        %3314 = vmatprep.subr.mxu0 0.0
        %3315 = vmatpush1.msra.mxu0 0.0
        %3316 = vmatprep.subr.mxu0 0.0
        %3317 = vmatpush1.msra.mxu0 0.0
        %3318 = vmatprep.subr.mxu0 0.0
        %3319 = vmatpush1.msra.mxu0 0.0
        %3320 = vmatprep.subr.mxu0 0.0
        %3321 = vmatpush1.msra.mxu0 0.0
        %3322 = vmatprep.subr.mxu0 0.0
        %3323 = vmatpush1.msra.mxu0 0.0
        %3324 = vmatprep.subr.mxu0 0.0
        %3325 = vmatpush1.msra.mxu0 0.0
        %3326 = vmatprep.subr.mxu0 0.0
        %3327 = vmatpush1.msra.mxu0 0.0
        %3328 = vmatprep.subr.mxu0 0.0
        %3329 = vmatpush1.msra.mxu0 0.0
        %3330 = vmatprep.subr.mxu0 0.0
        %3331 = vmatpush1.msra.mxu0 0.0
        %3332 = vmatprep.subr.mxu0 0.0
        %3333 = vmatpush1.msra.mxu0 0.0
        %3334 = vmatprep.subr.mxu0 0.0
        %3335 = vmatpush1.msra.mxu0 0.0
        %3336 = vmatprep.subr.mxu0 0.0
        %3337 = vmatpush1.msra.mxu0 0.0
        %3338 = vmatprep.subr.mxu0 0.0
        %3339 = vmatpush1.msra.mxu0 0.0
        %3340 = vmatprep.subr.mxu0 0.0
        %3341 = vmatpush1.msra.mxu0 0.0
        %3342 = vmatprep.subr.mxu0 0.0
        %3343 = vmatpush1.msra.mxu0 0.0
        %3344 = vmatprep.subr.mxu0 0.0
        %3345 = vmatpush1.msra.mxu0 0.0
        %3346 = vmatprep.subr.mxu0 0.0
        %3347 = vmatpush1.msra.mxu0 0.0
        %3348 = vmatprep.subr.mxu0 0.0
        %3349 = vmatpush1.msra.mxu0 0.0
        %3350 = vmatprep.subr.mxu0 0.0
        %3351 = vmatpush1.msra.mxu0 0.0
        %3352 = vmatprep.subr.mxu0 0.0
        %3353 = vmatpush1.msra.mxu0 0.0
        %3354 = vmatprep.subr.mxu0 0.0
        %3355 = vmatpush1.msra.mxu0 0.0
        %3356 = vmatprep.subr.mxu0 0.0
        %3357 = vmatpush1.msra.mxu0 0.0
        %3358 = vmatprep.subr.mxu0 0.0
        %3359 = vmatpush1.msra.mxu0 0.0
        %3360 = vmatprep.subr.mxu0 0.0
        %3361 = vmatpush1.msra.mxu0 0.0
        %3362 = vmatprep.subr.mxu0 0.0
        %3363 = vmatpush1.msra.mxu0 0.0
        %3364 = vmatprep.subr.mxu0 0.0
        %3365 = vmatpush1.msra.mxu0 0.0
        %3366 = vmatprep.subr.mxu0 0.0
        %3367 = vmatpush1.msra.mxu0 0.0
        %3368 = vmatprep.subr.mxu0 0.0
        %3369 = vmatpush1.msra.mxu0 0.0
        %3370 = vmatprep.mubr.f32.mxu0 0.0
        %3371 = vmatmul.mubr.f32.gmra.mrb[0].mxu0 %v3301
        %v3372 = vpop.f32.mrb[0].mxu0
        %v3373 = vadd.f32 0.0, %v3372
        %v3374 = vpop.f32.mrb[0].mxu0
        %3375 = vmatprep.mubr.f32.mxu0 0.0
        %3376 = vmatmul.mubr.f32.gmra.mrb[0].mxu0 %v3304
        %v3377 = vpop.f32.mrb[0].mxu0
        %v3378 = vadd.f32 0.0, %v3377
        %v3379 = vpop.f32.mrb[0].mxu0
        %3380 = vdwg.mxu0
        %v3381 = vmul.f32 %v419, %v3373
        %v3382 = vmul.f32 %v420, %v3378
        %v3383 = vmul.f32 %v421, %v3373
        %v3384 = vmul.f32 %v422, %v3378
        %v3385 = vmul.f32 %v423, %v3373
        %v3386 = vmul.f32 %v424, %v3378
        %v3387 = vmul.f32 %v425, %v3373
        %v3388 = vmul.f32 %v426, %v3378
        %3389 = vst.msk [vmem:[%s418] sm:$0xff] %vm432, %v3381
        %3390 = vst.msk [vmem:[%s418 + $0x8] sm:$0xff] %vm432, %v3382
        %3391 = vst.msk [vmem:[%s418 + $0x10] sm:$0xff] %vm432, %v3383
        %3392 = vst.msk [vmem:[%s418 + $0x18] sm:$0xff] %vm432, %v3384
        %3393 = vst.msk [vmem:[%s418 + $0x20] sm:$0xff] %vm432, %v3385
        %3394 = vst.msk [vmem:[%s418 + $0x28] sm:$0xff] %vm432, %v3386
        %3395 = vst.msk [vmem:[%s418 + $0x30] sm:$0xff] %vm432, %v3387
        %3396 = vst.msk [vmem:[%s418 + $0x38] sm:$0xff] %vm432, %v3388
        %s3397 = sand.u32 %s259, 1
        %s3398 = scalar_lea.sflag [#allocation8], %s3397
        %s3399 = sand.u32 %s259, 1
        %s3400 = smul.addr %s3399, 64
        %s3401 = scalar_lea.vmem [#allocation11], %s3400
        // Predicated region
        $region69: #{tpu_custom_call.1} parent=59 // pred_check
          %p3402 = pneg %p269
        $region70: #{tpu_custom_call.1} parent=59 // pred_check_branch
          %3404 = sbr.rel (%p3402) target = $region72
        $region71: #{tpu_custom_call.1} parent=59 // pred_region
          %s3406 = ssub.s32 1024, 1024
          %3407 = vsyncadd %s3398, %s3406
          %s3408 = smul.addr %s31, 8
          %s3409 = smul.addr %s3408, 128
          %s3410 = scalar_lea.hbm %s10, %s3409
          %s3411 = sshll.u32 %s3401, 4
          %s3412 = int_to_ptr.vmem [resolvable:$true] %s3411
          %3417 = dma.vmem_to_hbm [thread:$0]  %s3412, 1024, %s3410, %s3398, 128, 128, 8
        $region72: #{tpu_custom_call.1} parent=59 // pred_fallthru
          _
      $region60: #{tpu_custom_call.1} parent=5 // pred_fallthru
        _
      %p3418 = scmp.le.s32.totalorder 2, %s26
      // Predicated region
      $region73: #{tpu_custom_call.1} parent=5 // pred_check
        %p3419 = pneg %p3418
      $region74: #{tpu_custom_call.1} parent=5 // pred_check_branch
        %3421 = sbr.rel (%p3419) target = $region76
      $region75: #{tpu_custom_call.1} parent=5 // pred_region
        %s3422 = ssub.s32 %s26, 2
        // Predicated region
        $region77: #{tpu_custom_call.1} parent=75 // pred_check
          %p3423 = pneg %p275
        $region78: #{tpu_custom_call.1} parent=75 // pred_check_branch
          %3425 = sbr.rel (%p3423) target = $region80
        $region79: #{tpu_custom_call.1} parent=75 // pred_region
          %s3426 = sand.u32 %s260, 1
          %s3427 = scalar_lea.sflag [#allocation8], %s3426
          %s3428 = sand.u32 %s260, 1
          %s3429 = smul.addr %s3428, 64
          %s3430 = scalar_lea.vmem [#allocation11], %s3429
          %3431 = dma.done %s3427, 1024
        $region80: #{tpu_custom_call.1} parent=75 // pred_fallthru
          _
      $region76: #{tpu_custom_call.1} parent=5 // pred_fallthru
        _
    $region6: #{tpu_custom_call.1} parent=1 // loop_footer
      %s30 = sadd.s32 1, %s26
    $region7: #{tpu_custom_call.1} parent=1 // loop_footer_branch
      %25 = sbr.rel target = $region3
    $region8: #{tpu_custom_call.1} parent=1 // loop_exit
      _
    %3432 = vsyncpa [#allocation7], 1
    %s3433 = scalar_lea.sflag [#allocation7], 1
    %3434 = vsyncpa %s3433, 1
    %3435 = vsyncpa [#allocation10], 1
    %s3436 = scalar_lea.sflag [#allocation10], 1
    %3437 = vsyncpa %s3436, 1
    %3438 = vsyncpa [#allocation8], 1
    %s3439 = scalar_lea.sflag [#allocation8], 1
    %3440 = vsyncpa %s3439, 1

</llo_original>
